<compile_context>
chip_gen: v7x
topology: tpu7x:2x2x1
jax: 0.10.0
libtpu: 0.0.40
codegen_flags: <defaults>
</compile_context>

<pallas_src>
import functools

import jax
import jax.numpy as jnp
from jax.experimental import pallas as pl
from jax.experimental.pallas import tpu as pltpu


# --------------------------------------------------------------------------
# In-kernel fused Bottleneck on a channels-first (Cin, N*H*W) activation slab.
# --------------------------------------------------------------------------
def _bottleneck(x, wc, b1, bd, w2m, b2, w3, b3, masks_ref, patches_ref, W):
    """x: (Cin, NF) f32.  Returns (P, NF) f32.  NF = N*H*W."""
    NF = x.shape[-1]
    P = b1.shape[0]

    # conv1 (1x1) and downsample (1x1) share one bf16 MXU matmul (BN scales
    # folded into the weights on the host); biases added in f32.
    both = jnp.dot(wc, x.astype(jnp.bfloat16),
                   preferred_element_type=jnp.float32)              # (2P, NF)
    t = jnp.maximum(both[:P] + b1, 0.0)                             # conv1+bn1+relu
    r = both[P:] + bd                                               # downsample+bn

    # conv2 (3x3, pad=1) as one im2col matmul.  Each tap is a lane rotation
    # (XLU) of the lane-dense activation, masked at image boundaries, and
    # written directly into the bf16 patch scratch at sublane offset k*P.
    for dy in range(3):
        for dx in range(3):
            k = dy * 3 + dx
            s = (dy - 1) * W + (dx - 1)
            if s == 0:
                win = t                                             # center tap: always valid
            else:
                win = pltpu.roll(t, shift=(-s) % NF, axis=1) * masks_ref[k]
            patches_ref[pl.ds(k * P, P), :] = win.astype(jnp.bfloat16)

    t = jnp.dot(w2m, patches_ref[pl.ds(0, 9 * P), :],
                preferred_element_type=jnp.float32)                 # (P, NF)
    t = jnp.maximum(t + b2, 0.0)                                    # bn2+relu

    # conv3 (1x1) + bn3, residual add, relu.
    t = jnp.dot(w3, t.astype(jnp.bfloat16),
                preferred_element_type=jnp.float32) + b3
    return jnp.maximum(t + r, 0.0)


def _detector_kernel(x_ref, masks_ref,
                     wc1, b11, bd1, w2m1, b21, w31, b31,
                     wc2, b12, bd2, w2m2, b22, w32, b32,
                     o_ref, patches_ref, *, W):
    x = x_ref[...].astype(jnp.float32)                              # (Cin, NF)
    y = _bottleneck(x, wc1[...], b11[...], bd1[...], w2m1[...], b21[...],
                    w31[...], b31[...], masks_ref, patches_ref, W)
    y = _bottleneck(y, wc2[...], b12[...], bd2[...], w2m2[...], b22[...],
                    w32[...], b32[...], masks_ref, patches_ref, W)
    o_ref[...] = y


# --------------------------------------------------------------------------
# Host-side helpers: tap-validity masks and BN folding into conv weights.
# --------------------------------------------------------------------------
def _tap_masks(H, W):
    yy, xx = jnp.meshgrid(jnp.arange(H), jnp.arange(W), indexing="ij")
    yy = yy.reshape(-1)
    xx = xx.reshape(-1)
    ms = []
    for dy in range(3):
        for dx in range(3):
            sy, sx = dy - 1, dx - 1
            valid = ((yy + sy >= 0) & (yy + sy < H) &
                     (xx + sx >= 0) & (xx + sx < W))
            ms.append(valid.astype(jnp.float32))
    return jnp.stack(ms).reshape(9, 1, H * W)


def fold_params(p):
    """Fold eval-mode BN scales into conv weights; weights cast to bf16."""
    P = p["w1"].shape[1]
    s1, b1 = p["s1"].reshape(P), p["b1"].reshape(P)
    s2, b2 = p["s2"].reshape(P), p["b2"].reshape(P)
    s3, b3 = p["s3"].reshape(P), p["b3"].reshape(P)
    sd, bd = p["sd"].reshape(P), p["bd"].reshape(P)
    w1f = (p["w1"] * s1[None, :]).T                                 # (P, Cin)
    wdf = (p["wd"] * sd[None, :]).T                                 # (P, Cin)
    wc = jnp.concatenate([w1f, wdf], axis=0)                        # (2P, Cin)
    # HWIO (3,3,Cin,Cout) -> (Cout, 9*Cin) with tap-major columns.
    w2m = jnp.transpose(p["w2"], (3, 0, 1, 2)).reshape(P, 9 * P) * s2[:, None]
    w3m = p["w3"].T * s3[:, None]                                   # (P, P)
    bf = jnp.bfloat16
    return dict(wc=wc.astype(bf), b1=b1[:, None], bd=bd[:, None],
                w2m=w2m.astype(bf), b2=b2[:, None],
                w3=w3m.astype(bf), b3=b3[:, None])


# --------------------------------------------------------------------------
# Wrapper: NCHW in / NCHW out, single fused pallas_call over the whole batch.
# --------------------------------------------------------------------------
@jax.jit
def detector_forward(x_nchw, kparams):
    N, Cin, H, W = x_nchw.shape
    F = H * W
    NF = N * F
    p1, p2 = kparams["layer1"], kparams["layer2"]
    P1 = p1["b1"].shape[0]
    P2 = p2["b1"].shape[0]

    # Whole batch as one (Cin, N*F) lane-dense slab (lanes multiple of 128).
    x = jnp.transpose(x_nchw, (1, 0, 2, 3)).reshape(Cin, NF)
    # Per-image tap masks tiled over the batch; constant-folded under jit.
    masks = jnp.tile(_tap_masks(H, W), (1, 1, N))                   # (9, 1, NF)

    ins = [x, masks,
           p1["wc"], p1["b1"], p1["bd"], p1["w2m"], p1["b2"], p1["w3"], p1["b3"],
           p2["wc"], p2["b1"], p2["bd"], p2["w2m"], p2["b2"], p2["w3"], p2["b3"]]

    def full_spec(a):
        nd = a.ndim
        return pl.BlockSpec(a.shape, lambda i, _nd=nd: (0,) * _nd)

    out = pl.pallas_call(
        functools.partial(_detector_kernel, W=W),
        out_shape=jax.ShapeDtypeStruct((P2, NF), jnp.float32),
        grid=(1,),
        in_specs=[full_spec(a) for a in ins],
        out_specs=pl.BlockSpec((P2, NF), lambda i: (0, 0)),
        scratch_shapes=[pltpu.VMEM((9 * max(P1, P2), NF), jnp.bfloat16)],
        compiler_params=pltpu.CompilerParams(
            dimension_semantics=("arbitrary",)),
    )(*ins)
    return jnp.transpose(out.reshape(P2, N, H, W), (1, 0, 2, 3))


# --------------------------------------------------------------------------
# Deterministic synthetic parameters (eval-mode BN expressed as scale/bias).
# --------------------------------------------------------------------------
def _folded_bn(k, c, eps=1e-5):
    k1, k2, k3, k4 = jax.random.split(k, 4)
    gamma = jax.random.uniform(k1, (c,), jnp.float32, 0.5, 1.5)
    beta = jax.random.normal(k2, (c,), jnp.float32) * 0.1
    mean = jax.random.normal(k3, (c,), jnp.float32) * 0.1
    var = jax.random.uniform(k4, (c,), jnp.float32, 0.5, 1.5)
    scale = gamma / jnp.sqrt(var + eps)
    bias = beta - mean * scale
    return scale.reshape(1, c), bias.reshape(1, c)


def init_bottleneck_params(key, cin, planes):
    ks = jax.random.split(key, 8)
    w1 = jax.random.normal(ks[0], (cin, planes), jnp.float32) * 0.1
    w2 = jax.random.normal(ks[1], (3, 3, planes, planes), jnp.float32) * 0.1
    w3 = jax.random.normal(ks[2], (planes, planes), jnp.float32) * 0.1
    wd = jax.random.normal(ks[3], (cin, planes), jnp.float32) * 0.1
    s1, b1 = _folded_bn(ks[4], planes)
    s2, b2 = _folded_bn(ks[5], planes)
    s3, b3 = _folded_bn(ks[6], planes)
    sd, bd = _folded_bn(ks[7], planes)
    return dict(w1=w1, s1=s1, b1=b1, w2=w2, s2=s2, b2=b2,
                w3=w3, s3=s3, b3=b3, wd=wd, sd=sd, bd=bd)


# --------------------------------------------------------------------------
# Pure-JAX f32 reference (lax.conv) for correctness checking.
# --------------------------------------------------------------------------
def _bottleneck_ref(x, p):
    def conv1x1(v, w):
        return jnp.einsum("nhwc,cd->nhwd", v, w)

    def conv3x3(v, w):
        return jax.lax.conv_general_dilated(
            v, w, (1, 1), ((1, 1), (1, 1)),
            dimension_numbers=("NHWC", "HWIO", "NHWC"))

    t = jnp.maximum(conv1x1(x, p["w1"]) * p["s1"] + p["b1"], 0.0)
    t = jnp.maximum(conv3x3(t, p["w2"]) * p["s2"] + p["b2"], 0.0)
    t = conv1x1(t, p["w3"]) * p["s3"] + p["b3"]
    r = conv1x1(x, p["wd"]) * p["sd"] + p["bd"]
    return jnp.maximum(t + r, 0.0)


def detector_ref(x_nchw, params):
    x = jnp.transpose(x_nchw, (0, 2, 3, 1))
    x = _bottleneck_ref(x, params["layer1"])
    x = _bottleneck_ref(x, params["layer2"])
    return jnp.transpose(x, (0, 3, 1, 2))


if __name__ == "__main__":
    maxdisp = 16          # -> layer1 input channels = maxdisp // 4 = 4
    num_class = 16
    N, H, W = 2, 16, 16
    cin = maxdisp // 4

    key = jax.random.PRNGKey(0)
    kx, k1, k2 = jax.random.split(key, 3)

    x = jax.random.normal(kx, (N, cin, H, W), jnp.float32)    # NCHW like PyTorch
    nat_params = {
        "layer1": init_bottleneck_params(k1, cin, 24),
        "layer2": init_bottleneck_params(k2, 24, num_class),
    }
    kernel_params = {
        "layer1": fold_params(nat_params["layer1"]),
        "layer2": fold_params(nat_params["layer2"]),
    }

    out = jax.block_until_ready(detector_forward(x, kernel_params))
    ref = jax.block_until_ready(detector_ref(x, nat_params))

    assert out.shape == (N, num_class, H, W), out.shape
    # bf16 MXU operands (f32 accumulation): tolerance sized for bf16 operand
    # rounding; measured error is a few 1e-3 at these magnitudes.
    max_err = float(jnp.max(jnp.abs(out - ref)))
    assert jnp.allclose(out, ref, rtol=1e-2, atol=1e-2), max_err

    print("KERNEL_OK")
</pallas_src>

<mosaic_0001>
module attributes {stable_mosaic.version = 11 : i64} {
  func.func @_detector_kernel(%arg0: i32, %arg1: memref<4x512xf32, #tpu.memory_space<vmem>>, %arg2: memref<9x1x512xf32, #tpu.memory_space<vmem>>, %arg3: memref<48x4xbf16, #tpu.memory_space<vmem>>, %arg4: memref<24x1xf32, #tpu.memory_space<vmem>>, %arg5: memref<24x1xf32, #tpu.memory_space<vmem>>, %arg6: memref<24x216xbf16, #tpu.memory_space<vmem>>, %arg7: memref<24x1xf32, #tpu.memory_space<vmem>>, %arg8: memref<24x24xbf16, #tpu.memory_space<vmem>>, %arg9: memref<24x1xf32, #tpu.memory_space<vmem>>, %arg10: memref<32x24xbf16, #tpu.memory_space<vmem>>, %arg11: memref<16x1xf32, #tpu.memory_space<vmem>>, %arg12: memref<16x1xf32, #tpu.memory_space<vmem>>, %arg13: memref<16x144xbf16, #tpu.memory_space<vmem>>, %arg14: memref<16x1xf32, #tpu.memory_space<vmem>>, %arg15: memref<16x16xbf16, #tpu.memory_space<vmem>>, %arg16: memref<16x1xf32, #tpu.memory_space<vmem>>, %arg17: memref<16x512xf32, #tpu.memory_space<vmem>>, %arg18: memref<216x512xbf16, #tpu.memory_space<vmem>>) attributes {dimension_semantics = [#tpu.dimension_semantics<arbitrary>], iteration_bounds = array<i64: 1>, scalar_prefetch = 0 : i64, scratch_operands = 1 : i64, tpu.core_type = #tpu.core_type<tc>, window_params = [{pipeline_mode = #tpu.pipeline_mode<synchronous>, transform_indices = @transform_0, window_bounds = array<i64: 4, 512>}, {pipeline_mode = #tpu.pipeline_mode<synchronous>, transform_indices = @transform_1, window_bounds = array<i64: 9, 1, 512>}, {pipeline_mode = #tpu.pipeline_mode<synchronous>, transform_indices = @transform_2, window_bounds = array<i64: 48, 4>}, {pipeline_mode = #tpu.pipeline_mode<synchronous>, transform_indices = @transform_3, window_bounds = array<i64: 24, 1>}, {pipeline_mode = #tpu.pipeline_mode<synchronous>, transform_indices = @transform_4, window_bounds = array<i64: 24, 1>}, {pipeline_mode = #tpu.pipeline_mode<synchronous>, transform_indices = @transform_5, window_bounds = array<i64: 24, 216>}, {pipeline_mode = #tpu.pipeline_mode<synchronous>, transform_indices = @transform_6, window_bounds = array<i64: 24, 1>}, {pipeline_mode = #tpu.pipeline_mode<synchronous>, transform_indices = @transform_7, window_bounds = array<i64: 24, 24>}, {pipeline_mode = #tpu.pipeline_mode<synchronous>, transform_indices = @transform_8, window_bounds = array<i64: 24, 1>}, {pipeline_mode = #tpu.pipeline_mode<synchronous>, transform_indices = @transform_9, window_bounds = array<i64: 32, 24>}, {pipeline_mode = #tpu.pipeline_mode<synchronous>, transform_indices = @transform_10, window_bounds = array<i64: 16, 1>}, {pipeline_mode = #tpu.pipeline_mode<synchronous>, transform_indices = @transform_11, window_bounds = array<i64: 16, 1>}, {pipeline_mode = #tpu.pipeline_mode<synchronous>, transform_indices = @transform_12, window_bounds = array<i64: 16, 144>}, {pipeline_mode = #tpu.pipeline_mode<synchronous>, transform_indices = @transform_13, window_bounds = array<i64: 16, 1>}, {pipeline_mode = #tpu.pipeline_mode<synchronous>, transform_indices = @transform_14, window_bounds = array<i64: 16, 16>}, {pipeline_mode = #tpu.pipeline_mode<synchronous>, transform_indices = @transform_15, window_bounds = array<i64: 16, 1>}, {pipeline_mode = #tpu.pipeline_mode<synchronous>, transform_indices = @transform_16, window_bounds = array<i64: 16, 512>}]} {
    %c0 = arith.constant 0 : index
    %c0_0 = arith.constant 0 : index
    %0 = vector.load %arg1[%c0, %c0_0] : memref<4x512xf32, #tpu.memory_space<vmem>>, vector<4x512xf32>
    %c0_1 = arith.constant 0 : index
    %c0_2 = arith.constant 0 : index
    %1 = vector.load %arg3[%c0_1, %c0_2] : memref<48x4xbf16, #tpu.memory_space<vmem>>, vector<48x4xbf16>
    %c0_3 = arith.constant 0 : index
    %c0_4 = arith.constant 0 : index
    %2 = vector.load %arg4[%c0_3, %c0_4] : memref<24x1xf32, #tpu.memory_space<vmem>>, vector<24x1xf32>
    %c0_5 = arith.constant 0 : index
    %c0_6 = arith.constant 0 : index
    %3 = vector.load %arg5[%c0_5, %c0_6] : memref<24x1xf32, #tpu.memory_space<vmem>>, vector<24x1xf32>
    %c0_7 = arith.constant 0 : index
    %c0_8 = arith.constant 0 : index
    %4 = vector.load %arg6[%c0_7, %c0_8] : memref<24x216xbf16, #tpu.memory_space<vmem>>, vector<24x216xbf16>
    %c0_9 = arith.constant 0 : index
    %c0_10 = arith.constant 0 : index
    %5 = vector.load %arg7[%c0_9, %c0_10] : memref<24x1xf32, #tpu.memory_space<vmem>>, vector<24x1xf32>
    %c0_11 = arith.constant 0 : index
    %c0_12 = arith.constant 0 : index
    %6 = vector.load %arg8[%c0_11, %c0_12] : memref<24x24xbf16, #tpu.memory_space<vmem>>, vector<24x24xbf16>
    %c0_13 = arith.constant 0 : index
    %c0_14 = arith.constant 0 : index
    %7 = vector.load %arg9[%c0_13, %c0_14] : memref<24x1xf32, #tpu.memory_space<vmem>>, vector<24x1xf32>
    %8 = arith.truncf %0 : vector<4x512xf32> to vector<4x512xbf16>
    %cst = arith.constant dense<0.000000e+00> : vector<48x512xf32>
    %9 = tpu.matmul %1, %8, %cst {dimension_numbers = #tpu.dot_dimension_numbers<[1], [0], [0], [1], [0, 0, 1, 1], [], []>} : vector<48x4xbf16>, vector<4x512xbf16>, vector<48x512xf32> -> vector<48x512xf32>
    %10 = vector.extract_strided_slice %9 {offsets = [0, 0], sizes = [24, 512], strides = [1, 1]} : vector<48x512xf32> to vector<24x512xf32>
    %11 = vector.broadcast %2 : vector<24x1xf32> to vector<24x512xf32>
    %12 = arith.addf %10, %11 : vector<24x512xf32>
    %cst_15 = arith.constant 0.000000e+00 : f32
    %13 = vector.broadcast %cst_15 : f32 to vector<24x512xf32>
    %14 = arith.maximumf %12, %13 : vector<24x512xf32>
    %15 = vector.extract_strided_slice %9 {offsets = [24, 0], sizes = [24, 512], strides = [1, 1]} : vector<48x512xf32> to vector<24x512xf32>
    %16 = vector.broadcast %3 : vector<24x1xf32> to vector<24x512xf32>
    %17 = arith.addf %15, %16 : vector<24x512xf32>
    %c17_i32 = arith.constant 17 : i32
    %18 = tpu.dynamic_rotate %14 by %c17_i32 dim 1 : vector<24x512xf32>, i32 -> vector<24x512xf32>
    %c0_16 = arith.constant 0 : index
    %c0_17 = arith.constant 0 : index
    %c0_18 = arith.constant 0 : index
    %19 = vector.load %arg2[%c0_16, %c0_17, %c0_18] : memref<9x1x512xf32, #tpu.memory_space<vmem>>, vector<1x1x512xf32>
    %20 = vector.shape_cast %19 : vector<1x1x512xf32> to vector<1x512xf32>
    %21 = vector.broadcast %20 : vector<1x512xf32> to vector<24x512xf32>
    %22 = arith.mulf %18, %21 : vector<24x512xf32>
    %23 = arith.truncf %22 : vector<24x512xf32> to vector<24x512xbf16>
    %c0_19 = arith.constant 0 : index
    %c0_20 = arith.constant 0 : index
    %24 = vector.load %arg18[%c0_19, %c0_20] : memref<216x512xbf16, #tpu.memory_space<vmem>>, vector<24x512xbf16>
    tpu.vector_store %arg18[%c0_19, %c0_20], %23 {strides = array<i32>} : memref<216x512xbf16, #tpu.memory_space<vmem>>, vector<24x512xbf16>,
    %c16_i32 = arith.constant 16 : i32
    %25 = tpu.dynamic_rotate %14 by %c16_i32 dim 1 : vector<24x512xf32>, i32 -> vector<24x512xf32>
    %c1 = arith.constant 1 : index
    %c0_21 = arith.constant 0 : index
    %c0_22 = arith.constant 0 : index
    %26 = vector.load %arg2[%c1, %c0_21, %c0_22] : memref<9x1x512xf32, #tpu.memory_space<vmem>>, vector<1x1x512xf32>
    %27 = vector.shape_cast %26 : vector<1x1x512xf32> to vector<1x512xf32>
    %28 = vector.broadcast %27 : vector<1x512xf32> to vector<24x512xf32>
    %29 = arith.mulf %25, %28 : vector<24x512xf32>
    %30 = arith.truncf %29 : vector<24x512xf32> to vector<24x512xbf16>
    %c24 = arith.constant 24 : index
    %c0_23 = arith.constant 0 : index
    %31 = vector.load %arg18[%c24, %c0_23] : memref<216x512xbf16, #tpu.memory_space<vmem>>, vector<24x512xbf16>
    tpu.vector_store %arg18[%c24, %c0_23], %30 {strides = array<i32>} : memref<216x512xbf16, #tpu.memory_space<vmem>>, vector<24x512xbf16>,
    %c15_i32 = arith.constant 15 : i32
    %32 = tpu.dynamic_rotate %14 by %c15_i32 dim 1 : vector<24x512xf32>, i32 -> vector<24x512xf32>
    %c2 = arith.constant 2 : index
    %c0_24 = arith.constant 0 : index
    %c0_25 = arith.constant 0 : index
    %33 = vector.load %arg2[%c2, %c0_24, %c0_25] : memref<9x1x512xf32, #tpu.memory_space<vmem>>, vector<1x1x512xf32>
    %34 = vector.shape_cast %33 : vector<1x1x512xf32> to vector<1x512xf32>
    %35 = vector.broadcast %34 : vector<1x512xf32> to vector<24x512xf32>
    %36 = arith.mulf %32, %35 : vector<24x512xf32>
    %37 = arith.truncf %36 : vector<24x512xf32> to vector<24x512xbf16>
    %c48 = arith.constant 48 : index
    %c0_26 = arith.constant 0 : index
    %38 = vector.load %arg18[%c48, %c0_26] : memref<216x512xbf16, #tpu.memory_space<vmem>>, vector<24x512xbf16>
    tpu.vector_store %arg18[%c48, %c0_26], %37 {strides = array<i32>} : memref<216x512xbf16, #tpu.memory_space<vmem>>, vector<24x512xbf16>,
    %c1_i32 = arith.constant 1 : i32
    %39 = tpu.dynamic_rotate %14 by %c1_i32 dim 1 : vector<24x512xf32>, i32 -> vector<24x512xf32>
    %c3 = arith.constant 3 : index
    %c0_27 = arith.constant 0 : index
    %c0_28 = arith.constant 0 : index
    %40 = vector.load %arg2[%c3, %c0_27, %c0_28] : memref<9x1x512xf32, #tpu.memory_space<vmem>>, vector<1x1x512xf32>
    %41 = vector.shape_cast %40 : vector<1x1x512xf32> to vector<1x512xf32>
    %42 = vector.broadcast %41 : vector<1x512xf32> to vector<24x512xf32>
    %43 = arith.mulf %39, %42 : vector<24x512xf32>
    %44 = arith.truncf %43 : vector<24x512xf32> to vector<24x512xbf16>
    %c72 = arith.constant 72 : index
    %c0_29 = arith.constant 0 : index
    %45 = vector.load %arg18[%c72, %c0_29] : memref<216x512xbf16, #tpu.memory_space<vmem>>, vector<24x512xbf16>
    tpu.vector_store %arg18[%c72, %c0_29], %44 {strides = array<i32>} : memref<216x512xbf16, #tpu.memory_space<vmem>>, vector<24x512xbf16>,
    %46 = arith.truncf %14 : vector<24x512xf32> to vector<24x512xbf16>
    %c96 = arith.constant 96 : index
    %c0_30 = arith.constant 0 : index
    %47 = vector.load %arg18[%c96, %c0_30] : memref<216x512xbf16, #tpu.memory_space<vmem>>, vector<24x512xbf16>
    tpu.vector_store %arg18[%c96, %c0_30], %46 {strides = array<i32>} : memref<216x512xbf16, #tpu.memory_space<vmem>>, vector<24x512xbf16>,
    %c511_i32 = arith.constant 511 : i32
    %48 = tpu.dynamic_rotate %14 by %c511_i32 dim 1 : vector<24x512xf32>, i32 -> vector<24x512xf32>
    %c5 = arith.constant 5 : index
    %c0_31 = arith.constant 0 : index
    %c0_32 = arith.constant 0 : index
    %49 = vector.load %arg2[%c5, %c0_31, %c0_32] : memref<9x1x512xf32, #tpu.memory_space<vmem>>, vector<1x1x512xf32>
    %50 = vector.shape_cast %49 : vector<1x1x512xf32> to vector<1x512xf32>
    %51 = vector.broadcast %50 : vector<1x512xf32> to vector<24x512xf32>
    %52 = arith.mulf %48, %51 : vector<24x512xf32>
    %53 = arith.truncf %52 : vector<24x512xf32> to vector<24x512xbf16>
    %c120 = arith.constant 120 : index
    %c0_33 = arith.constant 0 : index
    %54 = vector.load %arg18[%c120, %c0_33] : memref<216x512xbf16, #tpu.memory_space<vmem>>, vector<24x512xbf16>
    tpu.vector_store %arg18[%c120, %c0_33], %53 {strides = array<i32>} : memref<216x512xbf16, #tpu.memory_space<vmem>>, vector<24x512xbf16>,
    %c497_i32 = arith.constant 497 : i32
    %55 = tpu.dynamic_rotate %14 by %c497_i32 dim 1 : vector<24x512xf32>, i32 -> vector<24x512xf32>
    %c6 = arith.constant 6 : index
    %c0_34 = arith.constant 0 : index
    %c0_35 = arith.constant 0 : index
    %56 = vector.load %arg2[%c6, %c0_34, %c0_35] : memref<9x1x512xf32, #tpu.memory_space<vmem>>, vector<1x1x512xf32>
    %57 = vector.shape_cast %56 : vector<1x1x512xf32> to vector<1x512xf32>
    %58 = vector.broadcast %57 : vector<1x512xf32> to vector<24x512xf32>
    %59 = arith.mulf %55, %58 : vector<24x512xf32>
    %60 = arith.truncf %59 : vector<24x512xf32> to vector<24x512xbf16>
    %c144 = arith.constant 144 : index
    %c0_36 = arith.constant 0 : index
    %61 = vector.load %arg18[%c144, %c0_36] : memref<216x512xbf16, #tpu.memory_space<vmem>>, vector<24x512xbf16>
    tpu.vector_store %arg18[%c144, %c0_36], %60 {strides = array<i32>} : memref<216x512xbf16, #tpu.memory_space<vmem>>, vector<24x512xbf16>,
    %c496_i32 = arith.constant 496 : i32
    %62 = tpu.dynamic_rotate %14 by %c496_i32 dim 1 : vector<24x512xf32>, i32 -> vector<24x512xf32>
    %c7 = arith.constant 7 : index
    %c0_37 = arith.constant 0 : index
    %c0_38 = arith.constant 0 : index
    %63 = vector.load %arg2[%c7, %c0_37, %c0_38] : memref<9x1x512xf32, #tpu.memory_space<vmem>>, vector<1x1x512xf32>
    %64 = vector.shape_cast %63 : vector<1x1x512xf32> to vector<1x512xf32>
    %65 = vector.broadcast %64 : vector<1x512xf32> to vector<24x512xf32>
    %66 = arith.mulf %62, %65 : vector<24x512xf32>
    %67 = arith.truncf %66 : vector<24x512xf32> to vector<24x512xbf16>
    %c168 = arith.constant 168 : index
    %c0_39 = arith.constant 0 : index
    %68 = vector.load %arg18[%c168, %c0_39] : memref<216x512xbf16, #tpu.memory_space<vmem>>, vector<24x512xbf16>
    tpu.vector_store %arg18[%c168, %c0_39], %67 {strides = array<i32>} : memref<216x512xbf16, #tpu.memory_space<vmem>>, vector<24x512xbf16>,
    %c495_i32 = arith.constant 495 : i32
    %69 = tpu.dynamic_rotate %14 by %c495_i32 dim 1 : vector<24x512xf32>, i32 -> vector<24x512xf32>
    %c8 = arith.constant 8 : index
    %c0_40 = arith.constant 0 : index
    %c0_41 = arith.constant 0 : index
    %70 = vector.load %arg2[%c8, %c0_40, %c0_41] : memref<9x1x512xf32, #tpu.memory_space<vmem>>, vector<1x1x512xf32>
    %71 = vector.shape_cast %70 : vector<1x1x512xf32> to vector<1x512xf32>
    %72 = vector.broadcast %71 : vector<1x512xf32> to vector<24x512xf32>
    %73 = arith.mulf %69, %72 : vector<24x512xf32>
    %74 = arith.truncf %73 : vector<24x512xf32> to vector<24x512xbf16>
    %c192 = arith.constant 192 : index
    %c0_42 = arith.constant 0 : index
    %75 = vector.load %arg18[%c192, %c0_42] : memref<216x512xbf16, #tpu.memory_space<vmem>>, vector<24x512xbf16>
    tpu.vector_store %arg18[%c192, %c0_42], %74 {strides = array<i32>} : memref<216x512xbf16, #tpu.memory_space<vmem>>, vector<24x512xbf16>,
    %c0_43 = arith.constant 0 : index
    %c0_44 = arith.constant 0 : index
    %76 = vector.load %arg18[%c0_43, %c0_44] : memref<216x512xbf16, #tpu.memory_space<vmem>>, vector<216x512xbf16>
    %cst_45 = arith.constant dense<0.000000e+00> : vector<24x512xf32>
    %77 = tpu.matmul %4, %76, %cst_45 {dimension_numbers = #tpu.dot_dimension_numbers<[1], [0], [0], [1], [0, 0, 1, 1], [], []>} : vector<24x216xbf16>, vector<216x512xbf16>, vector<24x512xf32> -> vector<24x512xf32>
    %78 = vector.broadcast %5 : vector<24x1xf32> to vector<24x512xf32>
    %79 = arith.addf %77, %78 : vector<24x512xf32>
    %cst_46 = arith.constant 0.000000e+00 : f32
    %80 = vector.broadcast %cst_46 : f32 to vector<24x512xf32>
    %81 = arith.maximumf %79, %80 : vector<24x512xf32>
    %82 = arith.truncf %81 : vector<24x512xf32> to vector<24x512xbf16>
    %cst_47 = arith.constant dense<0.000000e+00> : vector<24x512xf32>
    %83 = tpu.matmul %6, %82, %cst_47 {dimension_numbers = #tpu.dot_dimension_numbers<[1], [0], [0], [1], [0, 0, 1, 1], [], []>} : vector<24x24xbf16>, vector<24x512xbf16>, vector<24x512xf32> -> vector<24x512xf32>
    %84 = vector.broadcast %7 : vector<24x1xf32> to vector<24x512xf32>
    %85 = arith.addf %83, %84 : vector<24x512xf32>
    %86 = arith.addf %85, %17 : vector<24x512xf32>
    %cst_48 = arith.constant 0.000000e+00 : f32
    %87 = vector.broadcast %cst_48 : f32 to vector<24x512xf32>
    %88 = arith.maximumf %86, %87 : vector<24x512xf32>
    %c0_49 = arith.constant 0 : index
    %c0_50 = arith.constant 0 : index
    %89 = vector.load %arg10[%c0_49, %c0_50] : memref<32x24xbf16, #tpu.memory_space<vmem>>, vector<32x24xbf16>
    %c0_51 = arith.constant 0 : index
    %c0_52 = arith.constant 0 : index
    %90 = vector.load %arg11[%c0_51, %c0_52] : memref<16x1xf32, #tpu.memory_space<vmem>>, vector<16x1xf32>
    %c0_53 = arith.constant 0 : index
    %c0_54 = arith.constant 0 : index
    %91 = vector.load %arg12[%c0_53, %c0_54] : memref<16x1xf32, #tpu.memory_space<vmem>>, vector<16x1xf32>
    %c0_55 = arith.constant 0 : index
    %c0_56 = arith.constant 0 : index
    %92 = vector.load %arg13[%c0_55, %c0_56] : memref<16x144xbf16, #tpu.memory_space<vmem>>, vector<16x144xbf16>
    %c0_57 = arith.constant 0 : index
    %c0_58 = arith.constant 0 : index
    %93 = vector.load %arg14[%c0_57, %c0_58] : memref<16x1xf32, #tpu.memory_space<vmem>>, vector<16x1xf32>
    %c0_59 = arith.constant 0 : index
    %c0_60 = arith.constant 0 : index
    %94 = vector.load %arg15[%c0_59, %c0_60] : memref<16x16xbf16, #tpu.memory_space<vmem>>, vector<16x16xbf16>
    %c0_61 = arith.constant 0 : index
    %c0_62 = arith.constant 0 : index
    %95 = vector.load %arg16[%c0_61, %c0_62] : memref<16x1xf32, #tpu.memory_space<vmem>>, vector<16x1xf32>
    %96 = arith.truncf %88 : vector<24x512xf32> to vector<24x512xbf16>
    %cst_63 = arith.constant dense<0.000000e+00> : vector<32x512xf32>
    %97 = tpu.matmul %89, %96, %cst_63 {dimension_numbers = #tpu.dot_dimension_numbers<[1], [0], [0], [1], [0, 0, 1, 1], [], []>} : vector<32x24xbf16>, vector<24x512xbf16>, vector<32x512xf32> -> vector<32x512xf32>
    %98 = vector.extract_strided_slice %97 {offsets = [0, 0], sizes = [16, 512], strides = [1, 1]} : vector<32x512xf32> to vector<16x512xf32>
    %99 = vector.broadcast %90 : vector<16x1xf32> to vector<16x512xf32>
    %100 = arith.addf %98, %99 : vector<16x512xf32>
    %cst_64 = arith.constant 0.000000e+00 : f32
    %101 = vector.broadcast %cst_64 : f32 to vector<16x512xf32>
    %102 = arith.maximumf %100, %101 : vector<16x512xf32>
    %103 = vector.extract_strided_slice %97 {offsets = [16, 0], sizes = [16, 512], strides = [1, 1]} : vector<32x512xf32> to vector<16x512xf32>
    %104 = vector.broadcast %91 : vector<16x1xf32> to vector<16x512xf32>
    %105 = arith.addf %103, %104 : vector<16x512xf32>
    %c17_i32_65 = arith.constant 17 : i32
    %106 = tpu.dynamic_rotate %102 by %c17_i32_65 dim 1 : vector<16x512xf32>, i32 -> vector<16x512xf32>
    %c0_66 = arith.constant 0 : index
    %c0_67 = arith.constant 0 : index
    %c0_68 = arith.constant 0 : index
    %107 = vector.load %arg2[%c0_66, %c0_67, %c0_68] : memref<9x1x512xf32, #tpu.memory_space<vmem>>, vector<1x1x512xf32>
    %108 = vector.shape_cast %107 : vector<1x1x512xf32> to vector<1x512xf32>
    %109 = vector.broadcast %108 : vector<1x512xf32> to vector<16x512xf32>
    %110 = arith.mulf %106, %109 : vector<16x512xf32>
    %111 = arith.truncf %110 : vector<16x512xf32> to vector<16x512xbf16>
    %c0_69 = arith.constant 0 : index
    %c0_70 = arith.constant 0 : index
    %112 = vector.load %arg18[%c0_69, %c0_70] : memref<216x512xbf16, #tpu.memory_space<vmem>>, vector<16x512xbf16>
    tpu.vector_store %arg18[%c0_69, %c0_70], %111 {strides = array<i32>} : memref<216x512xbf16, #tpu.memory_space<vmem>>, vector<16x512xbf16>,
    %c16_i32_71 = arith.constant 16 : i32
    %113 = tpu.dynamic_rotate %102 by %c16_i32_71 dim 1 : vector<16x512xf32>, i32 -> vector<16x512xf32>
    %c1_72 = arith.constant 1 : index
    %c0_73 = arith.constant 0 : index
    %c0_74 = arith.constant 0 : index
    %114 = vector.load %arg2[%c1_72, %c0_73, %c0_74] : memref<9x1x512xf32, #tpu.memory_space<vmem>>, vector<1x1x512xf32>
    %115 = vector.shape_cast %114 : vector<1x1x512xf32> to vector<1x512xf32>
    %116 = vector.broadcast %115 : vector<1x512xf32> to vector<16x512xf32>
    %117 = arith.mulf %113, %116 : vector<16x512xf32>
    %118 = arith.truncf %117 : vector<16x512xf32> to vector<16x512xbf16>
    %c16 = arith.constant 16 : index
    %c0_75 = arith.constant 0 : index
    %119 = vector.load %arg18[%c16, %c0_75] : memref<216x512xbf16, #tpu.memory_space<vmem>>, vector<16x512xbf16>
    tpu.vector_store %arg18[%c16, %c0_75], %118 {strides = array<i32>} : memref<216x512xbf16, #tpu.memory_space<vmem>>, vector<16x512xbf16>,
    %c15_i32_76 = arith.constant 15 : i32
    %120 = tpu.dynamic_rotate %102 by %c15_i32_76 dim 1 : vector<16x512xf32>, i32 -> vector<16x512xf32>
    %c2_77 = arith.constant 2 : index
    %c0_78 = arith.constant 0 : index
    %c0_79 = arith.constant 0 : index
    %121 = vector.load %arg2[%c2_77, %c0_78, %c0_79] : memref<9x1x512xf32, #tpu.memory_space<vmem>>, vector<1x1x512xf32>
    %122 = vector.shape_cast %121 : vector<1x1x512xf32> to vector<1x512xf32>
    %123 = vector.broadcast %122 : vector<1x512xf32> to vector<16x512xf32>
    %124 = arith.mulf %120, %123 : vector<16x512xf32>
    %125 = arith.truncf %124 : vector<16x512xf32> to vector<16x512xbf16>
    %c32 = arith.constant 32 : index
    %c0_80 = arith.constant 0 : index
    %126 = vector.load %arg18[%c32, %c0_80] : memref<216x512xbf16, #tpu.memory_space<vmem>>, vector<16x512xbf16>
    tpu.vector_store %arg18[%c32, %c0_80], %125 {strides = array<i32>} : memref<216x512xbf16, #tpu.memory_space<vmem>>, vector<16x512xbf16>,
    %c1_i32_81 = arith.constant 1 : i32
    %127 = tpu.dynamic_rotate %102 by %c1_i32_81 dim 1 : vector<16x512xf32>, i32 -> vector<16x512xf32>
    %c3_82 = arith.constant 3 : index
    %c0_83 = arith.constant 0 : index
    %c0_84 = arith.constant 0 : index
    %128 = vector.load %arg2[%c3_82, %c0_83, %c0_84] : memref<9x1x512xf32, #tpu.memory_space<vmem>>, vector<1x1x512xf32>
    %129 = vector.shape_cast %128 : vector<1x1x512xf32> to vector<1x512xf32>
    %130 = vector.broadcast %129 : vector<1x512xf32> to vector<16x512xf32>
    %131 = arith.mulf %127, %130 : vector<16x512xf32>
    %132 = arith.truncf %131 : vector<16x512xf32> to vector<16x512xbf16>
    %c48_85 = arith.constant 48 : index
    %c0_86 = arith.constant 0 : index
    %133 = vector.load %arg18[%c48_85, %c0_86] : memref<216x512xbf16, #tpu.memory_space<vmem>>, vector<16x512xbf16>
    tpu.vector_store %arg18[%c48_85, %c0_86], %132 {strides = array<i32>} : memref<216x512xbf16, #tpu.memory_space<vmem>>, vector<16x512xbf16>,
    %134 = arith.truncf %102 : vector<16x512xf32> to vector<16x512xbf16>
    %c64 = arith.constant 64 : index
    %c0_87 = arith.constant 0 : index
    %135 = vector.load %arg18[%c64, %c0_87] : memref<216x512xbf16, #tpu.memory_space<vmem>>, vector<16x512xbf16>
    tpu.vector_store %arg18[%c64, %c0_87], %134 {strides = array<i32>} : memref<216x512xbf16, #tpu.memory_space<vmem>>, vector<16x512xbf16>,
    %c511_i32_88 = arith.constant 511 : i32
    %136 = tpu.dynamic_rotate %102 by %c511_i32_88 dim 1 : vector<16x512xf32>, i32 -> vector<16x512xf32>
    %c5_89 = arith.constant 5 : index
    %c0_90 = arith.constant 0 : index
    %c0_91 = arith.constant 0 : index
    %137 = vector.load %arg2[%c5_89, %c0_90, %c0_91] : memref<9x1x512xf32, #tpu.memory_space<vmem>>, vector<1x1x512xf32>
    %138 = vector.shape_cast %137 : vector<1x1x512xf32> to vector<1x512xf32>
    %139 = vector.broadcast %138 : vector<1x512xf32> to vector<16x512xf32>
    %140 = arith.mulf %136, %139 : vector<16x512xf32>
    %141 = arith.truncf %140 : vector<16x512xf32> to vector<16x512xbf16>
    %c80 = arith.constant 80 : index
    %c0_92 = arith.constant 0 : index
    %142 = vector.load %arg18[%c80, %c0_92] : memref<216x512xbf16, #tpu.memory_space<vmem>>, vector<16x512xbf16>
    tpu.vector_store %arg18[%c80, %c0_92], %141 {strides = array<i32>} : memref<216x512xbf16, #tpu.memory_space<vmem>>, vector<16x512xbf16>,
    %c497_i32_93 = arith.constant 497 : i32
    %143 = tpu.dynamic_rotate %102 by %c497_i32_93 dim 1 : vector<16x512xf32>, i32 -> vector<16x512xf32>
    %c6_94 = arith.constant 6 : index
    %c0_95 = arith.constant 0 : index
    %c0_96 = arith.constant 0 : index
    %144 = vector.load %arg2[%c6_94, %c0_95, %c0_96] : memref<9x1x512xf32, #tpu.memory_space<vmem>>, vector<1x1x512xf32>
    %145 = vector.shape_cast %144 : vector<1x1x512xf32> to vector<1x512xf32>
    %146 = vector.broadcast %145 : vector<1x512xf32> to vector<16x512xf32>
    %147 = arith.mulf %143, %146 : vector<16x512xf32>
    %148 = arith.truncf %147 : vector<16x512xf32> to vector<16x512xbf16>
    %c96_97 = arith.constant 96 : index
    %c0_98 = arith.constant 0 : index
    %149 = vector.load %arg18[%c96_97, %c0_98] : memref<216x512xbf16, #tpu.memory_space<vmem>>, vector<16x512xbf16>
    tpu.vector_store %arg18[%c96_97, %c0_98], %148 {strides = array<i32>} : memref<216x512xbf16, #tpu.memory_space<vmem>>, vector<16x512xbf16>,
    %c496_i32_99 = arith.constant 496 : i32
    %150 = tpu.dynamic_rotate %102 by %c496_i32_99 dim 1 : vector<16x512xf32>, i32 -> vector<16x512xf32>
    %c7_100 = arith.constant 7 : index
    %c0_101 = arith.constant 0 : index
    %c0_102 = arith.constant 0 : index
    %151 = vector.load %arg2[%c7_100, %c0_101, %c0_102] : memref<9x1x512xf32, #tpu.memory_space<vmem>>, vector<1x1x512xf32>
    %152 = vector.shape_cast %151 : vector<1x1x512xf32> to vector<1x512xf32>
    %153 = vector.broadcast %152 : vector<1x512xf32> to vector<16x512xf32>
    %154 = arith.mulf %150, %153 : vector<16x512xf32>
    %155 = arith.truncf %154 : vector<16x512xf32> to vector<16x512xbf16>
    %c112 = arith.constant 112 : index
    %c0_103 = arith.constant 0 : index
    %156 = vector.load %arg18[%c112, %c0_103] : memref<216x512xbf16, #tpu.memory_space<vmem>>, vector<16x512xbf16>
    tpu.vector_store %arg18[%c112, %c0_103], %155 {strides = array<i32>} : memref<216x512xbf16, #tpu.memory_space<vmem>>, vector<16x512xbf16>,
    %c495_i32_104 = arith.constant 495 : i32
    %157 = tpu.dynamic_rotate %102 by %c495_i32_104 dim 1 : vector<16x512xf32>, i32 -> vector<16x512xf32>
    %c8_105 = arith.constant 8 : index
    %c0_106 = arith.constant 0 : index
    %c0_107 = arith.constant 0 : index
    %158 = vector.load %arg2[%c8_105, %c0_106, %c0_107] : memref<9x1x512xf32, #tpu.memory_space<vmem>>, vector<1x1x512xf32>
    %159 = vector.shape_cast %158 : vector<1x1x512xf32> to vector<1x512xf32>
    %160 = vector.broadcast %159 : vector<1x512xf32> to vector<16x512xf32>
    %161 = arith.mulf %157, %160 : vector<16x512xf32>
    %162 = arith.truncf %161 : vector<16x512xf32> to vector<16x512xbf16>
    %c128 = arith.constant 128 : index
    %c0_108 = arith.constant 0 : index
    %163 = vector.load %arg18[%c128, %c0_108] : memref<216x512xbf16, #tpu.memory_space<vmem>>, vector<16x512xbf16>
    tpu.vector_store %arg18[%c128, %c0_108], %162 {strides = array<i32>} : memref<216x512xbf16, #tpu.memory_space<vmem>>, vector<16x512xbf16>,
    %c0_109 = arith.constant 0 : index
    %c0_110 = arith.constant 0 : index
    %164 = vector.load %arg18[%c0_109, %c0_110] : memref<216x512xbf16, #tpu.memory_space<vmem>>, vector<144x512xbf16>
    %cst_111 = arith.constant dense<0.000000e+00> : vector<16x512xf32>
    %165 = tpu.matmul %92, %164, %cst_111 {dimension_numbers = #tpu.dot_dimension_numbers<[1], [0], [0], [1], [0, 0, 1, 1], [], []>} : vector<16x144xbf16>, vector<144x512xbf16>, vector<16x512xf32> -> vector<16x512xf32>
    %166 = vector.broadcast %93 : vector<16x1xf32> to vector<16x512xf32>
    %167 = arith.addf %165, %166 : vector<16x512xf32>
    %cst_112 = arith.constant 0.000000e+00 : f32
    %168 = vector.broadcast %cst_112 : f32 to vector<16x512xf32>
    %169 = arith.maximumf %167, %168 : vector<16x512xf32>
    %170 = arith.truncf %169 : vector<16x512xf32> to vector<16x512xbf16>
    %cst_113 = arith.constant dense<0.000000e+00> : vector<16x512xf32>
    %171 = tpu.matmul %94, %170, %cst_113 {dimension_numbers = #tpu.dot_dimension_numbers<[1], [0], [0], [1], [0, 0, 1, 1], [], []>} : vector<16x16xbf16>, vector<16x512xbf16>, vector<16x512xf32> -> vector<16x512xf32>
    %172 = vector.broadcast %95 : vector<16x1xf32> to vector<16x512xf32>
    %173 = arith.addf %171, %172 : vector<16x512xf32>
    %174 = arith.addf %173, %105 : vector<16x512xf32>
    %cst_114 = arith.constant 0.000000e+00 : f32
    %175 = vector.broadcast %cst_114 : f32 to vector<16x512xf32>
    %176 = arith.maximumf %174, %175 : vector<16x512xf32>
    %c0_115 = arith.constant 0 : index
    %c0_116 = arith.constant 0 : index
    %177 = vector.load %arg17[%c0_115, %c0_116] : memref<16x512xf32, #tpu.memory_space<vmem>>, vector<16x512xf32>
    tpu.vector_store %arg17[%c0_115, %c0_116], %176 {strides = array<i32>} : memref<16x512xf32, #tpu.memory_space<vmem>>, vector<16x512xf32>,
    return
  }
  func.func @transform_0(%arg0: i32) -> (i32, i32) {
    %c0_i32 = arith.constant 0 : i32
    %c0_i32_0 = arith.constant 0 : i32
    %c0_i32_1 = arith.constant 0 : i32
    return %c0_i32, %c0_i32_0 : i32, i32
  }
  func.func @transform_1(%arg0: i32) -> (i32, i32, i32) {
    %c0_i32 = arith.constant 0 : i32
    %c0_i32_0 = arith.constant 0 : i32
    %c0_i32_1 = arith.constant 0 : i32
    %c0_i32_2 = arith.constant 0 : i32
    return %c0_i32, %c0_i32_0, %c0_i32_1 : i32, i32, i32
  }
  func.func @transform_2(%arg0: i32) -> (i32, i32) {
    %c0_i32 = arith.constant 0 : i32
    %c0_i32_0 = arith.constant 0 : i32
    %c0_i32_1 = arith.constant 0 : i32
    return %c0_i32, %c0_i32_0 : i32, i32
  }
  func.func @transform_3(%arg0: i32) -> (i32, i32) {
    %c0_i32 = arith.constant 0 : i32
    %c0_i32_0 = arith.constant 0 : i32
    %c0_i32_1 = arith.constant 0 : i32
    return %c0_i32, %c0_i32_0 : i32, i32
  }
  func.func @transform_4(%arg0: i32) -> (i32, i32) {
    %c0_i32 = arith.constant 0 : i32
    %c0_i32_0 = arith.constant 0 : i32
    %c0_i32_1 = arith.constant 0 : i32
    return %c0_i32, %c0_i32_0 : i32, i32
  }
  func.func @transform_5(%arg0: i32) -> (i32, i32) {
    %c0_i32 = arith.constant 0 : i32
    %c0_i32_0 = arith.constant 0 : i32
    %c0_i32_1 = arith.constant 0 : i32
    return %c0_i32, %c0_i32_0 : i32, i32
  }
  func.func @transform_6(%arg0: i32) -> (i32, i32) {
    %c0_i32 = arith.constant 0 : i32
    %c0_i32_0 = arith.constant 0 : i32
    %c0_i32_1 = arith.constant 0 : i32
    return %c0_i32, %c0_i32_0 : i32, i32
  }
  func.func @transform_7(%arg0: i32) -> (i32, i32) {
    %c0_i32 = arith.constant 0 : i32
    %c0_i32_0 = arith.constant 0 : i32
    %c0_i32_1 = arith.constant 0 : i32
    return %c0_i32, %c0_i32_0 : i32, i32
  }
  func.func @transform_8(%arg0: i32) -> (i32, i32) {
    %c0_i32 = arith.constant 0 : i32
    %c0_i32_0 = arith.constant 0 : i32
    %c0_i32_1 = arith.constant 0 : i32
    return %c0_i32, %c0_i32_0 : i32, i32
  }
  func.func @transform_9(%arg0: i32) -> (i32, i32) {
    %c0_i32 = arith.constant 0 : i32
    %c0_i32_0 = arith.constant 0 : i32
    %c0_i32_1 = arith.constant 0 : i32
    return %c0_i32, %c0_i32_0 : i32, i32
  }
  func.func @transform_10(%arg0: i32) -> (i32, i32) {
    %c0_i32 = arith.constant 0 : i32
    %c0_i32_0 = arith.constant 0 : i32
    %c0_i32_1 = arith.constant 0 : i32
    return %c0_i32, %c0_i32_0 : i32, i32
  }
  func.func @transform_11(%arg0: i32) -> (i32, i32) {
    %c0_i32 = arith.constant 0 : i32
    %c0_i32_0 = arith.constant 0 : i32
    %c0_i32_1 = arith.constant 0 : i32
    return %c0_i32, %c0_i32_0 : i32, i32
  }
  func.func @transform_12(%arg0: i32) -> (i32, i32) {
    %c0_i32 = arith.constant 0 : i32
    %c0_i32_0 = arith.constant 0 : i32
    %c0_i32_1 = arith.constant 0 : i32
    return %c0_i32, %c0_i32_0 : i32, i32
  }
  func.func @transform_13(%arg0: i32) -> (i32, i32) {
    %c0_i32 = arith.constant 0 : i32
    %c0_i32_0 = arith.constant 0 : i32
    %c0_i32_1 = arith.constant 0 : i32
    return %c0_i32, %c0_i32_0 : i32, i32
  }
  func.func @transform_14(%arg0: i32) -> (i32, i32) {
    %c0_i32 = arith.constant 0 : i32
    %c0_i32_0 = arith.constant 0 : i32
    %c0_i32_1 = arith.constant 0 : i32
    return %c0_i32, %c0_i32_0 : i32, i32
  }
  func.func @transform_15(%arg0: i32) -> (i32, i32) {
    %c0_i32 = arith.constant 0 : i32
    %c0_i32_0 = arith.constant 0 : i32
    %c0_i32_1 = arith.constant 0 : i32
    return %c0_i32, %c0_i32_0 : i32, i32
  }
  func.func @transform_16(%arg0: i32) -> (i32, i32) {
    %c0_i32 = arith.constant 0 : i32
    %c0_i32_0 = arith.constant 0 : i32
    %c0_i32_1 = arith.constant 0 : i32
    return %c0_i32, %c0_i32_0 : i32, i32
  }
}

</mosaic_0001>

<llo_original>
// kernel: detector_forward.1
$region0: #{detector_forward.1}
  #allocation0 [shape = 'u32[]', space=smem, size = 0x4, offset = 0x4, fixed_abs, tag = 'smem constant byte address 0x4 - core index']
  #allocation1 [shape = 'u32[144,128]{1,0:T(1,128)}', space=vmem, size = 0x12000, scoped, tag = 'internal scratch']
  #allocation2 [shape = 'bf16[216,512]{1,0:T(8,128)(2,1)}', space=vmem, size = 0x36000, scoped, tag = 'scratch operand']
  %s0 = inlined_call_operand.vmem [shape: f32[4,512], index: 0, kind: input, shape index: {}]
  %s1 = inlined_call_operand.vmem [shape: f32[9,1,512], index: 1, kind: input, shape index: {}]
  %s2 = inlined_call_operand.vmem [shape: bf16[48,4], index: 2, kind: input, shape index: {}]
  %s3 = inlined_call_operand.vmem [shape: f32[24,1], index: 3, kind: input, shape index: {}]
  %s4 = inlined_call_operand.vmem [shape: f32[24,1], index: 4, kind: input, shape index: {}]
  %s5 = inlined_call_operand.vmem [shape: bf16[24,216], index: 5, kind: input, shape index: {}]
  %s6 = inlined_call_operand.vmem [shape: f32[24,1], index: 6, kind: input, shape index: {}]
  %s7 = inlined_call_operand.vmem [shape: bf16[24,24], index: 7, kind: input, shape index: {}]
  %s8 = inlined_call_operand.vmem [shape: f32[24,1], index: 8, kind: input, shape index: {}]
  %s9 = inlined_call_operand.vmem [shape: bf16[32,24], index: 9, kind: input, shape index: {}]
  %s10 = inlined_call_operand.vmem [shape: f32[16,1], index: 10, kind: input, shape index: {}]
  %s11 = inlined_call_operand.vmem [shape: f32[16,1], index: 11, kind: input, shape index: {}]
  %s12 = inlined_call_operand.vmem [shape: bf16[16,144], index: 12, kind: input, shape index: {}]
  %s13 = inlined_call_operand.vmem [shape: f32[16,1], index: 13, kind: input, shape index: {}]
  %s14 = inlined_call_operand.vmem [shape: bf16[16,16], index: 14, kind: input, shape index: {}]
  %s15 = inlined_call_operand.vmem [shape: f32[16,1], index: 15, kind: input, shape index: {}]
  %s16 = inlined_call_operand.vmem [shape: f32[16,512], index: 16, kind: output, shape index: {}]
  %s17 = sld [smem:[#allocation0]]
  $region74: #{detector_forward.1} parent=0
    _
  %s19 = ssub.s32 1, %s17
  %s20 = scalar_select 0, %s19, %s17
  // Predicated region
  $region2: #{detector_forward.1} parent=0 // pred_check
    _
  $region3: #{detector_forward.1} parent=0 // pred_check_branch
    %22 = sbr.rel (0) target = $region5
  $region4: #{detector_forward.1} parent=0 // pred_region
    _
  $region5: #{detector_forward.1} parent=0 // pred_fallthru
    _
  // Predicated region
  $region6: #{detector_forward.1} parent=0 // pred_check
    _
  $region7: #{detector_forward.1} parent=0 // pred_check_branch
    %24 = sbr.rel (0) target = $region9
  $region8: #{detector_forward.1} parent=0 // pred_region
    _
  $region9: #{detector_forward.1} parent=0 // pred_fallthru
    _
  // Predicated region
  $region10: #{detector_forward.1} parent=0 // pred_check
    _
  $region11: #{detector_forward.1} parent=0 // pred_check_branch
    %26 = sbr.rel (0) target = $region13
  $region12: #{detector_forward.1} parent=0 // pred_region
    _
  $region13: #{detector_forward.1} parent=0 // pred_fallthru
    _
  // Predicated region
  $region14: #{detector_forward.1} parent=0 // pred_check
    _
  $region15: #{detector_forward.1} parent=0 // pred_check_branch
    %28 = sbr.rel (0) target = $region17
  $region16: #{detector_forward.1} parent=0 // pred_region
    _
  $region17: #{detector_forward.1} parent=0 // pred_fallthru
    _
  // Predicated region
  $region18: #{detector_forward.1} parent=0 // pred_check
    _
  $region19: #{detector_forward.1} parent=0 // pred_check_branch
    %30 = sbr.rel (0) target = $region21
  $region20: #{detector_forward.1} parent=0 // pred_region
    _
  $region21: #{detector_forward.1} parent=0 // pred_fallthru
    _
  // Predicated region
  $region22: #{detector_forward.1} parent=0 // pred_check
    _
  $region23: #{detector_forward.1} parent=0 // pred_check_branch
    %32 = sbr.rel (0) target = $region25
  $region24: #{detector_forward.1} parent=0 // pred_region
    _
  $region25: #{detector_forward.1} parent=0 // pred_fallthru
    _
  // Predicated region
  $region26: #{detector_forward.1} parent=0 // pred_check
    _
  $region27: #{detector_forward.1} parent=0 // pred_check_branch
    %34 = sbr.rel (0) target = $region29
  $region28: #{detector_forward.1} parent=0 // pred_region
    _
  $region29: #{detector_forward.1} parent=0 // pred_fallthru
    _
  // Predicated region
  $region30: #{detector_forward.1} parent=0 // pred_check
    _
  $region31: #{detector_forward.1} parent=0 // pred_check_branch
    %36 = sbr.rel (0) target = $region33
  $region32: #{detector_forward.1} parent=0 // pred_region
    _
  $region33: #{detector_forward.1} parent=0 // pred_fallthru
    _
  // Predicated region
  $region34: #{detector_forward.1} parent=0 // pred_check
    _
  $region35: #{detector_forward.1} parent=0 // pred_check_branch
    %38 = sbr.rel (0) target = $region37
  $region36: #{detector_forward.1} parent=0 // pred_region
    _
  $region37: #{detector_forward.1} parent=0 // pred_fallthru
    _
  // Predicated region
  $region38: #{detector_forward.1} parent=0 // pred_check
    _
  $region39: #{detector_forward.1} parent=0 // pred_check_branch
    %40 = sbr.rel (0) target = $region41
  $region40: #{detector_forward.1} parent=0 // pred_region
    _
  $region41: #{detector_forward.1} parent=0 // pred_fallthru
    _
  // Predicated region
  $region42: #{detector_forward.1} parent=0 // pred_check
    _
  $region43: #{detector_forward.1} parent=0 // pred_check_branch
    %42 = sbr.rel (0) target = $region45
  $region44: #{detector_forward.1} parent=0 // pred_region
    _
  $region45: #{detector_forward.1} parent=0 // pred_fallthru
    _
  // Predicated region
  $region46: #{detector_forward.1} parent=0 // pred_check
    _
  $region47: #{detector_forward.1} parent=0 // pred_check_branch
    %44 = sbr.rel (0) target = $region49
  $region48: #{detector_forward.1} parent=0 // pred_region
    _
  $region49: #{detector_forward.1} parent=0 // pred_fallthru
    _
  // Predicated region
  $region50: #{detector_forward.1} parent=0 // pred_check
    _
  $region51: #{detector_forward.1} parent=0 // pred_check_branch
    %46 = sbr.rel (0) target = $region53
  $region52: #{detector_forward.1} parent=0 // pred_region
    _
  $region53: #{detector_forward.1} parent=0 // pred_fallthru
    _
  // Predicated region
  $region54: #{detector_forward.1} parent=0 // pred_check
    _
  $region55: #{detector_forward.1} parent=0 // pred_check_branch
    %48 = sbr.rel (0) target = $region57
  $region56: #{detector_forward.1} parent=0 // pred_region
    _
  $region57: #{detector_forward.1} parent=0 // pred_fallthru
    _
  // Predicated region
  $region58: #{detector_forward.1} parent=0 // pred_check
    _
  $region59: #{detector_forward.1} parent=0 // pred_check_branch
    %50 = sbr.rel (0) target = $region61
  $region60: #{detector_forward.1} parent=0 // pred_region
    _
  $region61: #{detector_forward.1} parent=0 // pred_fallthru
    _
  // Predicated region
  $region62: #{detector_forward.1} parent=0 // pred_check
    _
  $region63: #{detector_forward.1} parent=0 // pred_check_branch
    %52 = sbr.rel (0) target = $region65
  $region64: #{detector_forward.1} parent=0 // pred_region
    _
  $region65: #{detector_forward.1} parent=0 // pred_fallthru
    _
  %v54 = vld [vmem:[%s0] sm:$0xff]
  %v55 = vld [vmem:[%s0 + $0x8] sm:$0xff]
  %v56 = vld [vmem:[%s2] sm:$0xf]
  %v57 = vld [vmem:[%s2 + $0x4] sm:$0xf]
  %v58 = vld [vmem:[%s2 + $0x8] sm:$0xf]
  %v59 = vld [vmem:[%s2 + $0xc] sm:$0xf]
  %v60 = vld [vmem:[%s2 + $0x10] sm:$0xf]
  %v61 = vld [vmem:[%s2 + $0x14] sm:$0xf]
  %v62 = vld [vmem:[%s3] sm:$0xff]
  %v63 = vld [vmem:[%s3 + $0x8] sm:$0xff]
  %v64 = vld [vmem:[%s3 + $0x10] sm:$0xff]
  %v65 = vld [vmem:[%s4] sm:$0xff]
  %v66 = vld [vmem:[%s4 + $0x8] sm:$0xff]
  %v67 = vld [vmem:[%s4 + $0x10] sm:$0xff]
  %v68 = vld [vmem:[%s5] sm:$0xff]
  %v69 = vld [vmem:[%s5 + $0x8] sm:$0xff]
  %v70 = vld [vmem:[%s5 + $0x10] sm:$0xff]
  %v71 = vld [vmem:[%s6] sm:$0xff]
  %v72 = vld [vmem:[%s6 + $0x8] sm:$0xff]
  %v73 = vld [vmem:[%s6 + $0x10] sm:$0xff]
  %v74 = vld [vmem:[%s7] sm:$0xf]
  %v75 = vld [vmem:[%s7 + $0x4] sm:$0xf]
  %v76 = vld [vmem:[%s7 + $0x8] sm:$0xf]
  %v77 = vld [vmem:[%s8] sm:$0xff]
  %v78 = vld [vmem:[%s8 + $0x8] sm:$0xff]
  %v79 = vld [vmem:[%s8 + $0x10] sm:$0xff]
  %v82 = vcombine.high %v54, %v54
  %v83 = vcombine.high %v55, %v55
  %v86 = vpack.c.bf16 %v54, %v54
  %v87 = vpack.c.bf16 %v82, %v82
  %v88 = vpack.c.bf16 %v55, %v55
  %v89 = vpack.c.bf16 %v83, %v83
  %v96 = vunpack.c.l.b16 %v56
  %v97 = vunpack.c.l.b16 %v57
  %v98 = vunpack.c.l.b16 %v58
  %v99 = vunpack.c.l.b16 %v59
  %v100 = vunpack.c.l.b16 %v60
  %v101 = vunpack.c.l.b16 %v61
  %v102 = vpack.c.b16 %v97, %v96
  %v103 = vpack.c.b16 %v99, %v98
  %v104 = vpack.c.b16 %v101, %v100
  %vm105 = vcmask 31744
  %v107 = vsel %vm105, %v102, 0
  %v110 = vsel %vm105, %v103, 0
  %v113 = vsel %vm105, %v104, 0
  %vm115 = vcmask 1041408
  %v117 = vsel %vm115, %v86, 0
  %v120 = vsel %vm115, %v87, 0
  %v123 = vsel %vm115, %v88, 0
  %v126 = vsel %vm115, %v89, 0
  %128 = vmatprep.subr.bf16.mxu0 %v120
  %129 = vmatpush1.bf16.msra.mxu0 %v117
  %130 = vmatprep.subr.bf16.mxu0 0
  %131 = vmatpush1.bf16.msra.mxu0 0
  %132 = vmatprep.subr.bf16.mxu0 0
  %133 = vmatpush1.bf16.msra.mxu0 0
  %134 = vmatprep.subr.bf16.mxu0 0
  %135 = vmatpush1.bf16.msra.mxu0 0
  %136 = vmatprep.subr.bf16.mxu0 0
  %137 = vmatpush1.bf16.msra.mxu0 0
  %138 = vmatprep.subr.bf16.mxu0 0
  %139 = vmatpush1.bf16.msra.mxu0 0
  %140 = vmatprep.subr.bf16.mxu0 0
  %141 = vmatpush1.bf16.msra.mxu0 0
  %142 = vmatprep.subr.bf16.mxu0 0
  %143 = vmatpush1.bf16.msra.mxu0 0
  %144 = vmatprep.subr.bf16.mxu0 0
  %145 = vmatpush1.bf16.msra.mxu0 0
  %146 = vmatprep.subr.bf16.mxu0 0
  %147 = vmatpush1.bf16.msra.mxu0 0
  %148 = vmatprep.subr.bf16.mxu0 0
  %149 = vmatpush1.bf16.msra.mxu0 0
  %150 = vmatprep.subr.bf16.mxu0 0
  %151 = vmatpush1.bf16.msra.mxu0 0
  %152 = vmatprep.subr.bf16.mxu0 0
  %153 = vmatpush1.bf16.msra.mxu0 0
  %154 = vmatprep.subr.bf16.mxu0 0
  %155 = vmatpush1.bf16.msra.mxu0 0
  %156 = vmatprep.subr.bf16.mxu0 0
  %157 = vmatpush1.bf16.msra.mxu0 0
  %158 = vmatprep.subr.bf16.mxu0 0
  %159 = vmatpush1.bf16.msra.mxu0 0
  %160 = vmatprep.mubr.bf16.mxu0 0
  %161 = vmatmul.mubr.bf16.gmra.mrb[0].mxu0 %v107
  %v162 = vpop.f32.mrb[0].mxu0
  %v163 = vadd.f32 0.0, %v162
  %v164 = vpop.f32.mrb[0].mxu0
  %v165 = vadd.f32 0.0, %v164
  %v166 = vpop.f32.mrb[0].mxu0
  %v167 = vadd.f32 0.0, %v166
  %v168 = vpop.f32.mrb[0].mxu0
  %v169 = vadd.f32 0.0, %v168
  %170 = vmatprep.mubr.bf16.mxu0 0
  %171 = vmatmul.mubr.bf16.gmra.mrb[0].mxu0 %v110
  %v172 = vpop.f32.mrb[0].mxu0
  %v173 = vadd.f32 0.0, %v172
  %v174 = vpop.f32.mrb[0].mxu0
  %v175 = vadd.f32 0.0, %v174
  %v176 = vpop.f32.mrb[0].mxu0
  %v177 = vadd.f32 0.0, %v176
  %v178 = vpop.f32.mrb[0].mxu0
  %v179 = vadd.f32 0.0, %v178
  %180 = vmatprep.mubr.bf16.mxu0 0
  %181 = vmatmul.mubr.bf16.gmra.mrb[0].mxu0 %v113
  %v182 = vpop.f32.mrb[0].mxu0
  %v183 = vadd.f32 0.0, %v182
  %v184 = vpop.f32.mrb[0].mxu0
  %v185 = vadd.f32 0.0, %v184
  %v186 = vpop.f32.mrb[0].mxu0
  %v187 = vadd.f32 0.0, %v186
  %v188 = vpop.f32.mrb[0].mxu0
  %v189 = vadd.f32 0.0, %v188
  %190 = vdwg.mxu0
  %191 = vmatprep.subr.bf16.mxu0 %v126
  %192 = vmatpush1.bf16.msra.mxu0 %v123
  %193 = vmatprep.subr.bf16.mxu0 0
  %194 = vmatpush1.bf16.msra.mxu0 0
  %195 = vmatprep.subr.bf16.mxu0 0
  %196 = vmatpush1.bf16.msra.mxu0 0
  %197 = vmatprep.subr.bf16.mxu0 0
  %198 = vmatpush1.bf16.msra.mxu0 0
  %199 = vmatprep.subr.bf16.mxu0 0
  %200 = vmatpush1.bf16.msra.mxu0 0
  %201 = vmatprep.subr.bf16.mxu0 0
  %202 = vmatpush1.bf16.msra.mxu0 0
  %203 = vmatprep.subr.bf16.mxu0 0
  %204 = vmatpush1.bf16.msra.mxu0 0
  %205 = vmatprep.subr.bf16.mxu0 0
  %206 = vmatpush1.bf16.msra.mxu0 0
  %207 = vmatprep.subr.bf16.mxu0 0
  %208 = vmatpush1.bf16.msra.mxu0 0
  %209 = vmatprep.subr.bf16.mxu0 0
  %210 = vmatpush1.bf16.msra.mxu0 0
  %211 = vmatprep.subr.bf16.mxu0 0
  %212 = vmatpush1.bf16.msra.mxu0 0
  %213 = vmatprep.subr.bf16.mxu0 0
  %214 = vmatpush1.bf16.msra.mxu0 0
  %215 = vmatprep.subr.bf16.mxu0 0
  %216 = vmatpush1.bf16.msra.mxu0 0
  %217 = vmatprep.subr.bf16.mxu0 0
  %218 = vmatpush1.bf16.msra.mxu0 0
  %219 = vmatprep.subr.bf16.mxu0 0
  %220 = vmatpush1.bf16.msra.mxu0 0
  %221 = vmatprep.subr.bf16.mxu0 0
  %222 = vmatpush1.bf16.msra.mxu0 0
  %223 = vmatprep.mubr.bf16.mxu0 0
  %224 = vmatmul.mubr.bf16.gmra.mrb[0].mxu0 %v107
  %v225 = vpop.f32.mrb[0].mxu0
  %v226 = vadd.f32 0.0, %v225
  %v227 = vpop.f32.mrb[0].mxu0
  %v228 = vadd.f32 0.0, %v227
  %v229 = vpop.f32.mrb[0].mxu0
  %v230 = vadd.f32 0.0, %v229
  %v231 = vpop.f32.mrb[0].mxu0
  %v232 = vadd.f32 0.0, %v231
  %233 = vmatprep.mubr.bf16.mxu0 0
  %234 = vmatmul.mubr.bf16.gmra.mrb[0].mxu0 %v110
  %v235 = vpop.f32.mrb[0].mxu0
  %v236 = vadd.f32 0.0, %v235
  %v237 = vpop.f32.mrb[0].mxu0
  %v238 = vadd.f32 0.0, %v237
  %v239 = vpop.f32.mrb[0].mxu0
  %v240 = vadd.f32 0.0, %v239
  %v241 = vpop.f32.mrb[0].mxu0
  %v242 = vadd.f32 0.0, %v241
  %243 = vmatprep.mubr.bf16.mxu0 0
  %244 = vmatmul.mubr.bf16.gmra.mrb[0].mxu0 %v113
  %v245 = vpop.f32.mrb[0].mxu0
  %v246 = vadd.f32 0.0, %v245
  %v247 = vpop.f32.mrb[0].mxu0
  %v248 = vadd.f32 0.0, %v247
  %v249 = vpop.f32.mrb[0].mxu0
  %v250 = vadd.f32 0.0, %v249
  %v251 = vpop.f32.mrb[0].mxu0
  %v252 = vadd.f32 0.0, %v251
  %253 = vdwg.mxu0
  %255 = vset.pattern.permute.xlu0 0
  %256 = vperm.xlu0 %255, %v62
  %v257 = vpop.permute.xlu0 %256
  %260 = vset.pattern.permute.xlu0 0
  %261 = vperm.xlu0 %260, %v63
  %v262 = vpop.permute.xlu0 %261
  %265 = vset.pattern.permute.xlu0 0
  %266 = vperm.xlu0 %265, %v64
  %v267 = vpop.permute.xlu0 %266
  %v269 = vadd.f32 %v163, %v257
  %v270 = vadd.f32 %v165, %v257
  %v271 = vadd.f32 %v226, %v257
  %v272 = vadd.f32 %v228, %v257
  %v273 = vadd.f32 %v167, %v262
  %v274 = vadd.f32 %v169, %v262
  %v275 = vadd.f32 %v230, %v262
  %v276 = vadd.f32 %v232, %v262
  %v277 = vadd.f32 %v173, %v267
  %v278 = vadd.f32 %v175, %v267
  %v279 = vadd.f32 %v236, %v267
  %v280 = vadd.f32 %v238, %v267
  %v281 = vmax.f32 %v269, 0.0
  %v282 = vmax.f32 %v270, 0.0
  %v283 = vmax.f32 %v271, 0.0
  %v284 = vmax.f32 %v272, 0.0
  %v285 = vmax.f32 %v273, 0.0
  %v286 = vmax.f32 %v274, 0.0
  %v287 = vmax.f32 %v275, 0.0
  %v288 = vmax.f32 %v276, 0.0
  %v289 = vmax.f32 %v277, 0.0
  %v290 = vmax.f32 %v278, 0.0
  %v291 = vmax.f32 %v279, 0.0
  %v292 = vmax.f32 %v280, 0.0
  %294 = vset.pattern.permute.xlu0 0
  %295 = vperm.xlu0 %294, %v65
  %v296 = vpop.permute.xlu0 %295
  %299 = vset.pattern.permute.xlu0 0
  %300 = vperm.xlu0 %299, %v66
  %v301 = vpop.permute.xlu0 %300
  %304 = vset.pattern.permute.xlu0 0
  %305 = vperm.xlu0 %304, %v67
  %v306 = vpop.permute.xlu0 %305
  %v308 = vadd.f32 %v177, %v296
  %v309 = vadd.f32 %v179, %v296
  %v310 = vadd.f32 %v240, %v296
  %v311 = vadd.f32 %v242, %v296
  %v312 = vadd.f32 %v183, %v301
  %v313 = vadd.f32 %v185, %v301
  %v314 = vadd.f32 %v246, %v301
  %v315 = vadd.f32 %v248, %v301
  %v316 = vadd.f32 %v187, %v306
  %v317 = vadd.f32 %v189, %v306
  %v318 = vadd.f32 %v250, %v306
  %v319 = vadd.f32 %v252, %v306
  %320 = vrot.lane.b32.xlu0 %v281, 17
  %v321 = vpop.permute.xlu0 %320
  %322 = vrot.lane.b32.xlu0 %v285, 17
  %v323 = vpop.permute.xlu0 %322
  %324 = vrot.lane.b32.xlu0 %v289, 17
  %v325 = vpop.permute.xlu0 %324
  %326 = vrot.lane.b32.xlu0 %v282, 17
  %v327 = vpop.permute.xlu0 %326
  %328 = vrot.lane.b32.xlu0 %v286, 17
  %v329 = vpop.permute.xlu0 %328
  %330 = vrot.lane.b32.xlu0 %v290, 17
  %v331 = vpop.permute.xlu0 %330
  %332 = vrot.lane.b32.xlu0 %v283, 17
  %v333 = vpop.permute.xlu0 %332
  %334 = vrot.lane.b32.xlu0 %v287, 17
  %v335 = vpop.permute.xlu0 %334
  %336 = vrot.lane.b32.xlu0 %v291, 17
  %v337 = vpop.permute.xlu0 %336
  %338 = vrot.lane.b32.xlu0 %v284, 17
  %v339 = vpop.permute.xlu0 %338
  %340 = vrot.lane.b32.xlu0 %v288, 17
  %v341 = vpop.permute.xlu0 %340
  %342 = vrot.lane.b32.xlu0 %v292, 17
  %v343 = vpop.permute.xlu0 %342
  %v344 = vlaneseq
  %v345 = vand.u32 %v344, 127
  %vm346 = vcmp.lt.s32.totalorder %v345, 17
  %v347 = vsel %vm346, %v333, %v339
  %v348 = vsel %vm346, %v335, %v341
  %v349 = vsel %vm346, %v337, %v343
  %v350 = vsel %vm346, %v327, %v333
  %v351 = vsel %vm346, %v329, %v335
  %v352 = vsel %vm346, %v331, %v337
  %v353 = vsel %vm346, %v321, %v327
  %v354 = vsel %vm346, %v323, %v329
  %v355 = vsel %vm346, %v325, %v331
  %v356 = vsel %vm346, %v339, %v321
  %v357 = vsel %vm346, %v341, %v323
  %v358 = vsel %vm346, %v343, %v325
  %v359 = vld [vmem:[%s1] sm:$0xf]
  %v361 = vlaneseq
  %v362 = vshrl.u32 %v361, 7
  %v363 = vsub.s32 0, %v362
  %v364 = vrot.slane %v359, %v363
  %v365 = vlaneseq
  %v366 = vshrl.u32 %v365, 7
  %v367 = vsub.s32 1, %v366
  %v368 = vrot.slane %v359, %v367
  %v369 = vlaneseq
  %v370 = vshrl.u32 %v369, 7
  %v371 = vsub.s32 2, %v370
  %v372 = vrot.slane %v359, %v371
  %v373 = vlaneseq
  %v374 = vshrl.u32 %v373, 7
  %v375 = vsub.s32 3, %v374
  %v376 = vrot.slane %v359, %v375
  %v381 = vmul.f32 %v356, %v364
  %v382 = vmul.f32 %v353, %v368
  %v383 = vmul.f32 %v350, %v372
  %v384 = vmul.f32 %v347, %v376
  %v385 = vmul.f32 %v357, %v364
  %v386 = vmul.f32 %v354, %v368
  %v387 = vmul.f32 %v351, %v372
  %v388 = vmul.f32 %v348, %v376
  %v389 = vmul.f32 %v358, %v364
  %v390 = vmul.f32 %v355, %v368
  %v391 = vmul.f32 %v352, %v372
  %v392 = vmul.f32 %v349, %v376
  %v393 = vpack.c.bf16 %v385, %v381
  %v394 = vpack.c.bf16 %v386, %v382
  %v395 = vpack.c.bf16 %v387, %v383
  %v396 = vpack.c.bf16 %v388, %v384
  %v397 = vpack.c.bf16 %v389, %v389
  %v398 = vpack.c.bf16 %v390, %v390
  %v399 = vpack.c.bf16 %v391, %v391
  %v400 = vpack.c.bf16 %v392, %v392
  %v409 = vunpack.c.l.b16 %v393
  %v410 = vunpack.c.l.b16 %v394
  %v411 = vunpack.c.l.b16 %v395
  %v412 = vunpack.c.l.b16 %v396
  %v413 = vunpack.c.h.b16 %v393
  %v414 = vunpack.c.h.b16 %v394
  %v415 = vunpack.c.h.b16 %v395
  %v416 = vunpack.c.h.b16 %v396
  %v417 = vunpack.c.l.b16 %v397
  %v418 = vunpack.c.l.b16 %v398
  %v419 = vunpack.c.l.b16 %v399
  %v420 = vunpack.c.l.b16 %v400
  %v421 = vpack.c.b16 %v410, %v409
  %v422 = vpack.c.b16 %v412, %v411
  %v423 = vpack.c.b16 %v414, %v413
  %v424 = vpack.c.b16 %v416, %v415
  %v425 = vpack.c.b16 %v418, %v417
  %v426 = vpack.c.b16 %v420, %v419
  %433 = vst [vmem:[#allocation2] sm:$0xff] %v421
  %434 = vst [vmem:[#allocation2 + $0x8] sm:$0xff] %v422
  %435 = vst [vmem:[#allocation2 + $0x10] sm:$0xff] %v423
  %436 = vst [vmem:[#allocation2 + $0x18] sm:$0xff] %v424
  %437 = vst [vmem:[#allocation2 + $0x20] sm:$0xff] %v425
  %438 = vst [vmem:[#allocation2 + $0x28] sm:$0xff] %v426
  %439 = vrot.lane.b32.xlu0 %v281, 16
  %v440 = vpop.permute.xlu0 %439
  %441 = vrot.lane.b32.xlu0 %v285, 16
  %v442 = vpop.permute.xlu0 %441
  %443 = vrot.lane.b32.xlu0 %v289, 16
  %v444 = vpop.permute.xlu0 %443
  %445 = vrot.lane.b32.xlu0 %v282, 16
  %v446 = vpop.permute.xlu0 %445
  %447 = vrot.lane.b32.xlu0 %v286, 16
  %v448 = vpop.permute.xlu0 %447
  %449 = vrot.lane.b32.xlu0 %v290, 16
  %v450 = vpop.permute.xlu0 %449
  %451 = vrot.lane.b32.xlu0 %v283, 16
  %v452 = vpop.permute.xlu0 %451
  %453 = vrot.lane.b32.xlu0 %v287, 16
  %v454 = vpop.permute.xlu0 %453
  %455 = vrot.lane.b32.xlu0 %v291, 16
  %v456 = vpop.permute.xlu0 %455
  %457 = vrot.lane.b32.xlu0 %v284, 16
  %v458 = vpop.permute.xlu0 %457
  %459 = vrot.lane.b32.xlu0 %v288, 16
  %v460 = vpop.permute.xlu0 %459
  %461 = vrot.lane.b32.xlu0 %v292, 16
  %v462 = vpop.permute.xlu0 %461
  %vm463 = vcmp.lt.s32.totalorder %v345, 16
  %v464 = vsel %vm463, %v452, %v458
  %v465 = vsel %vm463, %v454, %v460
  %v466 = vsel %vm463, %v456, %v462
  %v467 = vsel %vm463, %v446, %v452
  %v468 = vsel %vm463, %v448, %v454
  %v469 = vsel %vm463, %v450, %v456
  %v470 = vsel %vm463, %v440, %v446
  %v471 = vsel %vm463, %v442, %v448
  %v472 = vsel %vm463, %v444, %v450
  %v473 = vsel %vm463, %v458, %v440
  %v474 = vsel %vm463, %v460, %v442
  %v475 = vsel %vm463, %v462, %v444
  %s476 = scalar_lea.vmem %s1, 4
  %v477 = vld [vmem:[%s476] sm:$0xf]
  %v479 = vlaneseq
  %v480 = vshrl.u32 %v479, 7
  %v481 = vsub.s32 0, %v480
  %v482 = vrot.slane %v477, %v481
  %v483 = vlaneseq
  %v484 = vshrl.u32 %v483, 7
  %v485 = vsub.s32 1, %v484
  %v486 = vrot.slane %v477, %v485
  %v487 = vlaneseq
  %v488 = vshrl.u32 %v487, 7
  %v489 = vsub.s32 2, %v488
  %v490 = vrot.slane %v477, %v489
  %v491 = vlaneseq
  %v492 = vshrl.u32 %v491, 7
  %v493 = vsub.s32 3, %v492
  %v494 = vrot.slane %v477, %v493
  %v499 = vmul.f32 %v473, %v482
  %v500 = vmul.f32 %v470, %v486
  %v501 = vmul.f32 %v467, %v490
  %v502 = vmul.f32 %v464, %v494
  %v503 = vmul.f32 %v474, %v482
  %v504 = vmul.f32 %v471, %v486
  %v505 = vmul.f32 %v468, %v490
  %v506 = vmul.f32 %v465, %v494
  %v507 = vmul.f32 %v475, %v482
  %v508 = vmul.f32 %v472, %v486
  %v509 = vmul.f32 %v469, %v490
  %v510 = vmul.f32 %v466, %v494
  %v511 = vpack.c.bf16 %v503, %v499
  %v512 = vpack.c.bf16 %v504, %v500
  %v513 = vpack.c.bf16 %v505, %v501
  %v514 = vpack.c.bf16 %v506, %v502
  %v515 = vpack.c.bf16 %v507, %v507
  %v516 = vpack.c.bf16 %v508, %v508
  %v517 = vpack.c.bf16 %v509, %v509
  %v518 = vpack.c.bf16 %v510, %v510
  %v527 = vunpack.c.l.b16 %v511
  %v528 = vunpack.c.l.b16 %v512
  %v529 = vunpack.c.l.b16 %v513
  %v530 = vunpack.c.l.b16 %v514
  %v531 = vunpack.c.h.b16 %v511
  %v532 = vunpack.c.h.b16 %v512
  %v533 = vunpack.c.h.b16 %v513
  %v534 = vunpack.c.h.b16 %v514
  %v535 = vunpack.c.l.b16 %v515
  %v536 = vunpack.c.l.b16 %v516
  %v537 = vunpack.c.l.b16 %v517
  %v538 = vunpack.c.l.b16 %v518
  %v539 = vpack.c.b16 %v528, %v527
  %v540 = vpack.c.b16 %v530, %v529
  %v541 = vpack.c.b16 %v532, %v531
  %v542 = vpack.c.b16 %v534, %v533
  %v543 = vpack.c.b16 %v536, %v535
  %v544 = vpack.c.b16 %v538, %v537
  %551 = vst [vmem:[#allocation2 + $0x30] sm:$0xff] %v539
  %552 = vst [vmem:[#allocation2 + $0x38] sm:$0xff] %v540
  %553 = vst [vmem:[#allocation2 + $0x40] sm:$0xff] %v541
  %554 = vst [vmem:[#allocation2 + $0x48] sm:$0xff] %v542
  %555 = vst [vmem:[#allocation2 + $0x50] sm:$0xff] %v543
  %556 = vst [vmem:[#allocation2 + $0x58] sm:$0xff] %v544
  %557 = vrot.lane.b32.xlu0 %v281, 15
  %v558 = vpop.permute.xlu0 %557
  %559 = vrot.lane.b32.xlu0 %v285, 15
  %v560 = vpop.permute.xlu0 %559
  %561 = vrot.lane.b32.xlu0 %v289, 15
  %v562 = vpop.permute.xlu0 %561
  %563 = vrot.lane.b32.xlu0 %v282, 15
  %v564 = vpop.permute.xlu0 %563
  %565 = vrot.lane.b32.xlu0 %v286, 15
  %v566 = vpop.permute.xlu0 %565
  %567 = vrot.lane.b32.xlu0 %v290, 15
  %v568 = vpop.permute.xlu0 %567
  %569 = vrot.lane.b32.xlu0 %v283, 15
  %v570 = vpop.permute.xlu0 %569
  %571 = vrot.lane.b32.xlu0 %v287, 15
  %v572 = vpop.permute.xlu0 %571
  %573 = vrot.lane.b32.xlu0 %v291, 15
  %v574 = vpop.permute.xlu0 %573
  %575 = vrot.lane.b32.xlu0 %v284, 15
  %v576 = vpop.permute.xlu0 %575
  %577 = vrot.lane.b32.xlu0 %v288, 15
  %v578 = vpop.permute.xlu0 %577
  %579 = vrot.lane.b32.xlu0 %v292, 15
  %v580 = vpop.permute.xlu0 %579
  %vm581 = vcmp.lt.s32.totalorder %v345, 15
  %v582 = vsel %vm581, %v570, %v576
  %v583 = vsel %vm581, %v572, %v578
  %v584 = vsel %vm581, %v574, %v580
  %v585 = vsel %vm581, %v564, %v570
  %v586 = vsel %vm581, %v566, %v572
  %v587 = vsel %vm581, %v568, %v574
  %v588 = vsel %vm581, %v558, %v564
  %v589 = vsel %vm581, %v560, %v566
  %v590 = vsel %vm581, %v562, %v568
  %v591 = vsel %vm581, %v576, %v558
  %v592 = vsel %vm581, %v578, %v560
  %v593 = vsel %vm581, %v580, %v562
  %s594 = scalar_lea.vmem %s1, 8
  %v595 = vld [vmem:[%s594] sm:$0xf]
  %v597 = vlaneseq
  %v598 = vshrl.u32 %v597, 7
  %v599 = vsub.s32 0, %v598
  %v600 = vrot.slane %v595, %v599
  %v601 = vlaneseq
  %v602 = vshrl.u32 %v601, 7
  %v603 = vsub.s32 1, %v602
  %v604 = vrot.slane %v595, %v603
  %v605 = vlaneseq
  %v606 = vshrl.u32 %v605, 7
  %v607 = vsub.s32 2, %v606
  %v608 = vrot.slane %v595, %v607
  %v609 = vlaneseq
  %v610 = vshrl.u32 %v609, 7
  %v611 = vsub.s32 3, %v610
  %v612 = vrot.slane %v595, %v611
  %v617 = vmul.f32 %v591, %v600
  %v618 = vmul.f32 %v588, %v604
  %v619 = vmul.f32 %v585, %v608
  %v620 = vmul.f32 %v582, %v612
  %v621 = vmul.f32 %v592, %v600
  %v622 = vmul.f32 %v589, %v604
  %v623 = vmul.f32 %v586, %v608
  %v624 = vmul.f32 %v583, %v612
  %v625 = vmul.f32 %v593, %v600
  %v626 = vmul.f32 %v590, %v604
  %v627 = vmul.f32 %v587, %v608
  %v628 = vmul.f32 %v584, %v612
  %v629 = vpack.c.bf16 %v621, %v617
  %v630 = vpack.c.bf16 %v622, %v618
  %v631 = vpack.c.bf16 %v623, %v619
  %v632 = vpack.c.bf16 %v624, %v620
  %v633 = vpack.c.bf16 %v625, %v625
  %v634 = vpack.c.bf16 %v626, %v626
  %v635 = vpack.c.bf16 %v627, %v627
  %v636 = vpack.c.bf16 %v628, %v628
  %v645 = vunpack.c.l.b16 %v629
  %v646 = vunpack.c.l.b16 %v630
  %v647 = vunpack.c.l.b16 %v631
  %v648 = vunpack.c.l.b16 %v632
  %v649 = vunpack.c.h.b16 %v629
  %v650 = vunpack.c.h.b16 %v630
  %v651 = vunpack.c.h.b16 %v631
  %v652 = vunpack.c.h.b16 %v632
  %v653 = vunpack.c.l.b16 %v633
  %v654 = vunpack.c.l.b16 %v634
  %v655 = vunpack.c.l.b16 %v635
  %v656 = vunpack.c.l.b16 %v636
  %v657 = vpack.c.b16 %v646, %v645
  %v658 = vpack.c.b16 %v648, %v647
  %v659 = vpack.c.b16 %v650, %v649
  %v660 = vpack.c.b16 %v652, %v651
  %v661 = vpack.c.b16 %v654, %v653
  %v662 = vpack.c.b16 %v656, %v655
  %669 = vst [vmem:[#allocation2 + $0x60] sm:$0xff] %v657
  %670 = vst [vmem:[#allocation2 + $0x68] sm:$0xff] %v658
  %671 = vst [vmem:[#allocation2 + $0x70] sm:$0xff] %v659
  %672 = vst [vmem:[#allocation2 + $0x78] sm:$0xff] %v660
  %673 = vst [vmem:[#allocation2 + $0x80] sm:$0xff] %v661
  %674 = vst [vmem:[#allocation2 + $0x88] sm:$0xff] %v662
  %675 = vrot.lane.b32.xlu0 %v281, 1
  %v676 = vpop.permute.xlu0 %675
  %677 = vrot.lane.b32.xlu0 %v285, 1
  %v678 = vpop.permute.xlu0 %677
  %679 = vrot.lane.b32.xlu0 %v289, 1
  %v680 = vpop.permute.xlu0 %679
  %681 = vrot.lane.b32.xlu0 %v282, 1
  %v682 = vpop.permute.xlu0 %681
  %683 = vrot.lane.b32.xlu0 %v286, 1
  %v684 = vpop.permute.xlu0 %683
  %685 = vrot.lane.b32.xlu0 %v290, 1
  %v686 = vpop.permute.xlu0 %685
  %687 = vrot.lane.b32.xlu0 %v283, 1
  %v688 = vpop.permute.xlu0 %687
  %689 = vrot.lane.b32.xlu0 %v287, 1
  %v690 = vpop.permute.xlu0 %689
  %691 = vrot.lane.b32.xlu0 %v291, 1
  %v692 = vpop.permute.xlu0 %691
  %693 = vrot.lane.b32.xlu0 %v284, 1
  %v694 = vpop.permute.xlu0 %693
  %695 = vrot.lane.b32.xlu0 %v288, 1
  %v696 = vpop.permute.xlu0 %695
  %697 = vrot.lane.b32.xlu0 %v292, 1
  %v698 = vpop.permute.xlu0 %697
  %vm699 = vcmp.lt.s32.totalorder %v345, 1
  %v700 = vsel %vm699, %v688, %v694
  %v701 = vsel %vm699, %v690, %v696
  %v702 = vsel %vm699, %v692, %v698
  %v703 = vsel %vm699, %v682, %v688
  %v704 = vsel %vm699, %v684, %v690
  %v705 = vsel %vm699, %v686, %v692
  %v706 = vsel %vm699, %v676, %v682
  %v707 = vsel %vm699, %v678, %v684
  %v708 = vsel %vm699, %v680, %v686
  %v709 = vsel %vm699, %v694, %v676
  %v710 = vsel %vm699, %v696, %v678
  %v711 = vsel %vm699, %v698, %v680
  %s712 = scalar_lea.vmem %s1, 12
  %v713 = vld [vmem:[%s712] sm:$0xf]
  %v715 = vlaneseq
  %v716 = vshrl.u32 %v715, 7
  %v717 = vsub.s32 0, %v716
  %v718 = vrot.slane %v713, %v717
  %v719 = vlaneseq
  %v720 = vshrl.u32 %v719, 7
  %v721 = vsub.s32 1, %v720
  %v722 = vrot.slane %v713, %v721
  %v723 = vlaneseq
  %v724 = vshrl.u32 %v723, 7
  %v725 = vsub.s32 2, %v724
  %v726 = vrot.slane %v713, %v725
  %v727 = vlaneseq
  %v728 = vshrl.u32 %v727, 7
  %v729 = vsub.s32 3, %v728
  %v730 = vrot.slane %v713, %v729
  %v735 = vmul.f32 %v709, %v718
  %v736 = vmul.f32 %v706, %v722
  %v737 = vmul.f32 %v703, %v726
  %v738 = vmul.f32 %v700, %v730
  %v739 = vmul.f32 %v710, %v718
  %v740 = vmul.f32 %v707, %v722
  %v741 = vmul.f32 %v704, %v726
  %v742 = vmul.f32 %v701, %v730
  %v743 = vmul.f32 %v711, %v718
  %v744 = vmul.f32 %v708, %v722
  %v745 = vmul.f32 %v705, %v726
  %v746 = vmul.f32 %v702, %v730
  %v747 = vpack.c.bf16 %v739, %v735
  %v748 = vpack.c.bf16 %v740, %v736
  %v749 = vpack.c.bf16 %v741, %v737
  %v750 = vpack.c.bf16 %v742, %v738
  %v751 = vpack.c.bf16 %v743, %v743
  %v752 = vpack.c.bf16 %v744, %v744
  %v753 = vpack.c.bf16 %v745, %v745
  %v754 = vpack.c.bf16 %v746, %v746
  %v763 = vunpack.c.l.b16 %v747
  %v764 = vunpack.c.l.b16 %v748
  %v765 = vunpack.c.l.b16 %v749
  %v766 = vunpack.c.l.b16 %v750
  %v767 = vunpack.c.h.b16 %v747
  %v768 = vunpack.c.h.b16 %v748
  %v769 = vunpack.c.h.b16 %v749
  %v770 = vunpack.c.h.b16 %v750
  %v771 = vunpack.c.l.b16 %v751
  %v772 = vunpack.c.l.b16 %v752
  %v773 = vunpack.c.l.b16 %v753
  %v774 = vunpack.c.l.b16 %v754
  %v775 = vpack.c.b16 %v764, %v763
  %v776 = vpack.c.b16 %v766, %v765
  %v777 = vpack.c.b16 %v768, %v767
  %v778 = vpack.c.b16 %v770, %v769
  %v779 = vpack.c.b16 %v772, %v771
  %v780 = vpack.c.b16 %v774, %v773
  %787 = vst [vmem:[#allocation2 + $0x90] sm:$0xff] %v775
  %788 = vst [vmem:[#allocation2 + $0x98] sm:$0xff] %v776
  %789 = vst [vmem:[#allocation2 + $0xa0] sm:$0xff] %v777
  %790 = vst [vmem:[#allocation2 + $0xa8] sm:$0xff] %v778
  %791 = vst [vmem:[#allocation2 + $0xb0] sm:$0xff] %v779
  %792 = vst [vmem:[#allocation2 + $0xb8] sm:$0xff] %v780
  %v793 = vpack.c.bf16 %v285, %v281
  %v794 = vpack.c.bf16 %v286, %v282
  %v795 = vpack.c.bf16 %v287, %v283
  %v796 = vpack.c.bf16 %v288, %v284
  %v797 = vpack.c.bf16 %v289, %v289
  %v798 = vpack.c.bf16 %v290, %v290
  %v799 = vpack.c.bf16 %v291, %v291
  %v800 = vpack.c.bf16 %v292, %v292
  %v809 = vunpack.c.l.b16 %v793
  %v810 = vunpack.c.l.b16 %v794
  %v811 = vunpack.c.l.b16 %v795
  %v812 = vunpack.c.l.b16 %v796
  %v813 = vunpack.c.h.b16 %v793
  %v814 = vunpack.c.h.b16 %v794
  %v815 = vunpack.c.h.b16 %v795
  %v816 = vunpack.c.h.b16 %v796
  %v817 = vunpack.c.l.b16 %v797
  %v818 = vunpack.c.l.b16 %v798
  %v819 = vunpack.c.l.b16 %v799
  %v820 = vunpack.c.l.b16 %v800
  %v821 = vpack.c.b16 %v810, %v809
  %v822 = vpack.c.b16 %v812, %v811
  %v823 = vpack.c.b16 %v814, %v813
  %v824 = vpack.c.b16 %v816, %v815
  %v825 = vpack.c.b16 %v818, %v817
  %v826 = vpack.c.b16 %v820, %v819
  %833 = vst [vmem:[#allocation2 + $0xc0] sm:$0xff] %v821
  %834 = vst [vmem:[#allocation2 + $0xc8] sm:$0xff] %v822
  %835 = vst [vmem:[#allocation2 + $0xd0] sm:$0xff] %v823
  %836 = vst [vmem:[#allocation2 + $0xd8] sm:$0xff] %v824
  %837 = vst [vmem:[#allocation2 + $0xe0] sm:$0xff] %v825
  %838 = vst [vmem:[#allocation2 + $0xe8] sm:$0xff] %v826
  %839 = vrot.lane.b32.xlu0 %v281, 127
  %v840 = vpop.permute.xlu0 %839
  %841 = vrot.lane.b32.xlu0 %v285, 127
  %v842 = vpop.permute.xlu0 %841
  %843 = vrot.lane.b32.xlu0 %v289, 127
  %v844 = vpop.permute.xlu0 %843
  %845 = vrot.lane.b32.xlu0 %v282, 127
  %v846 = vpop.permute.xlu0 %845
  %847 = vrot.lane.b32.xlu0 %v286, 127
  %v848 = vpop.permute.xlu0 %847
  %849 = vrot.lane.b32.xlu0 %v290, 127
  %v850 = vpop.permute.xlu0 %849
  %851 = vrot.lane.b32.xlu0 %v283, 127
  %v852 = vpop.permute.xlu0 %851
  %853 = vrot.lane.b32.xlu0 %v287, 127
  %v854 = vpop.permute.xlu0 %853
  %855 = vrot.lane.b32.xlu0 %v291, 127
  %v856 = vpop.permute.xlu0 %855
  %857 = vrot.lane.b32.xlu0 %v284, 127
  %v858 = vpop.permute.xlu0 %857
  %859 = vrot.lane.b32.xlu0 %v288, 127
  %v860 = vpop.permute.xlu0 %859
  %861 = vrot.lane.b32.xlu0 %v292, 127
  %v862 = vpop.permute.xlu0 %861
  %vm863 = vcmp.lt.s32.totalorder %v345, 127
  %v864 = vsel %vm863, %v852, %v858
  %v865 = vsel %vm863, %v854, %v860
  %v866 = vsel %vm863, %v856, %v862
  %v867 = vsel %vm863, %v846, %v852
  %v868 = vsel %vm863, %v848, %v854
  %v869 = vsel %vm863, %v850, %v856
  %v870 = vsel %vm863, %v840, %v846
  %v871 = vsel %vm863, %v842, %v848
  %v872 = vsel %vm863, %v844, %v850
  %v873 = vsel %vm863, %v858, %v840
  %v874 = vsel %vm863, %v860, %v842
  %v875 = vsel %vm863, %v862, %v844
  %s876 = scalar_lea.vmem %s1, 20
  %v877 = vld [vmem:[%s876] sm:$0xf]
  %v879 = vlaneseq
  %v880 = vshrl.u32 %v879, 7
  %v881 = vsub.s32 0, %v880
  %v882 = vrot.slane %v877, %v881
  %v883 = vlaneseq
  %v884 = vshrl.u32 %v883, 7
  %v885 = vsub.s32 1, %v884
  %v886 = vrot.slane %v877, %v885
  %v887 = vlaneseq
  %v888 = vshrl.u32 %v887, 7
  %v889 = vsub.s32 2, %v888
  %v890 = vrot.slane %v877, %v889
  %v891 = vlaneseq
  %v892 = vshrl.u32 %v891, 7
  %v893 = vsub.s32 3, %v892
  %v894 = vrot.slane %v877, %v893
  %v899 = vmul.f32 %v870, %v882
  %v900 = vmul.f32 %v867, %v886
  %v901 = vmul.f32 %v864, %v890
  %v902 = vmul.f32 %v873, %v894
  %v903 = vmul.f32 %v871, %v882
  %v904 = vmul.f32 %v868, %v886
  %v905 = vmul.f32 %v865, %v890
  %v906 = vmul.f32 %v874, %v894
  %v907 = vmul.f32 %v872, %v882
  %v908 = vmul.f32 %v869, %v886
  %v909 = vmul.f32 %v866, %v890
  %v910 = vmul.f32 %v875, %v894
  %v911 = vpack.c.bf16 %v903, %v899
  %v912 = vpack.c.bf16 %v904, %v900
  %v913 = vpack.c.bf16 %v905, %v901
  %v914 = vpack.c.bf16 %v906, %v902
  %v915 = vpack.c.bf16 %v907, %v907
  %v916 = vpack.c.bf16 %v908, %v908
  %v917 = vpack.c.bf16 %v909, %v909
  %v918 = vpack.c.bf16 %v910, %v910
  %v927 = vunpack.c.l.b16 %v911
  %v928 = vunpack.c.l.b16 %v912
  %v929 = vunpack.c.l.b16 %v913
  %v930 = vunpack.c.l.b16 %v914
  %v931 = vunpack.c.h.b16 %v911
  %v932 = vunpack.c.h.b16 %v912
  %v933 = vunpack.c.h.b16 %v913
  %v934 = vunpack.c.h.b16 %v914
  %v935 = vunpack.c.l.b16 %v915
  %v936 = vunpack.c.l.b16 %v916
  %v937 = vunpack.c.l.b16 %v917
  %v938 = vunpack.c.l.b16 %v918
  %v939 = vpack.c.b16 %v928, %v927
  %v940 = vpack.c.b16 %v930, %v929
  %v941 = vpack.c.b16 %v932, %v931
  %v942 = vpack.c.b16 %v934, %v933
  %v943 = vpack.c.b16 %v936, %v935
  %v944 = vpack.c.b16 %v938, %v937
  %951 = vst [vmem:[#allocation2 + $0xf0] sm:$0xff] %v939
  %952 = vst [vmem:[#allocation2 + $0xf8] sm:$0xff] %v940
  %953 = vst [vmem:[#allocation2 + $0x100] sm:$0xff] %v941
  %954 = vst [vmem:[#allocation2 + $0x108] sm:$0xff] %v942
  %955 = vst [vmem:[#allocation2 + $0x110] sm:$0xff] %v943
  %956 = vst [vmem:[#allocation2 + $0x118] sm:$0xff] %v944
  %957 = vrot.lane.b32.xlu0 %v281, 113
  %v958 = vpop.permute.xlu0 %957
  %959 = vrot.lane.b32.xlu0 %v285, 113
  %v960 = vpop.permute.xlu0 %959
  %961 = vrot.lane.b32.xlu0 %v289, 113
  %v962 = vpop.permute.xlu0 %961
  %963 = vrot.lane.b32.xlu0 %v282, 113
  %v964 = vpop.permute.xlu0 %963
  %965 = vrot.lane.b32.xlu0 %v286, 113
  %v966 = vpop.permute.xlu0 %965
  %967 = vrot.lane.b32.xlu0 %v290, 113
  %v968 = vpop.permute.xlu0 %967
  %969 = vrot.lane.b32.xlu0 %v283, 113
  %v970 = vpop.permute.xlu0 %969
  %971 = vrot.lane.b32.xlu0 %v287, 113
  %v972 = vpop.permute.xlu0 %971
  %973 = vrot.lane.b32.xlu0 %v291, 113
  %v974 = vpop.permute.xlu0 %973
  %975 = vrot.lane.b32.xlu0 %v284, 113
  %v976 = vpop.permute.xlu0 %975
  %977 = vrot.lane.b32.xlu0 %v288, 113
  %v978 = vpop.permute.xlu0 %977
  %979 = vrot.lane.b32.xlu0 %v292, 113
  %v980 = vpop.permute.xlu0 %979
  %vm981 = vcmp.lt.s32.totalorder %v345, 113
  %v982 = vsel %vm981, %v970, %v976
  %v983 = vsel %vm981, %v972, %v978
  %v984 = vsel %vm981, %v974, %v980
  %v985 = vsel %vm981, %v964, %v970
  %v986 = vsel %vm981, %v966, %v972
  %v987 = vsel %vm981, %v968, %v974
  %v988 = vsel %vm981, %v958, %v964
  %v989 = vsel %vm981, %v960, %v966
  %v990 = vsel %vm981, %v962, %v968
  %v991 = vsel %vm981, %v976, %v958
  %v992 = vsel %vm981, %v978, %v960
  %v993 = vsel %vm981, %v980, %v962
  %s994 = scalar_lea.vmem %s1, 24
  %v995 = vld [vmem:[%s994] sm:$0xf]
  %v997 = vlaneseq
  %v998 = vshrl.u32 %v997, 7
  %v999 = vsub.s32 0, %v998
  %v1000 = vrot.slane %v995, %v999
  %v1001 = vlaneseq
  %v1002 = vshrl.u32 %v1001, 7
  %v1003 = vsub.s32 1, %v1002
  %v1004 = vrot.slane %v995, %v1003
  %v1005 = vlaneseq
  %v1006 = vshrl.u32 %v1005, 7
  %v1007 = vsub.s32 2, %v1006
  %v1008 = vrot.slane %v995, %v1007
  %v1009 = vlaneseq
  %v1010 = vshrl.u32 %v1009, 7
  %v1011 = vsub.s32 3, %v1010
  %v1012 = vrot.slane %v995, %v1011
  %v1017 = vmul.f32 %v988, %v1000
  %v1018 = vmul.f32 %v985, %v1004
  %v1019 = vmul.f32 %v982, %v1008
  %v1020 = vmul.f32 %v991, %v1012
  %v1021 = vmul.f32 %v989, %v1000
  %v1022 = vmul.f32 %v986, %v1004
  %v1023 = vmul.f32 %v983, %v1008
  %v1024 = vmul.f32 %v992, %v1012
  %v1025 = vmul.f32 %v990, %v1000
  %v1026 = vmul.f32 %v987, %v1004
  %v1027 = vmul.f32 %v984, %v1008
  %v1028 = vmul.f32 %v993, %v1012
  %v1029 = vpack.c.bf16 %v1021, %v1017
  %v1030 = vpack.c.bf16 %v1022, %v1018
  %v1031 = vpack.c.bf16 %v1023, %v1019
  %v1032 = vpack.c.bf16 %v1024, %v1020
  %v1033 = vpack.c.bf16 %v1025, %v1025
  %v1034 = vpack.c.bf16 %v1026, %v1026
  %v1035 = vpack.c.bf16 %v1027, %v1027
  %v1036 = vpack.c.bf16 %v1028, %v1028
  %v1045 = vunpack.c.l.b16 %v1029
  %v1046 = vunpack.c.l.b16 %v1030
  %v1047 = vunpack.c.l.b16 %v1031
  %v1048 = vunpack.c.l.b16 %v1032
  %v1049 = vunpack.c.h.b16 %v1029
  %v1050 = vunpack.c.h.b16 %v1030
  %v1051 = vunpack.c.h.b16 %v1031
  %v1052 = vunpack.c.h.b16 %v1032
  %v1053 = vunpack.c.l.b16 %v1033
  %v1054 = vunpack.c.l.b16 %v1034
  %v1055 = vunpack.c.l.b16 %v1035
  %v1056 = vunpack.c.l.b16 %v1036
  %v1057 = vpack.c.b16 %v1046, %v1045
  %v1058 = vpack.c.b16 %v1048, %v1047
  %v1059 = vpack.c.b16 %v1050, %v1049
  %v1060 = vpack.c.b16 %v1052, %v1051
  %v1061 = vpack.c.b16 %v1054, %v1053
  %v1062 = vpack.c.b16 %v1056, %v1055
  %1069 = vst [vmem:[#allocation2 + $0x120] sm:$0xff] %v1057
  %1070 = vst [vmem:[#allocation2 + $0x128] sm:$0xff] %v1058
  %1071 = vst [vmem:[#allocation2 + $0x130] sm:$0xff] %v1059
  %1072 = vst [vmem:[#allocation2 + $0x138] sm:$0xff] %v1060
  %1073 = vst [vmem:[#allocation2 + $0x140] sm:$0xff] %v1061
  %1074 = vst [vmem:[#allocation2 + $0x148] sm:$0xff] %v1062
  %1075 = vrot.lane.b32.xlu0 %v281, 112
  %v1076 = vpop.permute.xlu0 %1075
  %1077 = vrot.lane.b32.xlu0 %v285, 112
  %v1078 = vpop.permute.xlu0 %1077
  %1079 = vrot.lane.b32.xlu0 %v289, 112
  %v1080 = vpop.permute.xlu0 %1079
  %1081 = vrot.lane.b32.xlu0 %v282, 112
  %v1082 = vpop.permute.xlu0 %1081
  %1083 = vrot.lane.b32.xlu0 %v286, 112
  %v1084 = vpop.permute.xlu0 %1083
  %1085 = vrot.lane.b32.xlu0 %v290, 112
  %v1086 = vpop.permute.xlu0 %1085
  %1087 = vrot.lane.b32.xlu0 %v283, 112
  %v1088 = vpop.permute.xlu0 %1087
  %1089 = vrot.lane.b32.xlu0 %v287, 112
  %v1090 = vpop.permute.xlu0 %1089
  %1091 = vrot.lane.b32.xlu0 %v291, 112
  %v1092 = vpop.permute.xlu0 %1091
  %1093 = vrot.lane.b32.xlu0 %v284, 112
  %v1094 = vpop.permute.xlu0 %1093
  %1095 = vrot.lane.b32.xlu0 %v288, 112
  %v1096 = vpop.permute.xlu0 %1095
  %1097 = vrot.lane.b32.xlu0 %v292, 112
  %v1098 = vpop.permute.xlu0 %1097
  %vm1099 = vcmp.lt.s32.totalorder %v345, 112
  %v1100 = vsel %vm1099, %v1088, %v1094
  %v1101 = vsel %vm1099, %v1090, %v1096
  %v1102 = vsel %vm1099, %v1092, %v1098
  %v1103 = vsel %vm1099, %v1082, %v1088
  %v1104 = vsel %vm1099, %v1084, %v1090
  %v1105 = vsel %vm1099, %v1086, %v1092
  %v1106 = vsel %vm1099, %v1076, %v1082
  %v1107 = vsel %vm1099, %v1078, %v1084
  %v1108 = vsel %vm1099, %v1080, %v1086
  %v1109 = vsel %vm1099, %v1094, %v1076
  %v1110 = vsel %vm1099, %v1096, %v1078
  %v1111 = vsel %vm1099, %v1098, %v1080
  %s1112 = scalar_lea.vmem %s1, 28
  %v1113 = vld [vmem:[%s1112] sm:$0xf]
  %v1115 = vlaneseq
  %v1116 = vshrl.u32 %v1115, 7
  %v1117 = vsub.s32 0, %v1116
  %v1118 = vrot.slane %v1113, %v1117
  %v1119 = vlaneseq
  %v1120 = vshrl.u32 %v1119, 7
  %v1121 = vsub.s32 1, %v1120
  %v1122 = vrot.slane %v1113, %v1121
  %v1123 = vlaneseq
  %v1124 = vshrl.u32 %v1123, 7
  %v1125 = vsub.s32 2, %v1124
  %v1126 = vrot.slane %v1113, %v1125
  %v1127 = vlaneseq
  %v1128 = vshrl.u32 %v1127, 7
  %v1129 = vsub.s32 3, %v1128
  %v1130 = vrot.slane %v1113, %v1129
  %v1135 = vmul.f32 %v1106, %v1118
  %v1136 = vmul.f32 %v1103, %v1122
  %v1137 = vmul.f32 %v1100, %v1126
  %v1138 = vmul.f32 %v1109, %v1130
  %v1139 = vmul.f32 %v1107, %v1118
  %v1140 = vmul.f32 %v1104, %v1122
  %v1141 = vmul.f32 %v1101, %v1126
  %v1142 = vmul.f32 %v1110, %v1130
  %v1143 = vmul.f32 %v1108, %v1118
  %v1144 = vmul.f32 %v1105, %v1122
  %v1145 = vmul.f32 %v1102, %v1126
  %v1146 = vmul.f32 %v1111, %v1130
  %v1147 = vpack.c.bf16 %v1139, %v1135
  %v1148 = vpack.c.bf16 %v1140, %v1136
  %v1149 = vpack.c.bf16 %v1141, %v1137
  %v1150 = vpack.c.bf16 %v1142, %v1138
  %v1151 = vpack.c.bf16 %v1143, %v1143
  %v1152 = vpack.c.bf16 %v1144, %v1144
  %v1153 = vpack.c.bf16 %v1145, %v1145
  %v1154 = vpack.c.bf16 %v1146, %v1146
  %v1163 = vunpack.c.l.b16 %v1147
  %v1164 = vunpack.c.l.b16 %v1148
  %v1165 = vunpack.c.l.b16 %v1149
  %v1166 = vunpack.c.l.b16 %v1150
  %v1167 = vunpack.c.h.b16 %v1147
  %v1168 = vunpack.c.h.b16 %v1148
  %v1169 = vunpack.c.h.b16 %v1149
  %v1170 = vunpack.c.h.b16 %v1150
  %v1171 = vunpack.c.l.b16 %v1151
  %v1172 = vunpack.c.l.b16 %v1152
  %v1173 = vunpack.c.l.b16 %v1153
  %v1174 = vunpack.c.l.b16 %v1154
  %v1175 = vpack.c.b16 %v1164, %v1163
  %v1176 = vpack.c.b16 %v1166, %v1165
  %v1177 = vpack.c.b16 %v1168, %v1167
  %v1178 = vpack.c.b16 %v1170, %v1169
  %v1179 = vpack.c.b16 %v1172, %v1171
  %v1180 = vpack.c.b16 %v1174, %v1173
  %1187 = vst [vmem:[#allocation2 + $0x150] sm:$0xff] %v1175
  %1188 = vst [vmem:[#allocation2 + $0x158] sm:$0xff] %v1176
  %1189 = vst [vmem:[#allocation2 + $0x160] sm:$0xff] %v1177
  %1190 = vst [vmem:[#allocation2 + $0x168] sm:$0xff] %v1178
  %1191 = vst [vmem:[#allocation2 + $0x170] sm:$0xff] %v1179
  %1192 = vst [vmem:[#allocation2 + $0x178] sm:$0xff] %v1180
  %1193 = vrot.lane.b32.xlu0 %v281, 111
  %v1194 = vpop.permute.xlu0 %1193
  %1195 = vrot.lane.b32.xlu0 %v285, 111
  %v1196 = vpop.permute.xlu0 %1195
  %1197 = vrot.lane.b32.xlu0 %v289, 111
  %v1198 = vpop.permute.xlu0 %1197
  %1199 = vrot.lane.b32.xlu0 %v282, 111
  %v1200 = vpop.permute.xlu0 %1199
  %1201 = vrot.lane.b32.xlu0 %v286, 111
  %v1202 = vpop.permute.xlu0 %1201
  %1203 = vrot.lane.b32.xlu0 %v290, 111
  %v1204 = vpop.permute.xlu0 %1203
  %1205 = vrot.lane.b32.xlu0 %v283, 111
  %v1206 = vpop.permute.xlu0 %1205
  %1207 = vrot.lane.b32.xlu0 %v287, 111
  %v1208 = vpop.permute.xlu0 %1207
  %1209 = vrot.lane.b32.xlu0 %v291, 111
  %v1210 = vpop.permute.xlu0 %1209
  %1211 = vrot.lane.b32.xlu0 %v284, 111
  %v1212 = vpop.permute.xlu0 %1211
  %1213 = vrot.lane.b32.xlu0 %v288, 111
  %v1214 = vpop.permute.xlu0 %1213
  %1215 = vrot.lane.b32.xlu0 %v292, 111
  %v1216 = vpop.permute.xlu0 %1215
  %vm1217 = vcmp.lt.s32.totalorder %v345, 111
  %v1218 = vsel %vm1217, %v1206, %v1212
  %v1219 = vsel %vm1217, %v1208, %v1214
  %v1220 = vsel %vm1217, %v1210, %v1216
  %v1221 = vsel %vm1217, %v1200, %v1206
  %v1222 = vsel %vm1217, %v1202, %v1208
  %v1223 = vsel %vm1217, %v1204, %v1210
  %v1224 = vsel %vm1217, %v1194, %v1200
  %v1225 = vsel %vm1217, %v1196, %v1202
  %v1226 = vsel %vm1217, %v1198, %v1204
  %v1227 = vsel %vm1217, %v1212, %v1194
  %v1228 = vsel %vm1217, %v1214, %v1196
  %v1229 = vsel %vm1217, %v1216, %v1198
  %s1230 = scalar_lea.vmem %s1, 32
  %v1231 = vld [vmem:[%s1230] sm:$0xf]
  %v1233 = vlaneseq
  %v1234 = vshrl.u32 %v1233, 7
  %v1235 = vsub.s32 0, %v1234
  %v1236 = vrot.slane %v1231, %v1235
  %v1237 = vlaneseq
  %v1238 = vshrl.u32 %v1237, 7
  %v1239 = vsub.s32 1, %v1238
  %v1240 = vrot.slane %v1231, %v1239
  %v1241 = vlaneseq
  %v1242 = vshrl.u32 %v1241, 7
  %v1243 = vsub.s32 2, %v1242
  %v1244 = vrot.slane %v1231, %v1243
  %v1245 = vlaneseq
  %v1246 = vshrl.u32 %v1245, 7
  %v1247 = vsub.s32 3, %v1246
  %v1248 = vrot.slane %v1231, %v1247
  %v1253 = vmul.f32 %v1224, %v1236
  %v1254 = vmul.f32 %v1221, %v1240
  %v1255 = vmul.f32 %v1218, %v1244
  %v1256 = vmul.f32 %v1227, %v1248
  %v1257 = vmul.f32 %v1225, %v1236
  %v1258 = vmul.f32 %v1222, %v1240
  %v1259 = vmul.f32 %v1219, %v1244
  %v1260 = vmul.f32 %v1228, %v1248
  %v1261 = vmul.f32 %v1226, %v1236
  %v1262 = vmul.f32 %v1223, %v1240
  %v1263 = vmul.f32 %v1220, %v1244
  %v1264 = vmul.f32 %v1229, %v1248
  %v1265 = vpack.c.bf16 %v1257, %v1253
  %v1266 = vpack.c.bf16 %v1258, %v1254
  %v1267 = vpack.c.bf16 %v1259, %v1255
  %v1268 = vpack.c.bf16 %v1260, %v1256
  %v1269 = vpack.c.bf16 %v1261, %v1261
  %v1270 = vpack.c.bf16 %v1262, %v1262
  %v1271 = vpack.c.bf16 %v1263, %v1263
  %v1272 = vpack.c.bf16 %v1264, %v1264
  %v1281 = vunpack.c.l.b16 %v1265
  %v1282 = vunpack.c.l.b16 %v1266
  %v1283 = vunpack.c.l.b16 %v1267
  %v1284 = vunpack.c.l.b16 %v1268
  %v1285 = vunpack.c.h.b16 %v1265
  %v1286 = vunpack.c.h.b16 %v1266
  %v1287 = vunpack.c.h.b16 %v1267
  %v1288 = vunpack.c.h.b16 %v1268
  %v1289 = vunpack.c.l.b16 %v1269
  %v1290 = vunpack.c.l.b16 %v1270
  %v1291 = vunpack.c.l.b16 %v1271
  %v1292 = vunpack.c.l.b16 %v1272
  %v1293 = vpack.c.b16 %v1282, %v1281
  %v1294 = vpack.c.b16 %v1284, %v1283
  %v1295 = vpack.c.b16 %v1286, %v1285
  %v1296 = vpack.c.b16 %v1288, %v1287
  %v1297 = vpack.c.b16 %v1290, %v1289
  %v1298 = vpack.c.b16 %v1292, %v1291
  %1305 = vst [vmem:[#allocation2 + $0x180] sm:$0xff] %v1293
  %1306 = vst [vmem:[#allocation2 + $0x188] sm:$0xff] %v1294
  %1307 = vst [vmem:[#allocation2 + $0x190] sm:$0xff] %v1295
  %1308 = vst [vmem:[#allocation2 + $0x198] sm:$0xff] %v1296
  %1309 = vst [vmem:[#allocation2 + $0x1a0] sm:$0xff] %v1297
  %1310 = vst [vmem:[#allocation2 + $0x1a8] sm:$0xff] %v1298
  %v1311 = vld [vmem:[#allocation2] sm:$0xff]
  %v1312 = vld [vmem:[#allocation2 + $0x8] sm:$0xff]
  %v1313 = vld [vmem:[#allocation2 + $0x10] sm:$0xff]
  %v1314 = vld [vmem:[#allocation2 + $0x18] sm:$0xff]
  %v1315 = vld [vmem:[#allocation2 + $0x20] sm:$0xff]
  %v1316 = vld [vmem:[#allocation2 + $0x28] sm:$0xff]
  %v1317 = vld [vmem:[#allocation2 + $0x30] sm:$0xff]
  %v1318 = vld [vmem:[#allocation2 + $0x38] sm:$0xff]
  %v1319 = vld [vmem:[#allocation2 + $0x40] sm:$0xff]
  %v1320 = vld [vmem:[#allocation2 + $0x48] sm:$0xff]
  %v1321 = vld [vmem:[#allocation2 + $0x50] sm:$0xff]
  %v1322 = vld [vmem:[#allocation2 + $0x58] sm:$0xff]
  %v1323 = vld [vmem:[#allocation2 + $0x60] sm:$0xff]
  %v1324 = vld [vmem:[#allocation2 + $0x68] sm:$0xff]
  %v1325 = vld [vmem:[#allocation2 + $0x70] sm:$0xff]
  %v1326 = vld [vmem:[#allocation2 + $0x78] sm:$0xff]
  %v1327 = vld [vmem:[#allocation2 + $0x80] sm:$0xff]
  %v1328 = vld [vmem:[#allocation2 + $0x88] sm:$0xff]
  %v1329 = vld [vmem:[#allocation2 + $0x90] sm:$0xff]
  %v1330 = vld [vmem:[#allocation2 + $0x98] sm:$0xff]
  %v1331 = vld [vmem:[#allocation2 + $0xa0] sm:$0xff]
  %v1332 = vld [vmem:[#allocation2 + $0xa8] sm:$0xff]
  %v1333 = vld [vmem:[#allocation2 + $0xb0] sm:$0xff]
  %v1334 = vld [vmem:[#allocation2 + $0xb8] sm:$0xff]
  %v1335 = vld [vmem:[#allocation2 + $0xc0] sm:$0xff]
  %v1336 = vld [vmem:[#allocation2 + $0xc8] sm:$0xff]
  %v1337 = vld [vmem:[#allocation2 + $0xd0] sm:$0xff]
  %v1338 = vld [vmem:[#allocation2 + $0xd8] sm:$0xff]
  %v1339 = vld [vmem:[#allocation2 + $0xe0] sm:$0xff]
  %v1340 = vld [vmem:[#allocation2 + $0xe8] sm:$0xff]
  %v1341 = vld [vmem:[#allocation2 + $0xf0] sm:$0xff]
  %v1342 = vld [vmem:[#allocation2 + $0xf8] sm:$0xff]
  %v1343 = vld [vmem:[#allocation2 + $0x100] sm:$0xff]
  %v1344 = vld [vmem:[#allocation2 + $0x108] sm:$0xff]
  %v1345 = vld [vmem:[#allocation2 + $0x110] sm:$0xff]
  %v1346 = vld [vmem:[#allocation2 + $0x118] sm:$0xff]
  %v1347 = vld [vmem:[#allocation2 + $0x120] sm:$0xff]
  %v1348 = vld [vmem:[#allocation2 + $0x128] sm:$0xff]
  %v1349 = vld [vmem:[#allocation2 + $0x130] sm:$0xff]
  %v1350 = vld [vmem:[#allocation2 + $0x138] sm:$0xff]
  %v1351 = vld [vmem:[#allocation2 + $0x140] sm:$0xff]
  %v1352 = vld [vmem:[#allocation2 + $0x148] sm:$0xff]
  %v1353 = vld [vmem:[#allocation2 + $0x150] sm:$0xff]
  %v1354 = vld [vmem:[#allocation2 + $0x158] sm:$0xff]
  %v1355 = vld [vmem:[#allocation2 + $0x160] sm:$0xff]
  %v1356 = vld [vmem:[#allocation2 + $0x168] sm:$0xff]
  %v1357 = vld [vmem:[#allocation2 + $0x170] sm:$0xff]
  %v1358 = vld [vmem:[#allocation2 + $0x178] sm:$0xff]
  %v1359 = vld [vmem:[#allocation2 + $0x180] sm:$0xff]
  %v1360 = vld [vmem:[#allocation2 + $0x188] sm:$0xff]
  %v1361 = vld [vmem:[#allocation2 + $0x190] sm:$0xff]
  %v1362 = vld [vmem:[#allocation2 + $0x198] sm:$0xff]
  %v1363 = vld [vmem:[#allocation2 + $0x1a0] sm:$0xff]
  %v1364 = vld [vmem:[#allocation2 + $0x1a8] sm:$0xff]
  %1366 = vset.pattern.permute.xlu0 0
  %1367 = vperm.xlu0 %1366, %v71
  %v1368 = vpop.permute.xlu0 %1367
  %1371 = vset.pattern.permute.xlu0 0
  %1372 = vperm.xlu0 %1371, %v72
  %v1373 = vpop.permute.xlu0 %1372
  %1376 = vset.pattern.permute.xlu0 0
  %1377 = vperm.xlu0 %1376, %v73
  %v1378 = vpop.permute.xlu0 %1377
  %v1383 = vunpack.c.l.b16 %v68
  %v1384 = vunpack.c.h.b16 %v68
  %v1385 = vunpack.c.l.b16 %v69
  %v1386 = vunpack.c.h.b16 %v69
  %v1387 = vunpack.c.l.b16 %v70
  %v1388 = vunpack.c.h.b16 %v70
  %v1389 = vpack.c.b16 %v1385, %v1383
  %v1390 = vpack.c.b16 %v1386, %v1384
  %v1391 = vpack.c.b16 %v1387, %v1387
  %v1392 = vpack.c.b16 %v1388, %v1388
  %v1449 = vunpack.c.l.b16 %v1311
  %v1450 = vunpack.c.h.b16 %v1311
  %v1451 = vunpack.c.l.b16 %v1312
  %v1452 = vunpack.c.h.b16 %v1312
  %v1453 = vunpack.c.l.b16 %v1313
  %v1454 = vunpack.c.h.b16 %v1313
  %v1455 = vunpack.c.l.b16 %v1314
  %v1456 = vunpack.c.h.b16 %v1314
  %v1457 = vunpack.c.l.b16 %v1315
  %v1458 = vunpack.c.h.b16 %v1315
  %v1459 = vunpack.c.l.b16 %v1316
  %v1460 = vunpack.c.h.b16 %v1316
  %v1461 = vunpack.c.l.b16 %v1317
  %v1462 = vunpack.c.h.b16 %v1317
  %v1463 = vunpack.c.l.b16 %v1318
  %v1464 = vunpack.c.h.b16 %v1318
  %v1465 = vunpack.c.l.b16 %v1319
  %v1466 = vunpack.c.h.b16 %v1319
  %v1467 = vunpack.c.l.b16 %v1320
  %v1468 = vunpack.c.h.b16 %v1320
  %v1469 = vunpack.c.l.b16 %v1321
  %v1470 = vunpack.c.h.b16 %v1321
  %v1471 = vunpack.c.l.b16 %v1322
  %v1472 = vunpack.c.h.b16 %v1322
  %v1473 = vunpack.c.l.b16 %v1323
  %v1474 = vunpack.c.h.b16 %v1323
  %v1475 = vunpack.c.l.b16 %v1324
  %v1476 = vunpack.c.h.b16 %v1324
  %v1477 = vunpack.c.l.b16 %v1325
  %v1478 = vunpack.c.h.b16 %v1325
  %v1479 = vunpack.c.l.b16 %v1326
  %v1480 = vunpack.c.h.b16 %v1326
  %v1481 = vunpack.c.l.b16 %v1327
  %v1482 = vunpack.c.h.b16 %v1327
  %v1483 = vunpack.c.l.b16 %v1328
  %v1484 = vunpack.c.h.b16 %v1328
  %v1485 = vunpack.c.l.b16 %v1329
  %v1486 = vunpack.c.h.b16 %v1329
  %v1487 = vunpack.c.l.b16 %v1330
  %v1488 = vunpack.c.h.b16 %v1330
  %v1489 = vunpack.c.l.b16 %v1331
  %v1490 = vunpack.c.h.b16 %v1331
  %v1491 = vunpack.c.l.b16 %v1332
  %v1492 = vunpack.c.h.b16 %v1332
  %v1493 = vunpack.c.l.b16 %v1333
  %v1494 = vunpack.c.h.b16 %v1333
  %v1495 = vunpack.c.l.b16 %v1334
  %v1496 = vunpack.c.h.b16 %v1334
  %v1497 = vunpack.c.l.b16 %v1335
  %v1498 = vunpack.c.h.b16 %v1335
  %v1499 = vunpack.c.l.b16 %v1336
  %v1500 = vunpack.c.h.b16 %v1336
  %v1501 = vunpack.c.l.b16 %v1337
  %v1502 = vunpack.c.h.b16 %v1337
  %v1503 = vunpack.c.l.b16 %v1338
  %v1504 = vunpack.c.h.b16 %v1338
  %v1505 = vunpack.c.l.b16 %v1339
  %v1506 = vunpack.c.h.b16 %v1339
  %v1507 = vunpack.c.l.b16 %v1340
  %v1508 = vunpack.c.h.b16 %v1340
  %v1509 = vunpack.c.l.b16 %v1341
  %v1510 = vunpack.c.h.b16 %v1341
  %v1511 = vunpack.c.l.b16 %v1342
  %v1512 = vunpack.c.h.b16 %v1342
  %v1513 = vunpack.c.l.b16 %v1343
  %v1514 = vunpack.c.h.b16 %v1343
  %v1515 = vunpack.c.l.b16 %v1344
  %v1516 = vunpack.c.h.b16 %v1344
  %v1517 = vunpack.c.l.b16 %v1345
  %v1518 = vunpack.c.h.b16 %v1345
  %v1519 = vunpack.c.l.b16 %v1346
  %v1520 = vunpack.c.h.b16 %v1346
  %v1521 = vunpack.c.l.b16 %v1347
  %v1522 = vunpack.c.h.b16 %v1347
  %v1523 = vunpack.c.l.b16 %v1348
  %v1524 = vunpack.c.h.b16 %v1348
  %v1525 = vunpack.c.l.b16 %v1349
  %v1526 = vunpack.c.h.b16 %v1349
  %v1527 = vunpack.c.l.b16 %v1350
  %v1528 = vunpack.c.h.b16 %v1350
  %v1529 = vunpack.c.l.b16 %v1351
  %v1530 = vunpack.c.h.b16 %v1351
  %v1531 = vunpack.c.l.b16 %v1352
  %v1532 = vunpack.c.h.b16 %v1352
  %v1533 = vunpack.c.l.b16 %v1353
  %v1534 = vunpack.c.h.b16 %v1353
  %v1535 = vunpack.c.l.b16 %v1354
  %v1536 = vunpack.c.h.b16 %v1354
  %v1537 = vunpack.c.l.b16 %v1355
  %v1538 = vunpack.c.h.b16 %v1355
  %v1539 = vunpack.c.l.b16 %v1356
  %v1540 = vunpack.c.h.b16 %v1356
  %v1541 = vunpack.c.l.b16 %v1357
  %v1542 = vunpack.c.h.b16 %v1357
  %v1543 = vunpack.c.l.b16 %v1358
  %v1544 = vunpack.c.h.b16 %v1358
  %v1545 = vunpack.c.l.b16 %v1359
  %v1546 = vunpack.c.h.b16 %v1359
  %v1547 = vunpack.c.l.b16 %v1360
  %v1548 = vunpack.c.h.b16 %v1360
  %v1549 = vunpack.c.l.b16 %v1361
  %v1550 = vunpack.c.h.b16 %v1361
  %v1551 = vunpack.c.l.b16 %v1362
  %v1552 = vunpack.c.h.b16 %v1362
  %v1553 = vunpack.c.l.b16 %v1363
  %v1554 = vunpack.c.h.b16 %v1363
  %v1555 = vunpack.c.l.b16 %v1364
  %v1556 = vunpack.c.h.b16 %v1364
  %v1557 = vpack.c.b16 %v1453, %v1449
  %v1558 = vpack.c.b16 %v1454, %v1450
  %v1559 = vpack.c.b16 %v1455, %v1451
  %v1560 = vpack.c.b16 %v1456, %v1452
  %v1561 = vpack.c.b16 %v1461, %v1457
  %v1562 = vpack.c.b16 %v1462, %v1458
  %v1563 = vpack.c.b16 %v1463, %v1459
  %v1564 = vpack.c.b16 %v1464, %v1460
  %v1565 = vpack.c.b16 %v1469, %v1465
  %v1566 = vpack.c.b16 %v1470, %v1466
  %v1567 = vpack.c.b16 %v1471, %v1467
  %v1568 = vpack.c.b16 %v1472, %v1468
  %v1569 = vpack.c.b16 %v1477, %v1473
  %v1570 = vpack.c.b16 %v1478, %v1474
  %v1571 = vpack.c.b16 %v1479, %v1475
  %v1572 = vpack.c.b16 %v1480, %v1476
  %v1573 = vpack.c.b16 %v1485, %v1481
  %v1574 = vpack.c.b16 %v1486, %v1482
  %v1575 = vpack.c.b16 %v1487, %v1483
  %v1576 = vpack.c.b16 %v1488, %v1484
  %v1577 = vpack.c.b16 %v1493, %v1489
  %v1578 = vpack.c.b16 %v1494, %v1490
  %v1579 = vpack.c.b16 %v1495, %v1491
  %v1580 = vpack.c.b16 %v1496, %v1492
  %v1581 = vpack.c.b16 %v1501, %v1497
  %v1582 = vpack.c.b16 %v1502, %v1498
  %v1583 = vpack.c.b16 %v1503, %v1499
  %v1584 = vpack.c.b16 %v1504, %v1500
  %v1585 = vpack.c.b16 %v1509, %v1505
  %v1586 = vpack.c.b16 %v1510, %v1506
  %v1587 = vpack.c.b16 %v1511, %v1507
  %v1588 = vpack.c.b16 %v1512, %v1508
  %v1589 = vpack.c.b16 %v1517, %v1513
  %v1590 = vpack.c.b16 %v1518, %v1514
  %v1591 = vpack.c.b16 %v1519, %v1515
  %v1592 = vpack.c.b16 %v1520, %v1516
  %v1593 = vpack.c.b16 %v1525, %v1521
  %v1594 = vpack.c.b16 %v1526, %v1522
  %v1595 = vpack.c.b16 %v1527, %v1523
  %v1596 = vpack.c.b16 %v1528, %v1524
  %v1597 = vpack.c.b16 %v1533, %v1529
  %v1598 = vpack.c.b16 %v1534, %v1530
  %v1599 = vpack.c.b16 %v1535, %v1531
  %v1600 = vpack.c.b16 %v1536, %v1532
  %v1601 = vpack.c.b16 %v1541, %v1537
  %v1602 = vpack.c.b16 %v1542, %v1538
  %v1603 = vpack.c.b16 %v1543, %v1539
  %v1604 = vpack.c.b16 %v1544, %v1540
  %v1605 = vpack.c.b16 %v1549, %v1545
  %v1606 = vpack.c.b16 %v1550, %v1546
  %v1607 = vpack.c.b16 %v1551, %v1547
  %v1608 = vpack.c.b16 %v1552, %v1548
  %v1609 = vpack.c.b16 %v1553, %v1553
  %v1610 = vpack.c.b16 %v1554, %v1554
  %v1611 = vpack.c.b16 %v1555, %v1555
  %v1612 = vpack.c.b16 %v1556, %v1556
  %vm1665 = vcmask 719872
  %v1667 = vsel %vm1665, %v1390, 0
  %v1670 = vsel %vm1665, %v1392, 0
  %vm1672 = vcmask 1043456
  %v1674 = vsel %vm1672, %v1609, 0
  %v1677 = vsel %vm1672, %v1610, 0
  %v1680 = vsel %vm1672, %v1611, 0
  %v1683 = vsel %vm1672, %v1612, 0
  %1685 = vmatprep.subr.bf16.mxu0 %v1558
  %1686 = vmatpush1.bf16.msra.mxu0 %v1557
  %1687 = vmatprep.subr.bf16.mxu0 %v1562
  %1688 = vmatpush1.bf16.msra.mxu0 %v1561
  %1689 = vmatprep.subr.bf16.mxu0 %v1566
  %1690 = vmatpush1.bf16.msra.mxu0 %v1565
  %1691 = vmatprep.subr.bf16.mxu0 %v1570
  %1692 = vmatpush1.bf16.msra.mxu0 %v1569
  %1693 = vmatprep.subr.bf16.mxu0 %v1574
  %1694 = vmatpush1.bf16.msra.mxu0 %v1573
  %1695 = vmatprep.subr.bf16.mxu0 %v1578
  %1696 = vmatpush1.bf16.msra.mxu0 %v1577
  %1697 = vmatprep.subr.bf16.mxu0 %v1582
  %1698 = vmatpush1.bf16.msra.mxu0 %v1581
  %1699 = vmatprep.subr.bf16.mxu0 %v1586
  %1700 = vmatpush1.bf16.msra.mxu0 %v1585
  %1701 = vmatprep.subr.bf16.mxu0 %v1590
  %1702 = vmatpush1.bf16.msra.mxu0 %v1589
  %1703 = vmatprep.subr.bf16.mxu0 %v1594
  %1704 = vmatpush1.bf16.msra.mxu0 %v1593
  %1705 = vmatprep.subr.bf16.mxu0 %v1598
  %1706 = vmatpush1.bf16.msra.mxu0 %v1597
  %1707 = vmatprep.subr.bf16.mxu0 %v1602
  %1708 = vmatpush1.bf16.msra.mxu0 %v1601
  %1709 = vmatprep.subr.bf16.mxu0 %v1606
  %1710 = vmatpush1.bf16.msra.mxu0 %v1605
  %1711 = vmatprep.subr.bf16.mxu0 %v1677
  %1712 = vmatpush1.bf16.msra.mxu0 %v1674
  %1713 = vmatprep.subr.bf16.mxu0 0
  %1714 = vmatpush1.bf16.msra.mxu0 0
  %1715 = vmatprep.subr.bf16.mxu0 0
  %1716 = vmatpush1.bf16.msra.mxu0 0
  %1717 = vmatprep.mubr.bf16.mxu0 %v1667
  %1718 = vmatmul.mubr.bf16.gmra.mrb[0].mxu0 %v1389
  %v1719 = vpop.f32.mrb[0].mxu0
  %v1720 = vadd.f32 %v1368, %v1719
  %v1721 = vpop.f32.mrb[0].mxu0
  %v1722 = vadd.f32 %v1368, %v1721
  %v1723 = vpop.f32.mrb[0].mxu0
  %v1724 = vadd.f32 %v1373, %v1723
  %v1725 = vpop.f32.mrb[0].mxu0
  %v1726 = vadd.f32 %v1373, %v1725
  %1727 = vmatprep.mubr.bf16.mxu0 %v1670
  %1728 = vmatmul.mubr.bf16.gmra.mrb[0].mxu0 %v1391
  %v1729 = vpop.f32.mrb[0].mxu0
  %v1730 = vadd.f32 %v1378, %v1729
  %v1731 = vpop.f32.mrb[0].mxu0
  %v1732 = vadd.f32 %v1378, %v1731
  %v1733 = vpop.f32.mrb[0].mxu0
  %v1734 = vpop.f32.mrb[0].mxu0
  %1735 = vdwg.mxu0
  %1736 = vmatprep.subr.bf16.mxu0 %v1560
  %1737 = vmatpush1.bf16.msra.mxu0 %v1559
  %1738 = vmatprep.subr.bf16.mxu0 %v1564
  %1739 = vmatpush1.bf16.msra.mxu0 %v1563
  %1740 = vmatprep.subr.bf16.mxu0 %v1568
  %1741 = vmatpush1.bf16.msra.mxu0 %v1567
  %1742 = vmatprep.subr.bf16.mxu0 %v1572
  %1743 = vmatpush1.bf16.msra.mxu0 %v1571
  %1744 = vmatprep.subr.bf16.mxu0 %v1576
  %1745 = vmatpush1.bf16.msra.mxu0 %v1575
  %1746 = vmatprep.subr.bf16.mxu0 %v1580
  %1747 = vmatpush1.bf16.msra.mxu0 %v1579
  %1748 = vmatprep.subr.bf16.mxu0 %v1584
  %1749 = vmatpush1.bf16.msra.mxu0 %v1583
  %1750 = vmatprep.subr.bf16.mxu0 %v1588
  %1751 = vmatpush1.bf16.msra.mxu0 %v1587
  %1752 = vmatprep.subr.bf16.mxu0 %v1592
  %1753 = vmatpush1.bf16.msra.mxu0 %v1591
  %1754 = vmatprep.subr.bf16.mxu0 %v1596
  %1755 = vmatpush1.bf16.msra.mxu0 %v1595
  %1756 = vmatprep.subr.bf16.mxu0 %v1600
  %1757 = vmatpush1.bf16.msra.mxu0 %v1599
  %1758 = vmatprep.subr.bf16.mxu0 %v1604
  %1759 = vmatpush1.bf16.msra.mxu0 %v1603
  %1760 = vmatprep.subr.bf16.mxu0 %v1608
  %1761 = vmatpush1.bf16.msra.mxu0 %v1607
  %1762 = vmatprep.subr.bf16.mxu0 %v1683
  %1763 = vmatpush1.bf16.msra.mxu0 %v1680
  %1764 = vmatprep.subr.bf16.mxu0 0
  %1765 = vmatpush1.bf16.msra.mxu0 0
  %1766 = vmatprep.subr.bf16.mxu0 0
  %1767 = vmatpush1.bf16.msra.mxu0 0
  %1768 = vmatprep.mubr.bf16.mxu0 %v1667
  %1769 = vmatmul.mubr.bf16.gmra.mrb[0].mxu0 %v1389
  %v1770 = vpop.f32.mrb[0].mxu0
  %v1771 = vadd.f32 %v1368, %v1770
  %v1772 = vpop.f32.mrb[0].mxu0
  %v1773 = vadd.f32 %v1368, %v1772
  %v1774 = vpop.f32.mrb[0].mxu0
  %v1775 = vadd.f32 %v1373, %v1774
  %v1776 = vpop.f32.mrb[0].mxu0
  %v1777 = vadd.f32 %v1373, %v1776
  %1778 = vmatprep.mubr.bf16.mxu0 %v1670
  %1779 = vmatmul.mubr.bf16.gmra.mrb[0].mxu0 %v1391
  %v1780 = vpop.f32.mrb[0].mxu0
  %v1781 = vadd.f32 %v1378, %v1780
  %v1782 = vpop.f32.mrb[0].mxu0
  %v1783 = vadd.f32 %v1378, %v1782
  %v1784 = vpop.f32.mrb[0].mxu0
  %v1785 = vpop.f32.mrb[0].mxu0
  %1786 = vdwg.mxu0
  %v1787 = vmax.f32 %v1720, 0.0
  %v1788 = vmax.f32 %v1722, 0.0
  %v1789 = vmax.f32 %v1771, 0.0
  %v1790 = vmax.f32 %v1773, 0.0
  %v1791 = vmax.f32 %v1724, 0.0
  %v1792 = vmax.f32 %v1726, 0.0
  %v1793 = vmax.f32 %v1775, 0.0
  %v1794 = vmax.f32 %v1777, 0.0
  %v1795 = vmax.f32 %v1730, 0.0
  %v1796 = vmax.f32 %v1732, 0.0
  %v1797 = vmax.f32 %v1781, 0.0
  %v1798 = vmax.f32 %v1783, 0.0
  %v1799 = vpack.c.bf16 %v1791, %v1787
  %v1800 = vpack.c.bf16 %v1792, %v1788
  %v1801 = vpack.c.bf16 %v1793, %v1789
  %v1802 = vpack.c.bf16 %v1794, %v1790
  %v1803 = vpack.c.bf16 %v1795, %v1795
  %v1804 = vpack.c.bf16 %v1796, %v1796
  %v1805 = vpack.c.bf16 %v1797, %v1797
  %v1806 = vpack.c.bf16 %v1798, %v1798
  %1808 = vset.pattern.permute.xlu0 0
  %1809 = vperm.xlu0 %1808, %v77
  %v1810 = vpop.permute.xlu0 %1809
  %1813 = vset.pattern.permute.xlu0 0
  %1814 = vperm.xlu0 %1813, %v78
  %v1815 = vpop.permute.xlu0 %1814
  %1818 = vset.pattern.permute.xlu0 0
  %1819 = vperm.xlu0 %1818, %v79
  %v1820 = vpop.permute.xlu0 %1819
  %v1825 = vunpack.c.l.b16 %v74
  %v1826 = vunpack.c.l.b16 %v75
  %v1827 = vunpack.c.l.b16 %v76
  %v1828 = vpack.c.b16 %v1826, %v1825
  %v1829 = vpack.c.b16 %v1827, %v1827
  %vm1830 = vcmask 195584
  %v1832 = vsel %vm1830, %v1828, 0
  %v1835 = vsel %vm1830, %v1829, 0
  %v1838 = vsel %vm1672, %v1803, 0
  %v1841 = vsel %vm1672, %v1804, 0
  %v1844 = vsel %vm1672, %v1805, 0
  %v1847 = vsel %vm1672, %v1806, 0
  %1849 = vmatprep.subr.bf16.mxu0 %v1800
  %1850 = vmatpush1.bf16.msra.mxu0 %v1799
  %1851 = vmatprep.subr.bf16.mxu0 %v1841
  %1852 = vmatpush1.bf16.msra.mxu0 %v1838
  %1853 = vmatprep.subr.bf16.mxu0 0
  %1854 = vmatpush1.bf16.msra.mxu0 0
  %1855 = vmatprep.subr.bf16.mxu0 0
  %1856 = vmatpush1.bf16.msra.mxu0 0
  %1857 = vmatprep.subr.bf16.mxu0 0
  %1858 = vmatpush1.bf16.msra.mxu0 0
  %1859 = vmatprep.subr.bf16.mxu0 0
  %1860 = vmatpush1.bf16.msra.mxu0 0
  %1861 = vmatprep.subr.bf16.mxu0 0
  %1862 = vmatpush1.bf16.msra.mxu0 0
  %1863 = vmatprep.subr.bf16.mxu0 0
  %1864 = vmatpush1.bf16.msra.mxu0 0
  %1865 = vmatprep.subr.bf16.mxu0 0
  %1866 = vmatpush1.bf16.msra.mxu0 0
  %1867 = vmatprep.subr.bf16.mxu0 0
  %1868 = vmatpush1.bf16.msra.mxu0 0
  %1869 = vmatprep.subr.bf16.mxu0 0
  %1870 = vmatpush1.bf16.msra.mxu0 0
  %1871 = vmatprep.subr.bf16.mxu0 0
  %1872 = vmatpush1.bf16.msra.mxu0 0
  %1873 = vmatprep.subr.bf16.mxu0 0
  %1874 = vmatpush1.bf16.msra.mxu0 0
  %1875 = vmatprep.subr.bf16.mxu0 0
  %1876 = vmatpush1.bf16.msra.mxu0 0
  %1877 = vmatprep.subr.bf16.mxu0 0
  %1878 = vmatpush1.bf16.msra.mxu0 0
  %1879 = vmatprep.subr.bf16.mxu0 0
  %1880 = vmatpush1.bf16.msra.mxu0 0
  %1881 = vmatprep.mubr.bf16.mxu0 0
  %1882 = vmatmul.mubr.bf16.gmra.mrb[0].mxu0 %v1832
  %v1883 = vpop.f32.mrb[0].mxu0
  %v1884 = vadd.f32 %v1810, %v1883
  %v1885 = vpop.f32.mrb[0].mxu0
  %v1886 = vadd.f32 %v1810, %v1885
  %v1887 = vpop.f32.mrb[0].mxu0
  %v1888 = vadd.f32 %v1815, %v1887
  %v1889 = vpop.f32.mrb[0].mxu0
  %v1890 = vadd.f32 %v1815, %v1889
  %1891 = vmatprep.mubr.bf16.mxu0 0
  %1892 = vmatmul.mubr.bf16.gmra.mrb[0].mxu0 %v1835
  %v1893 = vpop.f32.mrb[0].mxu0
  %v1894 = vadd.f32 %v1820, %v1893
  %v1895 = vpop.f32.mrb[0].mxu0
  %v1896 = vadd.f32 %v1820, %v1895
  %v1897 = vpop.f32.mrb[0].mxu0
  %v1898 = vpop.f32.mrb[0].mxu0
  %1899 = vdwg.mxu0
  %1900 = vmatprep.subr.bf16.mxu0 %v1802
  %1901 = vmatpush1.bf16.msra.mxu0 %v1801
  %1902 = vmatprep.subr.bf16.mxu0 %v1847
  %1903 = vmatpush1.bf16.msra.mxu0 %v1844
  %1904 = vmatprep.subr.bf16.mxu0 0
  %1905 = vmatpush1.bf16.msra.mxu0 0
  %1906 = vmatprep.subr.bf16.mxu0 0
  %1907 = vmatpush1.bf16.msra.mxu0 0
  %1908 = vmatprep.subr.bf16.mxu0 0
  %1909 = vmatpush1.bf16.msra.mxu0 0
  %1910 = vmatprep.subr.bf16.mxu0 0
  %1911 = vmatpush1.bf16.msra.mxu0 0
  %1912 = vmatprep.subr.bf16.mxu0 0
  %1913 = vmatpush1.bf16.msra.mxu0 0
  %1914 = vmatprep.subr.bf16.mxu0 0
  %1915 = vmatpush1.bf16.msra.mxu0 0
  %1916 = vmatprep.subr.bf16.mxu0 0
  %1917 = vmatpush1.bf16.msra.mxu0 0
  %1918 = vmatprep.subr.bf16.mxu0 0
  %1919 = vmatpush1.bf16.msra.mxu0 0
  %1920 = vmatprep.subr.bf16.mxu0 0
  %1921 = vmatpush1.bf16.msra.mxu0 0
  %1922 = vmatprep.subr.bf16.mxu0 0
  %1923 = vmatpush1.bf16.msra.mxu0 0
  %1924 = vmatprep.subr.bf16.mxu0 0
  %1925 = vmatpush1.bf16.msra.mxu0 0
  %1926 = vmatprep.subr.bf16.mxu0 0
  %1927 = vmatpush1.bf16.msra.mxu0 0
  %1928 = vmatprep.subr.bf16.mxu0 0
  %1929 = vmatpush1.bf16.msra.mxu0 0
  %1930 = vmatprep.subr.bf16.mxu0 0
  %1931 = vmatpush1.bf16.msra.mxu0 0
  %1932 = vmatprep.mubr.bf16.mxu0 0
  %1933 = vmatmul.mubr.bf16.gmra.mrb[0].mxu0 %v1832
  %v1934 = vpop.f32.mrb[0].mxu0
  %v1935 = vadd.f32 %v1810, %v1934
  %v1936 = vpop.f32.mrb[0].mxu0
  %v1937 = vadd.f32 %v1810, %v1936
  %v1938 = vpop.f32.mrb[0].mxu0
  %v1939 = vadd.f32 %v1815, %v1938
  %v1940 = vpop.f32.mrb[0].mxu0
  %v1941 = vadd.f32 %v1815, %v1940
  %1942 = vmatprep.mubr.bf16.mxu0 0
  %1943 = vmatmul.mubr.bf16.gmra.mrb[0].mxu0 %v1835
  %v1944 = vpop.f32.mrb[0].mxu0
  %v1945 = vadd.f32 %v1820, %v1944
  %v1946 = vpop.f32.mrb[0].mxu0
  %v1947 = vadd.f32 %v1820, %v1946
  %v1948 = vpop.f32.mrb[0].mxu0
  %v1949 = vpop.f32.mrb[0].mxu0
  %1950 = vdwg.mxu0
  %v1951 = vadd.f32 %v1884, %v308
  %v1952 = vadd.f32 %v1886, %v309
  %v1953 = vadd.f32 %v1935, %v310
  %v1954 = vadd.f32 %v1937, %v311
  %v1955 = vadd.f32 %v1888, %v312
  %v1956 = vadd.f32 %v1890, %v313
  %v1957 = vadd.f32 %v1939, %v314
  %v1958 = vadd.f32 %v1941, %v315
  %v1959 = vadd.f32 %v1894, %v316
  %v1960 = vadd.f32 %v1896, %v317
  %v1961 = vadd.f32 %v1945, %v318
  %v1962 = vadd.f32 %v1947, %v319
  %v1963 = vmax.f32 %v1951, 0.0
  %v1964 = vmax.f32 %v1952, 0.0
  %v1965 = vmax.f32 %v1953, 0.0
  %v1966 = vmax.f32 %v1954, 0.0
  %v1967 = vmax.f32 %v1955, 0.0
  %v1968 = vmax.f32 %v1956, 0.0
  %v1969 = vmax.f32 %v1957, 0.0
  %v1970 = vmax.f32 %v1958, 0.0
  %v1971 = vmax.f32 %v1959, 0.0
  %v1972 = vmax.f32 %v1960, 0.0
  %v1973 = vmax.f32 %v1961, 0.0
  %v1974 = vmax.f32 %v1962, 0.0
  %v1975 = vld [vmem:[%s9] sm:$0xf]
  %v1976 = vld [vmem:[%s9 + $0x4] sm:$0xf]
  %v1977 = vld [vmem:[%s9 + $0x8] sm:$0xf]
  %v1978 = vld [vmem:[%s9 + $0xc] sm:$0xf]
  %v1979 = vld [vmem:[%s10] sm:$0xff]
  %v1980 = vld [vmem:[%s10 + $0x8] sm:$0xff]
  %v1981 = vld [vmem:[%s11] sm:$0xff]
  %v1982 = vld [vmem:[%s11 + $0x8] sm:$0xff]
  %v1983 = vld [vmem:[%s12] sm:$0xff]
  %v1984 = vld [vmem:[%s12 + $0x8] sm:$0xff]
  %v1985 = vld [vmem:[%s13] sm:$0xff]
  %v1986 = vld [vmem:[%s13 + $0x8] sm:$0xff]
  %v1987 = vld [vmem:[%s14] sm:$0xf]
  %v1988 = vld [vmem:[%s14 + $0x4] sm:$0xf]
  %v1989 = vld [vmem:[%s15] sm:$0xff]
  %v1990 = vld [vmem:[%s15 + $0x8] sm:$0xff]
  %v1991 = vpack.c.bf16 %v1967, %v1963
  %v1992 = vpack.c.bf16 %v1968, %v1964
  %v1993 = vpack.c.bf16 %v1969, %v1965
  %v1994 = vpack.c.bf16 %v1970, %v1966
  %v1995 = vpack.c.bf16 %v1971, %v1971
  %v1996 = vpack.c.bf16 %v1972, %v1972
  %v1997 = vpack.c.bf16 %v1973, %v1973
  %v1998 = vpack.c.bf16 %v1974, %v1974
  %v2003 = vunpack.c.l.b16 %v1975
  %v2004 = vunpack.c.l.b16 %v1976
  %v2005 = vunpack.c.l.b16 %v1977
  %v2006 = vunpack.c.l.b16 %v1978
  %v2007 = vpack.c.b16 %v2004, %v2003
  %v2008 = vpack.c.b16 %v2006, %v2005
  %v2010 = vsel %vm1830, %v2007, 0
  %v2013 = vsel %vm1830, %v2008, 0
  %v2016 = vsel %vm1672, %v1995, 0
  %v2019 = vsel %vm1672, %v1996, 0
  %v2022 = vsel %vm1672, %v1997, 0
  %v2025 = vsel %vm1672, %v1998, 0
  %2027 = vmatprep.subr.bf16.mxu0 %v1992
  %2028 = vmatpush1.bf16.msra.mxu0 %v1991
  %2029 = vmatprep.subr.bf16.mxu0 %v2019
  %2030 = vmatpush1.bf16.msra.mxu0 %v2016
  %2031 = vmatprep.subr.bf16.mxu0 0
  %2032 = vmatpush1.bf16.msra.mxu0 0
  %2033 = vmatprep.subr.bf16.mxu0 0
  %2034 = vmatpush1.bf16.msra.mxu0 0
  %2035 = vmatprep.subr.bf16.mxu0 0
  %2036 = vmatpush1.bf16.msra.mxu0 0
  %2037 = vmatprep.subr.bf16.mxu0 0
  %2038 = vmatpush1.bf16.msra.mxu0 0
  %2039 = vmatprep.subr.bf16.mxu0 0
  %2040 = vmatpush1.bf16.msra.mxu0 0
  %2041 = vmatprep.subr.bf16.mxu0 0
  %2042 = vmatpush1.bf16.msra.mxu0 0
  %2043 = vmatprep.subr.bf16.mxu0 0
  %2044 = vmatpush1.bf16.msra.mxu0 0
  %2045 = vmatprep.subr.bf16.mxu0 0
  %2046 = vmatpush1.bf16.msra.mxu0 0
  %2047 = vmatprep.subr.bf16.mxu0 0
  %2048 = vmatpush1.bf16.msra.mxu0 0
  %2049 = vmatprep.subr.bf16.mxu0 0
  %2050 = vmatpush1.bf16.msra.mxu0 0
  %2051 = vmatprep.subr.bf16.mxu0 0
  %2052 = vmatpush1.bf16.msra.mxu0 0
  %2053 = vmatprep.subr.bf16.mxu0 0
  %2054 = vmatpush1.bf16.msra.mxu0 0
  %2055 = vmatprep.subr.bf16.mxu0 0
  %2056 = vmatpush1.bf16.msra.mxu0 0
  %2057 = vmatprep.subr.bf16.mxu0 0
  %2058 = vmatpush1.bf16.msra.mxu0 0
  %2059 = vmatprep.mubr.bf16.mxu0 0
  %2060 = vmatmul.mubr.bf16.gmra.mrb[0].mxu0 %v2010
  %v2061 = vpop.f32.mrb[0].mxu0
  %v2062 = vadd.f32 0.0, %v2061
  %v2063 = vpop.f32.mrb[0].mxu0
  %v2064 = vadd.f32 0.0, %v2063
  %v2065 = vpop.f32.mrb[0].mxu0
  %v2066 = vadd.f32 0.0, %v2065
  %v2067 = vpop.f32.mrb[0].mxu0
  %v2068 = vadd.f32 0.0, %v2067
  %2069 = vmatprep.mubr.bf16.mxu0 0
  %2070 = vmatmul.mubr.bf16.gmra.mrb[0].mxu0 %v2013
  %v2071 = vpop.f32.mrb[0].mxu0
  %v2072 = vadd.f32 0.0, %v2071
  %v2073 = vpop.f32.mrb[0].mxu0
  %v2074 = vadd.f32 0.0, %v2073
  %v2075 = vpop.f32.mrb[0].mxu0
  %v2076 = vadd.f32 0.0, %v2075
  %v2077 = vpop.f32.mrb[0].mxu0
  %v2078 = vadd.f32 0.0, %v2077
  %2079 = vdwg.mxu0
  %2080 = vmatprep.subr.bf16.mxu0 %v1994
  %2081 = vmatpush1.bf16.msra.mxu0 %v1993
  %2082 = vmatprep.subr.bf16.mxu0 %v2025
  %2083 = vmatpush1.bf16.msra.mxu0 %v2022
  %2084 = vmatprep.subr.bf16.mxu0 0
  %2085 = vmatpush1.bf16.msra.mxu0 0
  %2086 = vmatprep.subr.bf16.mxu0 0
  %2087 = vmatpush1.bf16.msra.mxu0 0
  %2088 = vmatprep.subr.bf16.mxu0 0
  %2089 = vmatpush1.bf16.msra.mxu0 0
  %2090 = vmatprep.subr.bf16.mxu0 0
  %2091 = vmatpush1.bf16.msra.mxu0 0
  %2092 = vmatprep.subr.bf16.mxu0 0
  %2093 = vmatpush1.bf16.msra.mxu0 0
  %2094 = vmatprep.subr.bf16.mxu0 0
  %2095 = vmatpush1.bf16.msra.mxu0 0
  %2096 = vmatprep.subr.bf16.mxu0 0
  %2097 = vmatpush1.bf16.msra.mxu0 0
  %2098 = vmatprep.subr.bf16.mxu0 0
  %2099 = vmatpush1.bf16.msra.mxu0 0
  %2100 = vmatprep.subr.bf16.mxu0 0
  %2101 = vmatpush1.bf16.msra.mxu0 0
  %2102 = vmatprep.subr.bf16.mxu0 0
  %2103 = vmatpush1.bf16.msra.mxu0 0
  %2104 = vmatprep.subr.bf16.mxu0 0
  %2105 = vmatpush1.bf16.msra.mxu0 0
  %2106 = vmatprep.subr.bf16.mxu0 0
  %2107 = vmatpush1.bf16.msra.mxu0 0
  %2108 = vmatprep.subr.bf16.mxu0 0
  %2109 = vmatpush1.bf16.msra.mxu0 0
  %2110 = vmatprep.subr.bf16.mxu0 0
  %2111 = vmatpush1.bf16.msra.mxu0 0
  %2112 = vmatprep.mubr.bf16.mxu0 0
  %2113 = vmatmul.mubr.bf16.gmra.mrb[0].mxu0 %v2010
  %v2114 = vpop.f32.mrb[0].mxu0
  %v2115 = vadd.f32 0.0, %v2114
  %v2116 = vpop.f32.mrb[0].mxu0
  %v2117 = vadd.f32 0.0, %v2116
  %v2118 = vpop.f32.mrb[0].mxu0
  %v2119 = vadd.f32 0.0, %v2118
  %v2120 = vpop.f32.mrb[0].mxu0
  %v2121 = vadd.f32 0.0, %v2120
  %2122 = vmatprep.mubr.bf16.mxu0 0
  %2123 = vmatmul.mubr.bf16.gmra.mrb[0].mxu0 %v2013
  %v2124 = vpop.f32.mrb[0].mxu0
  %v2125 = vadd.f32 0.0, %v2124
  %v2126 = vpop.f32.mrb[0].mxu0
  %v2127 = vadd.f32 0.0, %v2126
  %v2128 = vpop.f32.mrb[0].mxu0
  %v2129 = vadd.f32 0.0, %v2128
  %v2130 = vpop.f32.mrb[0].mxu0
  %v2131 = vadd.f32 0.0, %v2130
  %2132 = vdwg.mxu0
  %2134 = vset.pattern.permute.xlu0 0
  %2135 = vperm.xlu0 %2134, %v1979
  %v2136 = vpop.permute.xlu0 %2135
  %2139 = vset.pattern.permute.xlu0 0
  %2140 = vperm.xlu0 %2139, %v1980
  %v2141 = vpop.permute.xlu0 %2140
  %v2143 = vadd.f32 %v2062, %v2136
  %v2144 = vadd.f32 %v2064, %v2136
  %v2145 = vadd.f32 %v2115, %v2136
  %v2146 = vadd.f32 %v2117, %v2136
  %v2147 = vadd.f32 %v2066, %v2141
  %v2148 = vadd.f32 %v2068, %v2141
  %v2149 = vadd.f32 %v2119, %v2141
  %v2150 = vadd.f32 %v2121, %v2141
  %v2151 = vmax.f32 %v2143, 0.0
  %v2152 = vmax.f32 %v2144, 0.0
  %v2153 = vmax.f32 %v2145, 0.0
  %v2154 = vmax.f32 %v2146, 0.0
  %v2155 = vmax.f32 %v2147, 0.0
  %v2156 = vmax.f32 %v2148, 0.0
  %v2157 = vmax.f32 %v2149, 0.0
  %v2158 = vmax.f32 %v2150, 0.0
  %2160 = vset.pattern.permute.xlu0 0
  %2161 = vperm.xlu0 %2160, %v1981
  %v2162 = vpop.permute.xlu0 %2161
  %2165 = vset.pattern.permute.xlu0 0
  %2166 = vperm.xlu0 %2165, %v1982
  %v2167 = vpop.permute.xlu0 %2166
  %v2169 = vadd.f32 %v2072, %v2162
  %v2170 = vadd.f32 %v2074, %v2162
  %v2171 = vadd.f32 %v2125, %v2162
  %v2172 = vadd.f32 %v2127, %v2162
  %v2173 = vadd.f32 %v2076, %v2167
  %v2174 = vadd.f32 %v2078, %v2167
  %v2175 = vadd.f32 %v2129, %v2167
  %v2176 = vadd.f32 %v2131, %v2167
  %2177 = vrot.lane.b32.xlu0 %v2151, 17
  %v2178 = vpop.permute.xlu0 %2177
  %2179 = vrot.lane.b32.xlu0 %v2155, 17
  %v2180 = vpop.permute.xlu0 %2179
  %2181 = vrot.lane.b32.xlu0 %v2152, 17
  %v2182 = vpop.permute.xlu0 %2181
  %2183 = vrot.lane.b32.xlu0 %v2156, 17
  %v2184 = vpop.permute.xlu0 %2183
  %2185 = vrot.lane.b32.xlu0 %v2153, 17
  %v2186 = vpop.permute.xlu0 %2185
  %2187 = vrot.lane.b32.xlu0 %v2157, 17
  %v2188 = vpop.permute.xlu0 %2187
  %2189 = vrot.lane.b32.xlu0 %v2154, 17
  %v2190 = vpop.permute.xlu0 %2189
  %2191 = vrot.lane.b32.xlu0 %v2158, 17
  %v2192 = vpop.permute.xlu0 %2191
  %v2193 = vsel %vm346, %v2186, %v2190
  %v2194 = vsel %vm346, %v2188, %v2192
  %v2195 = vsel %vm346, %v2182, %v2186
  %v2196 = vsel %vm346, %v2184, %v2188
  %v2197 = vsel %vm346, %v2178, %v2182
  %v2198 = vsel %vm346, %v2180, %v2184
  %v2199 = vsel %vm346, %v2190, %v2178
  %v2200 = vsel %vm346, %v2192, %v2180
  %v2201 = vld [vmem:[%s1] sm:$0xf]
  %v2203 = vlaneseq
  %v2204 = vshrl.u32 %v2203, 7
  %v2205 = vsub.s32 0, %v2204
  %v2206 = vrot.slane %v2201, %v2205
  %v2207 = vlaneseq
  %v2208 = vshrl.u32 %v2207, 7
  %v2209 = vsub.s32 1, %v2208
  %v2210 = vrot.slane %v2201, %v2209
  %v2211 = vlaneseq
  %v2212 = vshrl.u32 %v2211, 7
  %v2213 = vsub.s32 2, %v2212
  %v2214 = vrot.slane %v2201, %v2213
  %v2215 = vlaneseq
  %v2216 = vshrl.u32 %v2215, 7
  %v2217 = vsub.s32 3, %v2216
  %v2218 = vrot.slane %v2201, %v2217
  %v2223 = vmul.f32 %v2199, %v2206
  %v2224 = vmul.f32 %v2197, %v2210
  %v2225 = vmul.f32 %v2195, %v2214
  %v2226 = vmul.f32 %v2193, %v2218
  %v2227 = vmul.f32 %v2200, %v2206
  %v2228 = vmul.f32 %v2198, %v2210
  %v2229 = vmul.f32 %v2196, %v2214
  %v2230 = vmul.f32 %v2194, %v2218
  %v2231 = vpack.c.bf16 %v2227, %v2223
  %v2232 = vpack.c.bf16 %v2228, %v2224
  %v2233 = vpack.c.bf16 %v2229, %v2225
  %v2234 = vpack.c.bf16 %v2230, %v2226
  %v2239 = vunpack.c.l.b16 %v2231
  %v2240 = vunpack.c.l.b16 %v2232
  %v2241 = vunpack.c.l.b16 %v2233
  %v2242 = vunpack.c.l.b16 %v2234
  %v2243 = vunpack.c.h.b16 %v2231
  %v2244 = vunpack.c.h.b16 %v2232
  %v2245 = vunpack.c.h.b16 %v2233
  %v2246 = vunpack.c.h.b16 %v2234
  %v2247 = vpack.c.b16 %v2240, %v2239
  %v2248 = vpack.c.b16 %v2242, %v2241
  %v2249 = vpack.c.b16 %v2244, %v2243
  %v2250 = vpack.c.b16 %v2246, %v2245
  %2255 = vst [vmem:[#allocation2] sm:$0xff] %v2247
  %2256 = vst [vmem:[#allocation2 + $0x8] sm:$0xff] %v2248
  %2257 = vst [vmem:[#allocation2 + $0x10] sm:$0xff] %v2249
  %2258 = vst [vmem:[#allocation2 + $0x18] sm:$0xff] %v2250
  %2259 = vrot.lane.b32.xlu0 %v2151, 16
  %v2260 = vpop.permute.xlu0 %2259
  %2261 = vrot.lane.b32.xlu0 %v2155, 16
  %v2262 = vpop.permute.xlu0 %2261
  %2263 = vrot.lane.b32.xlu0 %v2152, 16
  %v2264 = vpop.permute.xlu0 %2263
  %2265 = vrot.lane.b32.xlu0 %v2156, 16
  %v2266 = vpop.permute.xlu0 %2265
  %2267 = vrot.lane.b32.xlu0 %v2153, 16
  %v2268 = vpop.permute.xlu0 %2267
  %2269 = vrot.lane.b32.xlu0 %v2157, 16
  %v2270 = vpop.permute.xlu0 %2269
  %2271 = vrot.lane.b32.xlu0 %v2154, 16
  %v2272 = vpop.permute.xlu0 %2271
  %2273 = vrot.lane.b32.xlu0 %v2158, 16
  %v2274 = vpop.permute.xlu0 %2273
  %v2275 = vsel %vm463, %v2268, %v2272
  %v2276 = vsel %vm463, %v2270, %v2274
  %v2277 = vsel %vm463, %v2264, %v2268
  %v2278 = vsel %vm463, %v2266, %v2270
  %v2279 = vsel %vm463, %v2260, %v2264
  %v2280 = vsel %vm463, %v2262, %v2266
  %v2281 = vsel %vm463, %v2272, %v2260
  %v2282 = vsel %vm463, %v2274, %v2262
  %v2283 = vld [vmem:[%s476] sm:$0xf]
  %v2285 = vlaneseq
  %v2286 = vshrl.u32 %v2285, 7
  %v2287 = vsub.s32 0, %v2286
  %v2288 = vrot.slane %v2283, %v2287
  %v2289 = vlaneseq
  %v2290 = vshrl.u32 %v2289, 7
  %v2291 = vsub.s32 1, %v2290
  %v2292 = vrot.slane %v2283, %v2291
  %v2293 = vlaneseq
  %v2294 = vshrl.u32 %v2293, 7
  %v2295 = vsub.s32 2, %v2294
  %v2296 = vrot.slane %v2283, %v2295
  %v2297 = vlaneseq
  %v2298 = vshrl.u32 %v2297, 7
  %v2299 = vsub.s32 3, %v2298
  %v2300 = vrot.slane %v2283, %v2299
  %v2305 = vmul.f32 %v2281, %v2288
  %v2306 = vmul.f32 %v2279, %v2292
  %v2307 = vmul.f32 %v2277, %v2296
  %v2308 = vmul.f32 %v2275, %v2300
  %v2309 = vmul.f32 %v2282, %v2288
  %v2310 = vmul.f32 %v2280, %v2292
  %v2311 = vmul.f32 %v2278, %v2296
  %v2312 = vmul.f32 %v2276, %v2300
  %v2313 = vpack.c.bf16 %v2309, %v2305
  %v2314 = vpack.c.bf16 %v2310, %v2306
  %v2315 = vpack.c.bf16 %v2311, %v2307
  %v2316 = vpack.c.bf16 %v2312, %v2308
  %v2321 = vunpack.c.l.b16 %v2313
  %v2322 = vunpack.c.l.b16 %v2314
  %v2323 = vunpack.c.l.b16 %v2315
  %v2324 = vunpack.c.l.b16 %v2316
  %v2325 = vunpack.c.h.b16 %v2313
  %v2326 = vunpack.c.h.b16 %v2314
  %v2327 = vunpack.c.h.b16 %v2315
  %v2328 = vunpack.c.h.b16 %v2316
  %v2329 = vpack.c.b16 %v2322, %v2321
  %v2330 = vpack.c.b16 %v2324, %v2323
  %v2331 = vpack.c.b16 %v2326, %v2325
  %v2332 = vpack.c.b16 %v2328, %v2327
  %2337 = vst [vmem:[#allocation2 + $0x20] sm:$0xff] %v2329
  %2338 = vst [vmem:[#allocation2 + $0x28] sm:$0xff] %v2330
  %2339 = vst [vmem:[#allocation2 + $0x30] sm:$0xff] %v2331
  %2340 = vst [vmem:[#allocation2 + $0x38] sm:$0xff] %v2332
  %2341 = vrot.lane.b32.xlu0 %v2151, 15
  %v2342 = vpop.permute.xlu0 %2341
  %2343 = vrot.lane.b32.xlu0 %v2155, 15
  %v2344 = vpop.permute.xlu0 %2343
  %2345 = vrot.lane.b32.xlu0 %v2152, 15
  %v2346 = vpop.permute.xlu0 %2345
  %2347 = vrot.lane.b32.xlu0 %v2156, 15
  %v2348 = vpop.permute.xlu0 %2347
  %2349 = vrot.lane.b32.xlu0 %v2153, 15
  %v2350 = vpop.permute.xlu0 %2349
  %2351 = vrot.lane.b32.xlu0 %v2157, 15
  %v2352 = vpop.permute.xlu0 %2351
  %2353 = vrot.lane.b32.xlu0 %v2154, 15
  %v2354 = vpop.permute.xlu0 %2353
  %2355 = vrot.lane.b32.xlu0 %v2158, 15
  %v2356 = vpop.permute.xlu0 %2355
  %v2357 = vsel %vm581, %v2350, %v2354
  %v2358 = vsel %vm581, %v2352, %v2356
  %v2359 = vsel %vm581, %v2346, %v2350
  %v2360 = vsel %vm581, %v2348, %v2352
  %v2361 = vsel %vm581, %v2342, %v2346
  %v2362 = vsel %vm581, %v2344, %v2348
  %v2363 = vsel %vm581, %v2354, %v2342
  %v2364 = vsel %vm581, %v2356, %v2344
  %v2365 = vld [vmem:[%s594] sm:$0xf]
  %v2367 = vlaneseq
  %v2368 = vshrl.u32 %v2367, 7
  %v2369 = vsub.s32 0, %v2368
  %v2370 = vrot.slane %v2365, %v2369
  %v2371 = vlaneseq
  %v2372 = vshrl.u32 %v2371, 7
  %v2373 = vsub.s32 1, %v2372
  %v2374 = vrot.slane %v2365, %v2373
  %v2375 = vlaneseq
  %v2376 = vshrl.u32 %v2375, 7
  %v2377 = vsub.s32 2, %v2376
  %v2378 = vrot.slane %v2365, %v2377
  %v2379 = vlaneseq
  %v2380 = vshrl.u32 %v2379, 7
  %v2381 = vsub.s32 3, %v2380
  %v2382 = vrot.slane %v2365, %v2381
  %v2387 = vmul.f32 %v2363, %v2370
  %v2388 = vmul.f32 %v2361, %v2374
  %v2389 = vmul.f32 %v2359, %v2378
  %v2390 = vmul.f32 %v2357, %v2382
  %v2391 = vmul.f32 %v2364, %v2370
  %v2392 = vmul.f32 %v2362, %v2374
  %v2393 = vmul.f32 %v2360, %v2378
  %v2394 = vmul.f32 %v2358, %v2382
  %v2395 = vpack.c.bf16 %v2391, %v2387
  %v2396 = vpack.c.bf16 %v2392, %v2388
  %v2397 = vpack.c.bf16 %v2393, %v2389
  %v2398 = vpack.c.bf16 %v2394, %v2390
  %v2403 = vunpack.c.l.b16 %v2395
  %v2404 = vunpack.c.l.b16 %v2396
  %v2405 = vunpack.c.l.b16 %v2397
  %v2406 = vunpack.c.l.b16 %v2398
  %v2407 = vunpack.c.h.b16 %v2395
  %v2408 = vunpack.c.h.b16 %v2396
  %v2409 = vunpack.c.h.b16 %v2397
  %v2410 = vunpack.c.h.b16 %v2398
  %v2411 = vpack.c.b16 %v2404, %v2403
  %v2412 = vpack.c.b16 %v2406, %v2405
  %v2413 = vpack.c.b16 %v2408, %v2407
  %v2414 = vpack.c.b16 %v2410, %v2409
  %2419 = vst [vmem:[#allocation2 + $0x40] sm:$0xff] %v2411
  %2420 = vst [vmem:[#allocation2 + $0x48] sm:$0xff] %v2412
  %2421 = vst [vmem:[#allocation2 + $0x50] sm:$0xff] %v2413
  %2422 = vst [vmem:[#allocation2 + $0x58] sm:$0xff] %v2414
  %2423 = vrot.lane.b32.xlu0 %v2151, 1
  %v2424 = vpop.permute.xlu0 %2423
  %2425 = vrot.lane.b32.xlu0 %v2155, 1
  %v2426 = vpop.permute.xlu0 %2425
  %2427 = vrot.lane.b32.xlu0 %v2152, 1
  %v2428 = vpop.permute.xlu0 %2427
  %2429 = vrot.lane.b32.xlu0 %v2156, 1
  %v2430 = vpop.permute.xlu0 %2429
  %2431 = vrot.lane.b32.xlu0 %v2153, 1
  %v2432 = vpop.permute.xlu0 %2431
  %2433 = vrot.lane.b32.xlu0 %v2157, 1
  %v2434 = vpop.permute.xlu0 %2433
  %2435 = vrot.lane.b32.xlu0 %v2154, 1
  %v2436 = vpop.permute.xlu0 %2435
  %2437 = vrot.lane.b32.xlu0 %v2158, 1
  %v2438 = vpop.permute.xlu0 %2437
  %v2439 = vsel %vm699, %v2432, %v2436
  %v2440 = vsel %vm699, %v2434, %v2438
  %v2441 = vsel %vm699, %v2428, %v2432
  %v2442 = vsel %vm699, %v2430, %v2434
  %v2443 = vsel %vm699, %v2424, %v2428
  %v2444 = vsel %vm699, %v2426, %v2430
  %v2445 = vsel %vm699, %v2436, %v2424
  %v2446 = vsel %vm699, %v2438, %v2426
  %v2447 = vld [vmem:[%s712] sm:$0xf]
  %v2449 = vlaneseq
  %v2450 = vshrl.u32 %v2449, 7
  %v2451 = vsub.s32 0, %v2450
  %v2452 = vrot.slane %v2447, %v2451
  %v2453 = vlaneseq
  %v2454 = vshrl.u32 %v2453, 7
  %v2455 = vsub.s32 1, %v2454
  %v2456 = vrot.slane %v2447, %v2455
  %v2457 = vlaneseq
  %v2458 = vshrl.u32 %v2457, 7
  %v2459 = vsub.s32 2, %v2458
  %v2460 = vrot.slane %v2447, %v2459
  %v2461 = vlaneseq
  %v2462 = vshrl.u32 %v2461, 7
  %v2463 = vsub.s32 3, %v2462
  %v2464 = vrot.slane %v2447, %v2463
  %v2469 = vmul.f32 %v2445, %v2452
  %v2470 = vmul.f32 %v2443, %v2456
  %v2471 = vmul.f32 %v2441, %v2460
  %v2472 = vmul.f32 %v2439, %v2464
  %v2473 = vmul.f32 %v2446, %v2452
  %v2474 = vmul.f32 %v2444, %v2456
  %v2475 = vmul.f32 %v2442, %v2460
  %v2476 = vmul.f32 %v2440, %v2464
  %v2477 = vpack.c.bf16 %v2473, %v2469
  %v2478 = vpack.c.bf16 %v2474, %v2470
  %v2479 = vpack.c.bf16 %v2475, %v2471
  %v2480 = vpack.c.bf16 %v2476, %v2472
  %v2485 = vunpack.c.l.b16 %v2477
  %v2486 = vunpack.c.l.b16 %v2478
  %v2487 = vunpack.c.l.b16 %v2479
  %v2488 = vunpack.c.l.b16 %v2480
  %v2489 = vunpack.c.h.b16 %v2477
  %v2490 = vunpack.c.h.b16 %v2478
  %v2491 = vunpack.c.h.b16 %v2479
  %v2492 = vunpack.c.h.b16 %v2480
  %v2493 = vpack.c.b16 %v2486, %v2485
  %v2494 = vpack.c.b16 %v2488, %v2487
  %v2495 = vpack.c.b16 %v2490, %v2489
  %v2496 = vpack.c.b16 %v2492, %v2491
  %2501 = vst [vmem:[#allocation2 + $0x60] sm:$0xff] %v2493
  %2502 = vst [vmem:[#allocation2 + $0x68] sm:$0xff] %v2494
  %2503 = vst [vmem:[#allocation2 + $0x70] sm:$0xff] %v2495
  %2504 = vst [vmem:[#allocation2 + $0x78] sm:$0xff] %v2496
  %v2505 = vpack.c.bf16 %v2155, %v2151
  %v2506 = vpack.c.bf16 %v2156, %v2152
  %v2507 = vpack.c.bf16 %v2157, %v2153
  %v2508 = vpack.c.bf16 %v2158, %v2154
  %v2513 = vunpack.c.l.b16 %v2505
  %v2514 = vunpack.c.l.b16 %v2506
  %v2515 = vunpack.c.l.b16 %v2507
  %v2516 = vunpack.c.l.b16 %v2508
  %v2517 = vunpack.c.h.b16 %v2505
  %v2518 = vunpack.c.h.b16 %v2506
  %v2519 = vunpack.c.h.b16 %v2507
  %v2520 = vunpack.c.h.b16 %v2508
  %v2521 = vpack.c.b16 %v2514, %v2513
  %v2522 = vpack.c.b16 %v2516, %v2515
  %v2523 = vpack.c.b16 %v2518, %v2517
  %v2524 = vpack.c.b16 %v2520, %v2519
  %2529 = vst [vmem:[#allocation2 + $0x80] sm:$0xff] %v2521
  %2530 = vst [vmem:[#allocation2 + $0x88] sm:$0xff] %v2522
  %2531 = vst [vmem:[#allocation2 + $0x90] sm:$0xff] %v2523
  %2532 = vst [vmem:[#allocation2 + $0x98] sm:$0xff] %v2524
  %2533 = vrot.lane.b32.xlu0 %v2151, 127
  %v2534 = vpop.permute.xlu0 %2533
  %2535 = vrot.lane.b32.xlu0 %v2155, 127
  %v2536 = vpop.permute.xlu0 %2535
  %2537 = vrot.lane.b32.xlu0 %v2152, 127
  %v2538 = vpop.permute.xlu0 %2537
  %2539 = vrot.lane.b32.xlu0 %v2156, 127
  %v2540 = vpop.permute.xlu0 %2539
  %2541 = vrot.lane.b32.xlu0 %v2153, 127
  %v2542 = vpop.permute.xlu0 %2541
  %2543 = vrot.lane.b32.xlu0 %v2157, 127
  %v2544 = vpop.permute.xlu0 %2543
  %2545 = vrot.lane.b32.xlu0 %v2154, 127
  %v2546 = vpop.permute.xlu0 %2545
  %2547 = vrot.lane.b32.xlu0 %v2158, 127
  %v2548 = vpop.permute.xlu0 %2547
  %v2549 = vsel %vm863, %v2542, %v2546
  %v2550 = vsel %vm863, %v2544, %v2548
  %v2551 = vsel %vm863, %v2538, %v2542
  %v2552 = vsel %vm863, %v2540, %v2544
  %v2553 = vsel %vm863, %v2534, %v2538
  %v2554 = vsel %vm863, %v2536, %v2540
  %v2555 = vsel %vm863, %v2546, %v2534
  %v2556 = vsel %vm863, %v2548, %v2536
  %v2557 = vld [vmem:[%s876] sm:$0xf]
  %v2559 = vlaneseq
  %v2560 = vshrl.u32 %v2559, 7
  %v2561 = vsub.s32 0, %v2560
  %v2562 = vrot.slane %v2557, %v2561
  %v2563 = vlaneseq
  %v2564 = vshrl.u32 %v2563, 7
  %v2565 = vsub.s32 1, %v2564
  %v2566 = vrot.slane %v2557, %v2565
  %v2567 = vlaneseq
  %v2568 = vshrl.u32 %v2567, 7
  %v2569 = vsub.s32 2, %v2568
  %v2570 = vrot.slane %v2557, %v2569
  %v2571 = vlaneseq
  %v2572 = vshrl.u32 %v2571, 7
  %v2573 = vsub.s32 3, %v2572
  %v2574 = vrot.slane %v2557, %v2573
  %v2579 = vmul.f32 %v2553, %v2562
  %v2580 = vmul.f32 %v2551, %v2566
  %v2581 = vmul.f32 %v2549, %v2570
  %v2582 = vmul.f32 %v2555, %v2574
  %v2583 = vmul.f32 %v2554, %v2562
  %v2584 = vmul.f32 %v2552, %v2566
  %v2585 = vmul.f32 %v2550, %v2570
  %v2586 = vmul.f32 %v2556, %v2574
  %v2587 = vpack.c.bf16 %v2583, %v2579
  %v2588 = vpack.c.bf16 %v2584, %v2580
  %v2589 = vpack.c.bf16 %v2585, %v2581
  %v2590 = vpack.c.bf16 %v2586, %v2582
  %v2595 = vunpack.c.l.b16 %v2587
  %v2596 = vunpack.c.l.b16 %v2588
  %v2597 = vunpack.c.l.b16 %v2589
  %v2598 = vunpack.c.l.b16 %v2590
  %v2599 = vunpack.c.h.b16 %v2587
  %v2600 = vunpack.c.h.b16 %v2588
  %v2601 = vunpack.c.h.b16 %v2589
  %v2602 = vunpack.c.h.b16 %v2590
  %v2603 = vpack.c.b16 %v2596, %v2595
  %v2604 = vpack.c.b16 %v2598, %v2597
  %v2605 = vpack.c.b16 %v2600, %v2599
  %v2606 = vpack.c.b16 %v2602, %v2601
  %2611 = vst [vmem:[#allocation2 + $0xa0] sm:$0xff] %v2603
  %2612 = vst [vmem:[#allocation2 + $0xa8] sm:$0xff] %v2604
  %2613 = vst [vmem:[#allocation2 + $0xb0] sm:$0xff] %v2605
  %2614 = vst [vmem:[#allocation2 + $0xb8] sm:$0xff] %v2606
  %2615 = vrot.lane.b32.xlu0 %v2151, 113
  %v2616 = vpop.permute.xlu0 %2615
  %2617 = vrot.lane.b32.xlu0 %v2155, 113
  %v2618 = vpop.permute.xlu0 %2617
  %2619 = vrot.lane.b32.xlu0 %v2152, 113
  %v2620 = vpop.permute.xlu0 %2619
  %2621 = vrot.lane.b32.xlu0 %v2156, 113
  %v2622 = vpop.permute.xlu0 %2621
  %2623 = vrot.lane.b32.xlu0 %v2153, 113
  %v2624 = vpop.permute.xlu0 %2623
  %2625 = vrot.lane.b32.xlu0 %v2157, 113
  %v2626 = vpop.permute.xlu0 %2625
  %2627 = vrot.lane.b32.xlu0 %v2154, 113
  %v2628 = vpop.permute.xlu0 %2627
  %2629 = vrot.lane.b32.xlu0 %v2158, 113
  %v2630 = vpop.permute.xlu0 %2629
  %v2631 = vsel %vm981, %v2624, %v2628
  %v2632 = vsel %vm981, %v2626, %v2630
  %v2633 = vsel %vm981, %v2620, %v2624
  %v2634 = vsel %vm981, %v2622, %v2626
  %v2635 = vsel %vm981, %v2616, %v2620
  %v2636 = vsel %vm981, %v2618, %v2622
  %v2637 = vsel %vm981, %v2628, %v2616
  %v2638 = vsel %vm981, %v2630, %v2618
  %v2639 = vld [vmem:[%s994] sm:$0xf]
  %v2641 = vlaneseq
  %v2642 = vshrl.u32 %v2641, 7
  %v2643 = vsub.s32 0, %v2642
  %v2644 = vrot.slane %v2639, %v2643
  %v2645 = vlaneseq
  %v2646 = vshrl.u32 %v2645, 7
  %v2647 = vsub.s32 1, %v2646
  %v2648 = vrot.slane %v2639, %v2647
  %v2649 = vlaneseq
  %v2650 = vshrl.u32 %v2649, 7
  %v2651 = vsub.s32 2, %v2650
  %v2652 = vrot.slane %v2639, %v2651
  %v2653 = vlaneseq
  %v2654 = vshrl.u32 %v2653, 7
  %v2655 = vsub.s32 3, %v2654
  %v2656 = vrot.slane %v2639, %v2655
  %v2661 = vmul.f32 %v2635, %v2644
  %v2662 = vmul.f32 %v2633, %v2648
  %v2663 = vmul.f32 %v2631, %v2652
  %v2664 = vmul.f32 %v2637, %v2656
  %v2665 = vmul.f32 %v2636, %v2644
  %v2666 = vmul.f32 %v2634, %v2648
  %v2667 = vmul.f32 %v2632, %v2652
  %v2668 = vmul.f32 %v2638, %v2656
  %v2669 = vpack.c.bf16 %v2665, %v2661
  %v2670 = vpack.c.bf16 %v2666, %v2662
  %v2671 = vpack.c.bf16 %v2667, %v2663
  %v2672 = vpack.c.bf16 %v2668, %v2664
  %v2677 = vunpack.c.l.b16 %v2669
  %v2678 = vunpack.c.l.b16 %v2670
  %v2679 = vunpack.c.l.b16 %v2671
  %v2680 = vunpack.c.l.b16 %v2672
  %v2681 = vunpack.c.h.b16 %v2669
  %v2682 = vunpack.c.h.b16 %v2670
  %v2683 = vunpack.c.h.b16 %v2671
  %v2684 = vunpack.c.h.b16 %v2672
  %v2685 = vpack.c.b16 %v2678, %v2677
  %v2686 = vpack.c.b16 %v2680, %v2679
  %v2687 = vpack.c.b16 %v2682, %v2681
  %v2688 = vpack.c.b16 %v2684, %v2683
  %2693 = vst [vmem:[#allocation2 + $0xc0] sm:$0xff] %v2685
  %2694 = vst [vmem:[#allocation2 + $0xc8] sm:$0xff] %v2686
  %2695 = vst [vmem:[#allocation2 + $0xd0] sm:$0xff] %v2687
  %2696 = vst [vmem:[#allocation2 + $0xd8] sm:$0xff] %v2688
  %2697 = vrot.lane.b32.xlu0 %v2151, 112
  %v2698 = vpop.permute.xlu0 %2697
  %2699 = vrot.lane.b32.xlu0 %v2155, 112
  %v2700 = vpop.permute.xlu0 %2699
  %2701 = vrot.lane.b32.xlu0 %v2152, 112
  %v2702 = vpop.permute.xlu0 %2701
  %2703 = vrot.lane.b32.xlu0 %v2156, 112
  %v2704 = vpop.permute.xlu0 %2703
  %2705 = vrot.lane.b32.xlu0 %v2153, 112
  %v2706 = vpop.permute.xlu0 %2705
  %2707 = vrot.lane.b32.xlu0 %v2157, 112
  %v2708 = vpop.permute.xlu0 %2707
  %2709 = vrot.lane.b32.xlu0 %v2154, 112
  %v2710 = vpop.permute.xlu0 %2709
  %2711 = vrot.lane.b32.xlu0 %v2158, 112
  %v2712 = vpop.permute.xlu0 %2711
  %v2713 = vsel %vm1099, %v2706, %v2710
  %v2714 = vsel %vm1099, %v2708, %v2712
  %v2715 = vsel %vm1099, %v2702, %v2706
  %v2716 = vsel %vm1099, %v2704, %v2708
  %v2717 = vsel %vm1099, %v2698, %v2702
  %v2718 = vsel %vm1099, %v2700, %v2704
  %v2719 = vsel %vm1099, %v2710, %v2698
  %v2720 = vsel %vm1099, %v2712, %v2700
  %v2721 = vld [vmem:[%s1112] sm:$0xf]
  %v2723 = vlaneseq
  %v2724 = vshrl.u32 %v2723, 7
  %v2725 = vsub.s32 0, %v2724
  %v2726 = vrot.slane %v2721, %v2725
  %v2727 = vlaneseq
  %v2728 = vshrl.u32 %v2727, 7
  %v2729 = vsub.s32 1, %v2728
  %v2730 = vrot.slane %v2721, %v2729
  %v2731 = vlaneseq
  %v2732 = vshrl.u32 %v2731, 7
  %v2733 = vsub.s32 2, %v2732
  %v2734 = vrot.slane %v2721, %v2733
  %v2735 = vlaneseq
  %v2736 = vshrl.u32 %v2735, 7
  %v2737 = vsub.s32 3, %v2736
  %v2738 = vrot.slane %v2721, %v2737
  %v2743 = vmul.f32 %v2717, %v2726
  %v2744 = vmul.f32 %v2715, %v2730
  %v2745 = vmul.f32 %v2713, %v2734
  %v2746 = vmul.f32 %v2719, %v2738
  %v2747 = vmul.f32 %v2718, %v2726
  %v2748 = vmul.f32 %v2716, %v2730
  %v2749 = vmul.f32 %v2714, %v2734
  %v2750 = vmul.f32 %v2720, %v2738
  %v2751 = vpack.c.bf16 %v2747, %v2743
  %v2752 = vpack.c.bf16 %v2748, %v2744
  %v2753 = vpack.c.bf16 %v2749, %v2745
  %v2754 = vpack.c.bf16 %v2750, %v2746
  %v2759 = vunpack.c.l.b16 %v2751
  %v2760 = vunpack.c.l.b16 %v2752
  %v2761 = vunpack.c.l.b16 %v2753
  %v2762 = vunpack.c.l.b16 %v2754
  %v2763 = vunpack.c.h.b16 %v2751
  %v2764 = vunpack.c.h.b16 %v2752
  %v2765 = vunpack.c.h.b16 %v2753
  %v2766 = vunpack.c.h.b16 %v2754
  %v2767 = vpack.c.b16 %v2760, %v2759
  %v2768 = vpack.c.b16 %v2762, %v2761
  %v2769 = vpack.c.b16 %v2764, %v2763
  %v2770 = vpack.c.b16 %v2766, %v2765
  %2775 = vst [vmem:[#allocation2 + $0xe0] sm:$0xff] %v2767
  %2776 = vst [vmem:[#allocation2 + $0xe8] sm:$0xff] %v2768
  %2777 = vst [vmem:[#allocation2 + $0xf0] sm:$0xff] %v2769
  %2778 = vst [vmem:[#allocation2 + $0xf8] sm:$0xff] %v2770
  %2779 = vrot.lane.b32.xlu0 %v2151, 111
  %v2780 = vpop.permute.xlu0 %2779
  %2781 = vrot.lane.b32.xlu0 %v2155, 111
  %v2782 = vpop.permute.xlu0 %2781
  %2783 = vrot.lane.b32.xlu0 %v2152, 111
  %v2784 = vpop.permute.xlu0 %2783
  %2785 = vrot.lane.b32.xlu0 %v2156, 111
  %v2786 = vpop.permute.xlu0 %2785
  %2787 = vrot.lane.b32.xlu0 %v2153, 111
  %v2788 = vpop.permute.xlu0 %2787
  %2789 = vrot.lane.b32.xlu0 %v2157, 111
  %v2790 = vpop.permute.xlu0 %2789
  %2791 = vrot.lane.b32.xlu0 %v2154, 111
  %v2792 = vpop.permute.xlu0 %2791
  %2793 = vrot.lane.b32.xlu0 %v2158, 111
  %v2794 = vpop.permute.xlu0 %2793
  %v2795 = vsel %vm1217, %v2788, %v2792
  %v2796 = vsel %vm1217, %v2790, %v2794
  %v2797 = vsel %vm1217, %v2784, %v2788
  %v2798 = vsel %vm1217, %v2786, %v2790
  %v2799 = vsel %vm1217, %v2780, %v2784
  %v2800 = vsel %vm1217, %v2782, %v2786
  %v2801 = vsel %vm1217, %v2792, %v2780
  %v2802 = vsel %vm1217, %v2794, %v2782
  %v2803 = vld [vmem:[%s1230] sm:$0xf]
  %v2805 = vlaneseq
  %v2806 = vshrl.u32 %v2805, 7
  %v2807 = vsub.s32 0, %v2806
  %v2808 = vrot.slane %v2803, %v2807
  %v2809 = vlaneseq
  %v2810 = vshrl.u32 %v2809, 7
  %v2811 = vsub.s32 1, %v2810
  %v2812 = vrot.slane %v2803, %v2811
  %v2813 = vlaneseq
  %v2814 = vshrl.u32 %v2813, 7
  %v2815 = vsub.s32 2, %v2814
  %v2816 = vrot.slane %v2803, %v2815
  %v2817 = vlaneseq
  %v2818 = vshrl.u32 %v2817, 7
  %v2819 = vsub.s32 3, %v2818
  %v2820 = vrot.slane %v2803, %v2819
  %v2825 = vmul.f32 %v2799, %v2808
  %v2826 = vmul.f32 %v2797, %v2812
  %v2827 = vmul.f32 %v2795, %v2816
  %v2828 = vmul.f32 %v2801, %v2820
  %v2829 = vmul.f32 %v2800, %v2808
  %v2830 = vmul.f32 %v2798, %v2812
  %v2831 = vmul.f32 %v2796, %v2816
  %v2832 = vmul.f32 %v2802, %v2820
  %v2833 = vpack.c.bf16 %v2829, %v2825
  %v2834 = vpack.c.bf16 %v2830, %v2826
  %v2835 = vpack.c.bf16 %v2831, %v2827
  %v2836 = vpack.c.bf16 %v2832, %v2828
  %v2841 = vunpack.c.l.b16 %v2833
  %v2842 = vunpack.c.l.b16 %v2834
  %v2843 = vunpack.c.l.b16 %v2835
  %v2844 = vunpack.c.l.b16 %v2836
  %v2845 = vunpack.c.h.b16 %v2833
  %v2846 = vunpack.c.h.b16 %v2834
  %v2847 = vunpack.c.h.b16 %v2835
  %v2848 = vunpack.c.h.b16 %v2836
  %v2849 = vpack.c.b16 %v2842, %v2841
  %v2850 = vpack.c.b16 %v2844, %v2843
  %v2851 = vpack.c.b16 %v2846, %v2845
  %v2852 = vpack.c.b16 %v2848, %v2847
  %2857 = vst [vmem:[#allocation2 + $0x100] sm:$0xff] %v2849
  %2858 = vst [vmem:[#allocation2 + $0x108] sm:$0xff] %v2850
  %2859 = vst [vmem:[#allocation2 + $0x110] sm:$0xff] %v2851
  %2860 = vst [vmem:[#allocation2 + $0x118] sm:$0xff] %v2852
  %v2861 = vld [vmem:[#allocation2] sm:$0xff]
  %v2862 = vld [vmem:[#allocation2 + $0x8] sm:$0xff]
  %v2863 = vld [vmem:[#allocation2 + $0x10] sm:$0xff]
  %v2864 = vld [vmem:[#allocation2 + $0x18] sm:$0xff]
  %v2865 = vld [vmem:[#allocation2 + $0x20] sm:$0xff]
  %v2866 = vld [vmem:[#allocation2 + $0x28] sm:$0xff]
  %v2867 = vld [vmem:[#allocation2 + $0x30] sm:$0xff]
  %v2868 = vld [vmem:[#allocation2 + $0x38] sm:$0xff]
  %v2869 = vld [vmem:[#allocation2 + $0x40] sm:$0xff]
  %v2870 = vld [vmem:[#allocation2 + $0x48] sm:$0xff]
  %v2871 = vld [vmem:[#allocation2 + $0x50] sm:$0xff]
  %v2872 = vld [vmem:[#allocation2 + $0x58] sm:$0xff]
  %v2873 = vld [vmem:[#allocation2 + $0x60] sm:$0xff]
  %v2874 = vld [vmem:[#allocation2 + $0x68] sm:$0xff]
  %v2875 = vld [vmem:[#allocation2 + $0x70] sm:$0xff]
  %v2876 = vld [vmem:[#allocation2 + $0x78] sm:$0xff]
  %v2877 = vld [vmem:[#allocation2 + $0x80] sm:$0xff]
  %v2878 = vld [vmem:[#allocation2 + $0x88] sm:$0xff]
  %v2879 = vld [vmem:[#allocation2 + $0x90] sm:$0xff]
  %v2880 = vld [vmem:[#allocation2 + $0x98] sm:$0xff]
  %v2881 = vld [vmem:[#allocation2 + $0xa0] sm:$0xff]
  %v2882 = vld [vmem:[#allocation2 + $0xa8] sm:$0xff]
  %v2883 = vld [vmem:[#allocation2 + $0xb0] sm:$0xff]
  %v2884 = vld [vmem:[#allocation2 + $0xb8] sm:$0xff]
  %v2885 = vld [vmem:[#allocation2 + $0xc0] sm:$0xff]
  %v2886 = vld [vmem:[#allocation2 + $0xc8] sm:$0xff]
  %v2887 = vld [vmem:[#allocation2 + $0xd0] sm:$0xff]
  %v2888 = vld [vmem:[#allocation2 + $0xd8] sm:$0xff]
  %v2889 = vld [vmem:[#allocation2 + $0xe0] sm:$0xff]
  %v2890 = vld [vmem:[#allocation2 + $0xe8] sm:$0xff]
  %v2891 = vld [vmem:[#allocation2 + $0xf0] sm:$0xff]
  %v2892 = vld [vmem:[#allocation2 + $0xf8] sm:$0xff]
  %v2893 = vld [vmem:[#allocation2 + $0x100] sm:$0xff]
  %v2894 = vld [vmem:[#allocation2 + $0x108] sm:$0xff]
  %v2895 = vld [vmem:[#allocation2 + $0x110] sm:$0xff]
  %v2896 = vld [vmem:[#allocation2 + $0x118] sm:$0xff]
  %2898 = vset.pattern.permute.xlu0 0
  %2899 = vperm.xlu0 %2898, %v1985
  %v2900 = vpop.permute.xlu0 %2899
  %2903 = vset.pattern.permute.xlu0 0
  %2904 = vperm.xlu0 %2903, %v1986
  %v2905 = vpop.permute.xlu0 %2904
  %v2909 = vunpack.c.l.b16 %v1983
  %v2910 = vunpack.c.h.b16 %v1983
  %v2911 = vunpack.c.l.b16 %v1984
  %v2912 = vunpack.c.h.b16 %v1984
  %v2913 = vpack.c.b16 %v2911, %v2909
  %v2914 = vpack.c.b16 %v2912, %v2910
  %v2952 = vunpack.c.l.b16 %v2861
  %v2953 = vunpack.c.h.b16 %v2861
  %v2954 = vunpack.c.l.b16 %v2862
  %v2955 = vunpack.c.h.b16 %v2862
  %v2956 = vunpack.c.l.b16 %v2863
  %v2957 = vunpack.c.h.b16 %v2863
  %v2958 = vunpack.c.l.b16 %v2864
  %v2959 = vunpack.c.h.b16 %v2864
  %v2960 = vunpack.c.l.b16 %v2865
  %v2961 = vunpack.c.h.b16 %v2865
  %v2962 = vunpack.c.l.b16 %v2866
  %v2963 = vunpack.c.h.b16 %v2866
  %v2964 = vunpack.c.l.b16 %v2867
  %v2965 = vunpack.c.h.b16 %v2867
  %v2966 = vunpack.c.l.b16 %v2868
  %v2967 = vunpack.c.h.b16 %v2868
  %v2968 = vunpack.c.l.b16 %v2869
  %v2969 = vunpack.c.h.b16 %v2869
  %v2970 = vunpack.c.l.b16 %v2870
  %v2971 = vunpack.c.h.b16 %v2870
  %v2972 = vunpack.c.l.b16 %v2871
  %v2973 = vunpack.c.h.b16 %v2871
  %v2974 = vunpack.c.l.b16 %v2872
  %v2975 = vunpack.c.h.b16 %v2872
  %v2976 = vunpack.c.l.b16 %v2873
  %v2977 = vunpack.c.h.b16 %v2873
  %v2978 = vunpack.c.l.b16 %v2874
  %v2979 = vunpack.c.h.b16 %v2874
  %v2980 = vunpack.c.l.b16 %v2875
  %v2981 = vunpack.c.h.b16 %v2875
  %v2982 = vunpack.c.l.b16 %v2876
  %v2983 = vunpack.c.h.b16 %v2876
  %v2984 = vunpack.c.l.b16 %v2877
  %v2985 = vunpack.c.h.b16 %v2877
  %v2986 = vunpack.c.l.b16 %v2878
  %v2987 = vunpack.c.h.b16 %v2878
  %v2988 = vunpack.c.l.b16 %v2879
  %v2989 = vunpack.c.h.b16 %v2879
  %v2990 = vunpack.c.l.b16 %v2880
  %v2991 = vunpack.c.h.b16 %v2880
  %v2992 = vunpack.c.l.b16 %v2881
  %v2993 = vunpack.c.h.b16 %v2881
  %v2994 = vunpack.c.l.b16 %v2882
  %v2995 = vunpack.c.h.b16 %v2882
  %v2996 = vunpack.c.l.b16 %v2883
  %v2997 = vunpack.c.h.b16 %v2883
  %v2998 = vunpack.c.l.b16 %v2884
  %v2999 = vunpack.c.h.b16 %v2884
  %v3000 = vunpack.c.l.b16 %v2885
  %v3001 = vunpack.c.h.b16 %v2885
  %v3002 = vunpack.c.l.b16 %v2886
  %v3003 = vunpack.c.h.b16 %v2886
  %v3004 = vunpack.c.l.b16 %v2887
  %v3005 = vunpack.c.h.b16 %v2887
  %v3006 = vunpack.c.l.b16 %v2888
  %v3007 = vunpack.c.h.b16 %v2888
  %v3008 = vunpack.c.l.b16 %v2889
  %v3009 = vunpack.c.h.b16 %v2889
  %v3010 = vunpack.c.l.b16 %v2890
  %v3011 = vunpack.c.h.b16 %v2890
  %v3012 = vunpack.c.l.b16 %v2891
  %v3013 = vunpack.c.h.b16 %v2891
  %v3014 = vunpack.c.l.b16 %v2892
  %v3015 = vunpack.c.h.b16 %v2892
  %v3016 = vunpack.c.l.b16 %v2893
  %v3017 = vunpack.c.h.b16 %v2893
  %v3018 = vunpack.c.l.b16 %v2894
  %v3019 = vunpack.c.h.b16 %v2894
  %v3020 = vunpack.c.l.b16 %v2895
  %v3021 = vunpack.c.h.b16 %v2895
  %v3022 = vunpack.c.l.b16 %v2896
  %v3023 = vunpack.c.h.b16 %v2896
  %v3024 = vpack.c.b16 %v2956, %v2952
  %v3025 = vpack.c.b16 %v2957, %v2953
  %v3026 = vpack.c.b16 %v2958, %v2954
  %v3027 = vpack.c.b16 %v2959, %v2955
  %v3028 = vpack.c.b16 %v2964, %v2960
  %v3029 = vpack.c.b16 %v2965, %v2961
  %v3030 = vpack.c.b16 %v2966, %v2962
  %v3031 = vpack.c.b16 %v2967, %v2963
  %v3032 = vpack.c.b16 %v2972, %v2968
  %v3033 = vpack.c.b16 %v2973, %v2969
  %v3034 = vpack.c.b16 %v2974, %v2970
  %v3035 = vpack.c.b16 %v2975, %v2971
  %v3036 = vpack.c.b16 %v2980, %v2976
  %v3037 = vpack.c.b16 %v2981, %v2977
  %v3038 = vpack.c.b16 %v2982, %v2978
  %v3039 = vpack.c.b16 %v2983, %v2979
  %v3040 = vpack.c.b16 %v2988, %v2984
  %v3041 = vpack.c.b16 %v2989, %v2985
  %v3042 = vpack.c.b16 %v2990, %v2986
  %v3043 = vpack.c.b16 %v2991, %v2987
  %v3044 = vpack.c.b16 %v2996, %v2992
  %v3045 = vpack.c.b16 %v2997, %v2993
  %v3046 = vpack.c.b16 %v2998, %v2994
  %v3047 = vpack.c.b16 %v2999, %v2995
  %v3048 = vpack.c.b16 %v3004, %v3000
  %v3049 = vpack.c.b16 %v3005, %v3001
  %v3050 = vpack.c.b16 %v3006, %v3002
  %v3051 = vpack.c.b16 %v3007, %v3003
  %v3052 = vpack.c.b16 %v3012, %v3008
  %v3053 = vpack.c.b16 %v3013, %v3009
  %v3054 = vpack.c.b16 %v3014, %v3010
  %v3055 = vpack.c.b16 %v3015, %v3011
  %v3056 = vpack.c.b16 %v3020, %v3016
  %v3057 = vpack.c.b16 %v3021, %v3017
  %v3058 = vpack.c.b16 %v3022, %v3018
  %v3059 = vpack.c.b16 %v3023, %v3019
  %vm3096 = vcmask 130048
  %v3098 = vsel %vm3096, %v2914, 0
  %3100 = vmatprep.subr.bf16.mxu0 %v3025
  %3101 = vmatpush1.bf16.msra.mxu0 %v3024
  %3102 = vmatprep.subr.bf16.mxu0 %v3029
  %3103 = vmatpush1.bf16.msra.mxu0 %v3028
  %3104 = vmatprep.subr.bf16.mxu0 %v3033
  %3105 = vmatpush1.bf16.msra.mxu0 %v3032
  %3106 = vmatprep.subr.bf16.mxu0 %v3037
  %3107 = vmatpush1.bf16.msra.mxu0 %v3036
  %3108 = vmatprep.subr.bf16.mxu0 %v3041
  %3109 = vmatpush1.bf16.msra.mxu0 %v3040
  %3110 = vmatprep.subr.bf16.mxu0 %v3045
  %3111 = vmatpush1.bf16.msra.mxu0 %v3044
  %3112 = vmatprep.subr.bf16.mxu0 %v3049
  %3113 = vmatpush1.bf16.msra.mxu0 %v3048
  %3114 = vmatprep.subr.bf16.mxu0 %v3053
  %3115 = vmatpush1.bf16.msra.mxu0 %v3052
  %3116 = vmatprep.subr.bf16.mxu0 %v3057
  %3117 = vmatpush1.bf16.msra.mxu0 %v3056
  %3118 = vmatprep.subr.bf16.mxu0 0
  %3119 = vmatpush1.bf16.msra.mxu0 0
  %3120 = vmatprep.subr.bf16.mxu0 0
  %3121 = vmatpush1.bf16.msra.mxu0 0
  %3122 = vmatprep.subr.bf16.mxu0 0
  %3123 = vmatpush1.bf16.msra.mxu0 0
  %3124 = vmatprep.subr.bf16.mxu0 0
  %3125 = vmatpush1.bf16.msra.mxu0 0
  %3126 = vmatprep.subr.bf16.mxu0 0
  %3127 = vmatpush1.bf16.msra.mxu0 0
  %3128 = vmatprep.subr.bf16.mxu0 0
  %3129 = vmatpush1.bf16.msra.mxu0 0
  %3130 = vmatprep.subr.bf16.mxu0 0
  %3131 = vmatpush1.bf16.msra.mxu0 0
  %3132 = vmatprep.mubr.bf16.mxu0 %v3098
  %3133 = vmatmul.mubr.bf16.gmra.mrb[0].mxu0 %v2913
  %v3134 = vpop.f32.mrb[0].mxu0
  %v3135 = vadd.f32 %v2900, %v3134
  %v3136 = vpop.f32.mrb[0].mxu0
  %v3137 = vadd.f32 %v2900, %v3136
  %v3138 = vpop.f32.mrb[0].mxu0
  %v3139 = vadd.f32 %v2905, %v3138
  %v3140 = vpop.f32.mrb[0].mxu0
  %v3141 = vadd.f32 %v2905, %v3140
  %3142 = vdwg.mxu0
  %3143 = vmatprep.subr.bf16.mxu0 %v3027
  %3144 = vmatpush1.bf16.msra.mxu0 %v3026
  %3145 = vmatprep.subr.bf16.mxu0 %v3031
  %3146 = vmatpush1.bf16.msra.mxu0 %v3030
  %3147 = vmatprep.subr.bf16.mxu0 %v3035
  %3148 = vmatpush1.bf16.msra.mxu0 %v3034
  %3149 = vmatprep.subr.bf16.mxu0 %v3039
  %3150 = vmatpush1.bf16.msra.mxu0 %v3038
  %3151 = vmatprep.subr.bf16.mxu0 %v3043
  %3152 = vmatpush1.bf16.msra.mxu0 %v3042
  %3153 = vmatprep.subr.bf16.mxu0 %v3047
  %3154 = vmatpush1.bf16.msra.mxu0 %v3046
  %3155 = vmatprep.subr.bf16.mxu0 %v3051
  %3156 = vmatpush1.bf16.msra.mxu0 %v3050
  %3157 = vmatprep.subr.bf16.mxu0 %v3055
  %3158 = vmatpush1.bf16.msra.mxu0 %v3054
  %3159 = vmatprep.subr.bf16.mxu0 %v3059
  %3160 = vmatpush1.bf16.msra.mxu0 %v3058
  %3161 = vmatprep.subr.bf16.mxu0 0
  %3162 = vmatpush1.bf16.msra.mxu0 0
  %3163 = vmatprep.subr.bf16.mxu0 0
  %3164 = vmatpush1.bf16.msra.mxu0 0
  %3165 = vmatprep.subr.bf16.mxu0 0
  %3166 = vmatpush1.bf16.msra.mxu0 0
  %3167 = vmatprep.subr.bf16.mxu0 0
  %3168 = vmatpush1.bf16.msra.mxu0 0
  %3169 = vmatprep.subr.bf16.mxu0 0
  %3170 = vmatpush1.bf16.msra.mxu0 0
  %3171 = vmatprep.subr.bf16.mxu0 0
  %3172 = vmatpush1.bf16.msra.mxu0 0
  %3173 = vmatprep.subr.bf16.mxu0 0
  %3174 = vmatpush1.bf16.msra.mxu0 0
  %3175 = vmatprep.mubr.bf16.mxu0 %v3098
  %3176 = vmatmul.mubr.bf16.gmra.mrb[0].mxu0 %v2913
  %v3177 = vpop.f32.mrb[0].mxu0
  %v3178 = vadd.f32 %v2900, %v3177
  %v3179 = vpop.f32.mrb[0].mxu0
  %v3180 = vadd.f32 %v2900, %v3179
  %v3181 = vpop.f32.mrb[0].mxu0
  %v3182 = vadd.f32 %v2905, %v3181
  %v3183 = vpop.f32.mrb[0].mxu0
  %v3184 = vadd.f32 %v2905, %v3183
  %3185 = vdwg.mxu0
  %v3186 = vmax.f32 %v3135, 0.0
  %v3187 = vmax.f32 %v3137, 0.0
  %v3188 = vmax.f32 %v3178, 0.0
  %v3189 = vmax.f32 %v3180, 0.0
  %v3190 = vmax.f32 %v3139, 0.0
  %v3191 = vmax.f32 %v3141, 0.0
  %v3192 = vmax.f32 %v3182, 0.0
  %v3193 = vmax.f32 %v3184, 0.0
  %v3194 = vpack.c.bf16 %v3190, %v3186
  %v3195 = vpack.c.bf16 %v3191, %v3187
  %v3196 = vpack.c.bf16 %v3192, %v3188
  %v3197 = vpack.c.bf16 %v3193, %v3189
  %3199 = vset.pattern.permute.xlu0 0
  %3200 = vperm.xlu0 %3199, %v1989
  %v3201 = vpop.permute.xlu0 %3200
  %3204 = vset.pattern.permute.xlu0 0
  %3205 = vperm.xlu0 %3204, %v1990
  %v3206 = vpop.permute.xlu0 %3205
  %v3210 = vunpack.c.l.b16 %v1987
  %v3211 = vunpack.c.l.b16 %v1988
  %v3212 = vpack.c.b16 %v3211, %v3210
  %v3214 = vsel %vm3096, %v3212, 0
  %3216 = vmatprep.subr.bf16.mxu0 %v3195
  %3217 = vmatpush1.bf16.msra.mxu0 %v3194
  %3218 = vmatprep.subr.bf16.mxu0 0
  %3219 = vmatpush1.bf16.msra.mxu0 0
  %3220 = vmatprep.subr.bf16.mxu0 0
  %3221 = vmatpush1.bf16.msra.mxu0 0
  %3222 = vmatprep.subr.bf16.mxu0 0
  %3223 = vmatpush1.bf16.msra.mxu0 0
  %3224 = vmatprep.subr.bf16.mxu0 0
  %3225 = vmatpush1.bf16.msra.mxu0 0
  %3226 = vmatprep.subr.bf16.mxu0 0
  %3227 = vmatpush1.bf16.msra.mxu0 0
  %3228 = vmatprep.subr.bf16.mxu0 0
  %3229 = vmatpush1.bf16.msra.mxu0 0
  %3230 = vmatprep.subr.bf16.mxu0 0
  %3231 = vmatpush1.bf16.msra.mxu0 0
  %3232 = vmatprep.subr.bf16.mxu0 0
  %3233 = vmatpush1.bf16.msra.mxu0 0
  %3234 = vmatprep.subr.bf16.mxu0 0
  %3235 = vmatpush1.bf16.msra.mxu0 0
  %3236 = vmatprep.subr.bf16.mxu0 0
  %3237 = vmatpush1.bf16.msra.mxu0 0
  %3238 = vmatprep.subr.bf16.mxu0 0
  %3239 = vmatpush1.bf16.msra.mxu0 0
  %3240 = vmatprep.subr.bf16.mxu0 0
  %3241 = vmatpush1.bf16.msra.mxu0 0
  %3242 = vmatprep.subr.bf16.mxu0 0
  %3243 = vmatpush1.bf16.msra.mxu0 0
  %3244 = vmatprep.subr.bf16.mxu0 0
  %3245 = vmatpush1.bf16.msra.mxu0 0
  %3246 = vmatprep.subr.bf16.mxu0 0
  %3247 = vmatpush1.bf16.msra.mxu0 0
  %3248 = vmatprep.mubr.bf16.mxu0 0
  %3249 = vmatmul.mubr.bf16.gmra.mrb[0].mxu0 %v3214
  %v3250 = vpop.f32.mrb[0].mxu0
  %v3251 = vadd.f32 %v3201, %v3250
  %v3252 = vpop.f32.mrb[0].mxu0
  %v3253 = vadd.f32 %v3201, %v3252
  %v3254 = vpop.f32.mrb[0].mxu0
  %v3255 = vadd.f32 %v3206, %v3254
  %v3256 = vpop.f32.mrb[0].mxu0
  %v3257 = vadd.f32 %v3206, %v3256
  %3258 = vdwg.mxu0
  %3259 = vmatprep.subr.bf16.mxu0 %v3197
  %3260 = vmatpush1.bf16.msra.mxu0 %v3196
  %3261 = vmatprep.subr.bf16.mxu0 0
  %3262 = vmatpush1.bf16.msra.mxu0 0
  %3263 = vmatprep.subr.bf16.mxu0 0
  %3264 = vmatpush1.bf16.msra.mxu0 0
  %3265 = vmatprep.subr.bf16.mxu0 0
  %3266 = vmatpush1.bf16.msra.mxu0 0
  %3267 = vmatprep.subr.bf16.mxu0 0
  %3268 = vmatpush1.bf16.msra.mxu0 0
  %3269 = vmatprep.subr.bf16.mxu0 0
  %3270 = vmatpush1.bf16.msra.mxu0 0
  %3271 = vmatprep.subr.bf16.mxu0 0
  %3272 = vmatpush1.bf16.msra.mxu0 0
  %3273 = vmatprep.subr.bf16.mxu0 0
  %3274 = vmatpush1.bf16.msra.mxu0 0
  %3275 = vmatprep.subr.bf16.mxu0 0
  %3276 = vmatpush1.bf16.msra.mxu0 0
  %3277 = vmatprep.subr.bf16.mxu0 0
  %3278 = vmatpush1.bf16.msra.mxu0 0
  %3279 = vmatprep.subr.bf16.mxu0 0
  %3280 = vmatpush1.bf16.msra.mxu0 0
  %3281 = vmatprep.subr.bf16.mxu0 0
  %3282 = vmatpush1.bf16.msra.mxu0 0
  %3283 = vmatprep.subr.bf16.mxu0 0
  %3284 = vmatpush1.bf16.msra.mxu0 0
  %3285 = vmatprep.subr.bf16.mxu0 0
  %3286 = vmatpush1.bf16.msra.mxu0 0
  %3287 = vmatprep.subr.bf16.mxu0 0
  %3288 = vmatpush1.bf16.msra.mxu0 0
  %3289 = vmatprep.subr.bf16.mxu0 0
  %3290 = vmatpush1.bf16.msra.mxu0 0
  %3291 = vmatprep.mubr.bf16.mxu0 0
  %3292 = vmatmul.mubr.bf16.gmra.mrb[0].mxu0 %v3214
  %v3293 = vpop.f32.mrb[0].mxu0
  %v3294 = vadd.f32 %v3201, %v3293
  %v3295 = vpop.f32.mrb[0].mxu0
  %v3296 = vadd.f32 %v3201, %v3295
  %v3297 = vpop.f32.mrb[0].mxu0
  %v3298 = vadd.f32 %v3206, %v3297
  %v3299 = vpop.f32.mrb[0].mxu0
  %v3300 = vadd.f32 %v3206, %v3299
  %3301 = vdwg.mxu0
  %v3302 = vadd.f32 %v3251, %v2169
  %v3303 = vadd.f32 %v3253, %v2170
  %v3304 = vadd.f32 %v3294, %v2171
  %v3305 = vadd.f32 %v3296, %v2172
  %v3306 = vadd.f32 %v3255, %v2173
  %v3307 = vadd.f32 %v3257, %v2174
  %v3308 = vadd.f32 %v3298, %v2175
  %v3309 = vadd.f32 %v3300, %v2176
  %v3310 = vmax.f32 %v3302, 0.0
  %v3311 = vmax.f32 %v3303, 0.0
  %v3312 = vmax.f32 %v3304, 0.0
  %v3313 = vmax.f32 %v3305, 0.0
  %v3314 = vmax.f32 %v3306, 0.0
  %v3315 = vmax.f32 %v3307, 0.0
  %v3316 = vmax.f32 %v3308, 0.0
  %v3317 = vmax.f32 %v3309, 0.0
  %3318 = vst [vmem:[%s16] sm:$0xff] %v3310
  %3319 = vst [vmem:[%s16 + $0x8] sm:$0xff] %v3311
  %3320 = vst [vmem:[%s16 + $0x10] sm:$0xff] %v3312
  %3321 = vst [vmem:[%s16 + $0x18] sm:$0xff] %v3313
  %3322 = vst [vmem:[%s16 + $0x20] sm:$0xff] %v3314
  %3323 = vst [vmem:[%s16 + $0x28] sm:$0xff] %v3315
  %3324 = vst [vmem:[%s16 + $0x30] sm:$0xff] %v3316
  %3325 = vst [vmem:[%s16 + $0x38] sm:$0xff] %v3317
  // Predicated region
  $region66: #{detector_forward.1} parent=0 // pred_check
    _
  $region67: #{detector_forward.1} parent=0 // pred_check_branch
    %3327 = sbr.rel (0) target = $region69
  $region68: #{detector_forward.1} parent=0 // pred_region
    _
  $region69: #{detector_forward.1} parent=0 // pred_fallthru
    _
  // Predicated region
  $region70: #{detector_forward.1} parent=0 // pred_check
    _
  $region71: #{detector_forward.1} parent=0 // pred_check_branch
    %3329 = sbr.rel (0) target = $region73
  $region72: #{detector_forward.1} parent=0 // pred_region
    _
  $region73: #{detector_forward.1} parent=0 // pred_fallthru
    _

</llo_original>
